<compile_context>
chip_gen: v7x
topology: tpu7x:2x2x1
jax: 0.10.0
libtpu: 0.0.40
codegen_flags: <defaults>
</compile_context>

<pallas_src>
import functools

import jax
import jax.numpy as jnp
from jax.experimental import pallas as pl
from jax.experimental.pallas import tpu as pltpu


def _gelu_tanh(x):
    c = 0.7978845608028654  # sqrt(2/pi)
    return 0.5 * x * (1.0 + jnp.tanh(c * (x + 0.044715 * x * x * x)))


def _fused_topm_mhsa_kernel(*refs, num_layers, num_heads, top_m, add_pos):
    if add_pos:
        (x_ref, pos_ref, ln1g, ln1b, wqkv, bqkv, wproj, bproj,
         ln2g, ln2b, w1, b1, w2, b2, out_ref) = refs
    else:
        (x_ref, ln1g, ln1b, wqkv, bqkv, wproj, bproj,
         ln2g, ln2b, w1, b1, w2, b2, out_ref) = refs
        pos_ref = None

    Bt, N, C = x_ref.shape
    H = num_heads
    hd = C // H
    R = Bt * N
    scale = float(hd) ** -0.5
    m = min(top_m, N)
    f32 = jnp.float32
    bf16 = jnp.bfloat16
    NEG = jnp.float32(-1e30)

    x = x_ref[...]
    if add_pos:
        x = x + pos_ref[...]              # broadcasts over batch if pos is (1, N, C)
    x = x.reshape(R, C)                   # rows = (batch, seq); lanes = C

    def layer_norm(v, g, b):
        mu = jnp.mean(v, axis=-1, keepdims=True)
        vc = v - mu
        var = jnp.mean(vc * vc, axis=-1, keepdims=True)
        return vc * jax.lax.rsqrt(var + 1e-5) * g + b

    for l in range(num_layers):           # static unroll; weights resident in VMEM
        # ------------------------- attention branch -------------------------
        xn = layer_norm(x, ln1g[l], ln1b[l])
        qkv = jnp.dot(xn.astype(bf16), wqkv[l],
                      preferred_element_type=f32) + bqkv[l]            # (R, 3C)

        # Head-stacked q/k/v: (H*Bt, N, hd), batch index = h*Bt + b.
        def heads(off):
            parts = [qkv[:, off + h * hd: off + (h + 1) * hd] for h in range(H)]
            return jnp.concatenate(parts, axis=0).reshape(H * Bt, N, hd)

        q = heads(0).astype(bf16)
        k = heads(C).astype(bf16)
        v = heads(2 * C).astype(bf16)

        s = jnp.einsum("bqd,bkd->bqk", q, k,
                       preferred_element_type=f32) * scale             # (H*Bt, N, N)

        # m-th-largest threshold by iterative max exclusion (single pass over the
        # stacked tile); the first max doubles as the softmax row max.
        work = s
        row_max = None
        thr = None
        for i in range(m):
            thr = jnp.max(work, axis=-1, keepdims=True)
            if i == 0:
                row_max = thr
            if i < m - 1:
                work = jnp.where(work >= thr, NEG, work)

        p = jnp.where(s >= thr, jnp.exp(s - row_max), 0.0)
        p = p / jnp.sum(p, axis=-1, keepdims=True)                     # top-M softmax

        o = jnp.einsum("bqk,bkd->bqd", p.astype(bf16), v,
                       preferred_element_type=f32)                     # (H*Bt, N, hd)

        # Output projection: accumulate each head straight into (R, C); no concat.
        attn = None
        for h in range(H):
            oh = o[h * Bt:(h + 1) * Bt].reshape(R, hd).astype(bf16)
            ph = jnp.dot(oh, wproj[l, h], preferred_element_type=f32)  # (R, C)
            attn = ph if attn is None else attn + ph

        x = x + attn + bproj[l]                                        # residual 1

        # ---------------------------- MLP branch ----------------------------
        xn2 = layer_norm(x, ln2g[l], ln2b[l])
        hid = jnp.dot(xn2.astype(bf16), w1[l],
                      preferred_element_type=f32) + b1[l]
        hid = _gelu_tanh(hid)
        x = x + jnp.dot(hid.astype(bf16), w2[l],
                        preferred_element_type=f32) + b2[l]            # residual 2

    out_ref[...] = x.reshape(Bt, N, C).astype(out_ref.dtype)


def prepare_params(layers, *, num_heads):
    """One-time weight prep: transpose to (in, out), cast matmul weights to bf16,
    stack per-layer params along a leading L axis (done once, not per forward)."""
    f32, bf16 = jnp.float32, jnp.bfloat16
    C = layers[0]["wproj"].shape[0]
    F = layers[0]["w1"].shape[0]
    H = num_heads
    hd = C // H

    def stack(name, fn):
        return jnp.stack([fn(jnp.asarray(p[name])) for p in layers], axis=0)

    return {
        "ln1_g": stack("ln1_g", lambda a: a.reshape(1, C).astype(f32)),
        "ln1_b": stack("ln1_b", lambda a: a.reshape(1, C).astype(f32)),
        "wqkv":  stack("wqkv",  lambda a: a.T.astype(bf16)),                    # (L, C, 3C)
        "bqkv":  stack("bqkv",  lambda a: a.reshape(1, 3 * C).astype(f32)),
        "wproj": stack("wproj", lambda a: a.T.reshape(H, hd, C).astype(bf16)),  # (L, H, hd, C)
        "bproj": stack("bproj", lambda a: a.reshape(1, C).astype(f32)),
        "ln2_g": stack("ln2_g", lambda a: a.reshape(1, C).astype(f32)),
        "ln2_b": stack("ln2_b", lambda a: a.reshape(1, C).astype(f32)),
        "w1":    stack("w1",    lambda a: a.T.astype(bf16)),                    # (L, C, F)
        "b1":    stack("b1",    lambda a: a.reshape(1, F).astype(f32)),
        "w2":    stack("w2",    lambda a: a.T.astype(bf16)),                    # (L, F, C)
        "b2":    stack("b2",    lambda a: a.reshape(1, C).astype(f32)),
    }


def _pick_block_batch(B, N):
    """Batch elems per grid step: target >=256 MXU rows per step, but keep >=2
    'parallel' grid steps when possible so both v7x TensorCores stay busy."""
    target = max(1, -(-256 // N))          # ceil(256 / N)
    bt = min(B, target)
    while B % bt:
        bt -= 1
    if bt == B and B > 1:
        half = B // 2
        while B % half:
            half -= 1
        if half * N >= 128:
            bt = half
    return bt


def topm_mhsa_forward(x, pos_embed, prepared, *, num_heads, top_m, block_batch=None):
    """TopM_MHSA.forward: output = x + pos_embed, then all MHSA blocks, fused."""
    B, N, C = x.shape
    L = int(prepared["wqkv"].shape[0])
    Bt = block_batch if block_batch is not None else _pick_block_batch(B, N)
    assert B % Bt == 0, "block_batch must divide the batch size"

    x = x.astype(jnp.float32)
    inputs = [x]
    in_specs = [pl.BlockSpec((Bt, N, C), lambda i: (i, 0, 0))]

    add_pos = pos_embed is not None
    if add_pos:
        pos = jnp.asarray(pos_embed, jnp.float32)
        if pos.ndim == 2:
            pos = pos[None]
        if pos.shape[0] == B and B > 1:
            in_specs.append(pl.BlockSpec((Bt, N, C), lambda i: (i, 0, 0)))
        else:
            in_specs.append(pl.BlockSpec((pos.shape[0], N, C), lambda i: (0, 0, 0)))
        inputs.append(pos)

    # Stacked per-layer weights: full-array blocks with constant index maps, so
    # each is DMA'd once and stays resident in VMEM across the whole grid.
    # (Total weight VMEM here is ~100 KB even double-buffered; if layers / dims
    # grow, pipeline_mode=pl.Buffered(1) on these specs halves the weight VMEM.)
    for name in ("ln1_g", "ln1_b", "wqkv", "bqkv", "wproj", "bproj",
                 "ln2_g", "ln2_b", "w1", "b1", "w2", "b2"):
        a = prepared[name]
        inputs.append(a)
        in_specs.append(pl.BlockSpec(a.shape, lambda i, _nd=a.ndim: (0,) * _nd))

    kernel = functools.partial(
        _fused_topm_mhsa_kernel,
        num_layers=L, num_heads=num_heads, top_m=top_m, add_pos=add_pos)

    return pl.pallas_call(
        kernel,
        out_shape=jax.ShapeDtypeStruct((B, N, C), jnp.float32),
        grid_spec=pltpu.PrefetchScalarGridSpec(
            num_scalar_prefetch=0,
            grid=(B // Bt,),
            in_specs=in_specs,
            # With the whole forward fused, this store happens once per batch
            # tile, so the narrow (C=32) lane width is negligible.
            # TODO(synk): for very large N, tile scores over query-row blocks and
            # set vmem_limit_bytes (v7x has only 64 MiB VMEM).
            out_specs=pl.BlockSpec((Bt, N, C), lambda i: (i, 0, 0)),
        ),
        compiler_params=pltpu.CompilerParams(
            dimension_semantics=("parallel",)),
    )(*inputs)


# ----------------------------- pure-JAX reference -----------------------------
def _reference_forward(x, pos, layers, *, num_heads, top_m):
    """Mirrors the kernel's bf16-in / f32-accumulate matmul casts exactly."""
    f32, bf16 = jnp.float32, jnp.bfloat16

    def mm(a, w):
        return jnp.dot(a.astype(bf16), w.astype(bf16), preferred_element_type=f32)

    def ln(v, g, b, eps=1e-5):
        mu = v.mean(-1, keepdims=True)
        vc = v - mu
        var = (vc * vc).mean(-1, keepdims=True)
        return vc * jax.lax.rsqrt(var + eps) * g + b

    B, N, C = x.shape
    H = num_heads
    hd = C // H
    scale = hd ** -0.5
    m = min(top_m, N)

    out = x + pos
    for p in layers:
        xn = ln(out, p["ln1_g"], p["ln1_b"])
        qkv = mm(xn, p["wqkv"].T) + p["bqkv"]
        qkv = qkv.reshape(B, N, 3, H, hd).transpose(2, 0, 3, 1, 4)
        q, k, v = qkv[0], qkv[1], qkv[2]                        # (B, H, N, hd)
        s = jnp.einsum("bhqd,bhkd->bhqk", q.astype(bf16), k.astype(bf16),
                       preferred_element_type=f32) * scale
        thr = jax.lax.top_k(s, m)[0][..., -1:]                  # m-th largest
        keep = s >= thr
        row_max = jnp.max(s, axis=-1, keepdims=True)
        pr = jnp.where(keep, jnp.exp(s - row_max), 0.0)
        pr = pr / pr.sum(-1, keepdims=True)
        o = jnp.einsum("bhqk,bhkd->bhqd", pr.astype(bf16), v.astype(bf16),
                       preferred_element_type=f32)
        o = o.transpose(0, 2, 1, 3).reshape(B, N, C)
        out = out + mm(o, p["wproj"].T) + p["bproj"]
        xn2 = ln(out, p["ln2_g"], p["ln2_b"])
        h1 = _gelu_tanh(mm(xn2, p["w1"].T) + p["b1"])
        out = out + mm(h1, p["w2"].T) + p["b2"]
    return out


if __name__ == "__main__":
    B, N, C = 2, 8, 32          # batch, seq, embed_dim
    H, F = 4, 64                # num_heads, dim_feedforward
    TOP_M, N_LAYERS = 4, 2

    key = jax.random.PRNGKey(0)

    def make_layer(k):
        ks = jax.random.split(k, 12)
        s = 0.1
        return {
            "ln1_g": 1.0 + 0.05 * jax.random.normal(ks[0], (C,), jnp.float32),
            "ln1_b": 0.05 * jax.random.normal(ks[1], (C,), jnp.float32),
            "wqkv": s * jax.random.normal(ks[2], (3 * C, C), jnp.float32),
            "bqkv": s * jax.random.normal(ks[3], (3 * C,), jnp.float32),
            "wproj": s * jax.random.normal(ks[4], (C, C), jnp.float32),
            "bproj": s * jax.random.normal(ks[5], (C,), jnp.float32),
            "ln2_g": 1.0 + 0.05 * jax.random.normal(ks[6], (C,), jnp.float32),
            "ln2_b": 0.05 * jax.random.normal(ks[7], (C,), jnp.float32),
            "w1": s * jax.random.normal(ks[8], (F, C), jnp.float32),
            "b1": s * jax.random.normal(ks[9], (F,), jnp.float32),
            "w2": s * jax.random.normal(ks[10], (C, F), jnp.float32),
            "b2": s * jax.random.normal(ks[11], (C,), jnp.float32),
        }

    key, kx, kp, *lkeys = jax.random.split(key, 3 + N_LAYERS)
    layers = [make_layer(k) for k in lkeys]
    x = jax.random.normal(kx, (B, N, C), jnp.float32)
    pos_embed = 0.1 * jax.random.normal(kp, (1, N, C), jnp.float32)

    prepared = prepare_params(layers, num_heads=H)   # one-time transpose/cast/stack

    out = topm_mhsa_forward(x, pos_embed, prepared, num_heads=H, top_m=TOP_M)
    out = jax.block_until_ready(out)

    ref = _reference_forward(x, pos_embed, layers, num_heads=H, top_m=TOP_M)
    assert out.shape == (B, N, C)
    err = float(jnp.max(jnp.abs(out - ref)))
    assert jnp.allclose(out, ref, atol=2e-2, rtol=2e-2), f"max abs err {err}"

    print("KERNEL_OK")
</pallas_src>

<mosaic_0001>
module attributes {stable_mosaic.version = 11 : i64} {
  func.func @_fused_topm_mhsa_kernel(%arg0: i32, %arg1: memref<2x8x32xf32, #tpu.memory_space<vmem>>, %arg2: memref<1x8x32xf32, #tpu.memory_space<vmem>>, %arg3: memref<2x1x32xf32, #tpu.memory_space<vmem>>, %arg4: memref<2x1x32xf32, #tpu.memory_space<vmem>>, %arg5: memref<2x32x96xbf16, #tpu.memory_space<vmem>>, %arg6: memref<2x1x96xf32, #tpu.memory_space<vmem>>, %arg7: memref<2x4x8x32xbf16, #tpu.memory_space<vmem>>, %arg8: memref<2x1x32xf32, #tpu.memory_space<vmem>>, %arg9: memref<2x1x32xf32, #tpu.memory_space<vmem>>, %arg10: memref<2x1x32xf32, #tpu.memory_space<vmem>>, %arg11: memref<2x32x64xbf16, #tpu.memory_space<vmem>>, %arg12: memref<2x1x64xf32, #tpu.memory_space<vmem>>, %arg13: memref<2x64x32xbf16, #tpu.memory_space<vmem>>, %arg14: memref<2x1x32xf32, #tpu.memory_space<vmem>>, %arg15: memref<2x8x32xf32, #tpu.memory_space<vmem>>) attributes {dimension_semantics = [#tpu.dimension_semantics<parallel>], iteration_bounds = array<i64: 1>, scalar_prefetch = 0 : i64, scratch_operands = 0 : i64, tpu.core_type = #tpu.core_type<tc>, window_params = [{transform_indices = @transform_0, window_bounds = array<i64: 2, 8, 32>}, {pipeline_mode = #tpu.pipeline_mode<synchronous>, transform_indices = @transform_1, window_bounds = array<i64: 1, 8, 32>}, {pipeline_mode = #tpu.pipeline_mode<synchronous>, transform_indices = @transform_2, window_bounds = array<i64: 2, 1, 32>}, {pipeline_mode = #tpu.pipeline_mode<synchronous>, transform_indices = @transform_3, window_bounds = array<i64: 2, 1, 32>}, {pipeline_mode = #tpu.pipeline_mode<synchronous>, transform_indices = @transform_4, window_bounds = array<i64: 2, 32, 96>}, {pipeline_mode = #tpu.pipeline_mode<synchronous>, transform_indices = @transform_5, window_bounds = array<i64: 2, 1, 96>}, {pipeline_mode = #tpu.pipeline_mode<synchronous>, transform_indices = @transform_6, window_bounds = array<i64: 2, 4, 8, 32>}, {pipeline_mode = #tpu.pipeline_mode<synchronous>, transform_indices = @transform_7, window_bounds = array<i64: 2, 1, 32>}, {pipeline_mode = #tpu.pipeline_mode<synchronous>, transform_indices = @transform_8, window_bounds = array<i64: 2, 1, 32>}, {pipeline_mode = #tpu.pipeline_mode<synchronous>, transform_indices = @transform_9, window_bounds = array<i64: 2, 1, 32>}, {pipeline_mode = #tpu.pipeline_mode<synchronous>, transform_indices = @transform_10, window_bounds = array<i64: 2, 32, 64>}, {pipeline_mode = #tpu.pipeline_mode<synchronous>, transform_indices = @transform_11, window_bounds = array<i64: 2, 1, 64>}, {pipeline_mode = #tpu.pipeline_mode<synchronous>, transform_indices = @transform_12, window_bounds = array<i64: 2, 64, 32>}, {pipeline_mode = #tpu.pipeline_mode<synchronous>, transform_indices = @transform_13, window_bounds = array<i64: 2, 1, 32>}, {transform_indices = @transform_14, window_bounds = array<i64: 2, 8, 32>}]} {
    %c0 = arith.constant 0 : index
    %c0_0 = arith.constant 0 : index
    %c0_1 = arith.constant 0 : index
    %0 = vector.load %arg1[%c0, %c0_0, %c0_1] : memref<2x8x32xf32, #tpu.memory_space<vmem>>, vector<2x8x32xf32>
    %c0_2 = arith.constant 0 : index
    %c0_3 = arith.constant 0 : index
    %c0_4 = arith.constant 0 : index
    %1 = vector.load %arg2[%c0_2, %c0_3, %c0_4] : memref<1x8x32xf32, #tpu.memory_space<vmem>>, vector<1x8x32xf32>
    %2 = vector.broadcast %1 : vector<1x8x32xf32> to vector<2x8x32xf32>
    %3 = arith.addf %0, %2 : vector<2x8x32xf32>
    %4 = vector.shape_cast %3 : vector<2x8x32xf32> to vector<16x32xf32>
    %c0_5 = arith.constant 0 : index
    %c0_6 = arith.constant 0 : index
    %c0_7 = arith.constant 0 : index
    %5 = vector.load %arg3[%c0_5, %c0_6, %c0_7] : memref<2x1x32xf32, #tpu.memory_space<vmem>>, vector<1x1x32xf32>
    %6 = vector.shape_cast %5 : vector<1x1x32xf32> to vector<1x32xf32>
    %c0_8 = arith.constant 0 : index
    %c0_9 = arith.constant 0 : index
    %c0_10 = arith.constant 0 : index
    %7 = vector.load %arg4[%c0_8, %c0_9, %c0_10] : memref<2x1x32xf32, #tpu.memory_space<vmem>>, vector<1x1x32xf32>
    %8 = vector.shape_cast %7 : vector<1x1x32xf32> to vector<1x32xf32>
    %cst = arith.constant dense<0.000000e+00> : vector<16xf32>
    %9 = vector.multi_reduction <add>, %4, %cst [1] : vector<16x32xf32> to vector<16xf32>
    %10 = vector.shape_cast %9 : vector<16xf32> to vector<16x1xf32>
    %cst_11 = arith.constant 3.200000e+01 : f32
    %11 = vector.broadcast %cst_11 : f32 to vector<16x1xf32>
    %12 = arith.divf %10, %11 : vector<16x1xf32>
    %13 = vector.broadcast %12 : vector<16x1xf32> to vector<16x32xf32>
    %14 = arith.subf %4, %13 : vector<16x32xf32>
    %15 = arith.mulf %14, %14 : vector<16x32xf32>
    %cst_12 = arith.constant dense<0.000000e+00> : vector<16xf32>
    %16 = vector.multi_reduction <add>, %15, %cst_12 [1] : vector<16x32xf32> to vector<16xf32>
    %17 = vector.shape_cast %16 : vector<16xf32> to vector<16x1xf32>
    %cst_13 = arith.constant 3.200000e+01 : f32
    %18 = vector.broadcast %cst_13 : f32 to vector<16x1xf32>
    %19 = arith.divf %17, %18 : vector<16x1xf32>
    %cst_14 = arith.constant 9.99999974E-6 : f32
    %20 = vector.broadcast %cst_14 : f32 to vector<16x1xf32>
    %21 = arith.addf %19, %20 : vector<16x1xf32>
    %22 = math.rsqrt %21 : vector<16x1xf32>
    %23 = vector.broadcast %22 : vector<16x1xf32> to vector<16x32xf32>
    %24 = arith.mulf %14, %23 : vector<16x32xf32>
    %25 = vector.broadcast %6 : vector<1x32xf32> to vector<16x32xf32>
    %26 = arith.mulf %24, %25 : vector<16x32xf32>
    %27 = vector.broadcast %8 : vector<1x32xf32> to vector<16x32xf32>
    %28 = arith.addf %26, %27 : vector<16x32xf32>
    %29 = arith.truncf %28 : vector<16x32xf32> to vector<16x32xbf16>
    %c0_15 = arith.constant 0 : index
    %c0_16 = arith.constant 0 : index
    %c0_17 = arith.constant 0 : index
    %30 = vector.load %arg5[%c0_15, %c0_16, %c0_17] : memref<2x32x96xbf16, #tpu.memory_space<vmem>>, vector<1x32x96xbf16>
    %31 = vector.shape_cast %30 : vector<1x32x96xbf16> to vector<32x96xbf16>
    %cst_18 = arith.constant dense<0.000000e+00> : vector<16x96xf32>
    %32 = tpu.matmul %29, %31, %cst_18 {dimension_numbers = #tpu.dot_dimension_numbers<[1], [0], [0], [1], [0, 0, 1, 1], [], []>} : vector<16x32xbf16>, vector<32x96xbf16>, vector<16x96xf32> -> vector<16x96xf32>
    %c0_19 = arith.constant 0 : index
    %c0_20 = arith.constant 0 : index
    %c0_21 = arith.constant 0 : index
    %33 = vector.load %arg6[%c0_19, %c0_20, %c0_21] : memref<2x1x96xf32, #tpu.memory_space<vmem>>, vector<1x1x96xf32>
    %34 = vector.shape_cast %33 : vector<1x1x96xf32> to vector<1x96xf32>
    %35 = vector.broadcast %34 : vector<1x96xf32> to vector<16x96xf32>
    %36 = arith.addf %32, %35 : vector<16x96xf32>
    %37 = vector.extract_strided_slice %36 {offsets = [0, 0], sizes = [16, 8], strides = [1, 1]} : vector<16x96xf32> to vector<16x8xf32>
    %38 = vector.extract_strided_slice %36 {offsets = [0, 8], sizes = [16, 8], strides = [1, 1]} : vector<16x96xf32> to vector<16x8xf32>
    %39 = vector.extract_strided_slice %36 {offsets = [0, 16], sizes = [16, 8], strides = [1, 1]} : vector<16x96xf32> to vector<16x8xf32>
    %40 = vector.extract_strided_slice %36 {offsets = [0, 24], sizes = [16, 8], strides = [1, 1]} : vector<16x96xf32> to vector<16x8xf32>
    %41 = tpu.concatenate %37, %38, %39, %40 in 0 : vector<16x8xf32>, vector<16x8xf32>, vector<16x8xf32>, vector<16x8xf32> -> vector<64x8xf32>
    %42 = vector.shape_cast %41 : vector<64x8xf32> to vector<8x8x8xf32>
    %43 = arith.truncf %42 : vector<8x8x8xf32> to vector<8x8x8xbf16>
    %44 = vector.extract_strided_slice %36 {offsets = [0, 32], sizes = [16, 8], strides = [1, 1]} : vector<16x96xf32> to vector<16x8xf32>
    %45 = vector.extract_strided_slice %36 {offsets = [0, 40], sizes = [16, 8], strides = [1, 1]} : vector<16x96xf32> to vector<16x8xf32>
    %46 = vector.extract_strided_slice %36 {offsets = [0, 48], sizes = [16, 8], strides = [1, 1]} : vector<16x96xf32> to vector<16x8xf32>
    %47 = vector.extract_strided_slice %36 {offsets = [0, 56], sizes = [16, 8], strides = [1, 1]} : vector<16x96xf32> to vector<16x8xf32>
    %48 = tpu.concatenate %44, %45, %46, %47 in 0 : vector<16x8xf32>, vector<16x8xf32>, vector<16x8xf32>, vector<16x8xf32> -> vector<64x8xf32>
    %49 = vector.shape_cast %48 : vector<64x8xf32> to vector<8x8x8xf32>
    %50 = arith.truncf %49 : vector<8x8x8xf32> to vector<8x8x8xbf16>
    %51 = vector.extract_strided_slice %36 {offsets = [0, 64], sizes = [16, 8], strides = [1, 1]} : vector<16x96xf32> to vector<16x8xf32>
    %52 = vector.extract_strided_slice %36 {offsets = [0, 72], sizes = [16, 8], strides = [1, 1]} : vector<16x96xf32> to vector<16x8xf32>
    %53 = vector.extract_strided_slice %36 {offsets = [0, 80], sizes = [16, 8], strides = [1, 1]} : vector<16x96xf32> to vector<16x8xf32>
    %54 = vector.extract_strided_slice %36 {offsets = [0, 88], sizes = [16, 8], strides = [1, 1]} : vector<16x96xf32> to vector<16x8xf32>
    %55 = tpu.concatenate %51, %52, %53, %54 in 0 : vector<16x8xf32>, vector<16x8xf32>, vector<16x8xf32>, vector<16x8xf32> -> vector<64x8xf32>
    %56 = vector.shape_cast %55 : vector<64x8xf32> to vector<8x8x8xf32>
    %57 = arith.truncf %56 : vector<8x8x8xf32> to vector<8x8x8xbf16>
    "tpu.trace_start"() <{level = 10 : i32, message = "bqd,bkd->bqk"}> : () -> ()
    %cst_22 = arith.constant dense<0.000000e+00> : vector<8x8x8xf32>
    %58 = tpu.matmul %43, %50, %cst_22 {dimension_numbers = #tpu.dot_dimension_numbers<[2], [2], [1], [1], [0, 0, 0, 1, 1, 1], [0], [0]>} : vector<8x8x8xbf16>, vector<8x8x8xbf16>, vector<8x8x8xf32> -> vector<8x8x8xf32>
    "tpu.trace_stop"() : () -> ()
    %cst_23 = arith.constant 0.353553385 : f32
    %59 = vector.broadcast %cst_23 : f32 to vector<8x8x8xf32>
    %60 = arith.mulf %58, %59 : vector<8x8x8xf32>
    %cst_24 = arith.constant dense<0xFF800000> : vector<8x8xf32>
    %61 = vector.multi_reduction <maximumf>, %60, %cst_24 [2] : vector<8x8x8xf32> to vector<8x8xf32>
    %62 = vector.shape_cast %61 : vector<8x8xf32> to vector<8x8x1xf32>
    %63 = vector.broadcast %62 : vector<8x8x1xf32> to vector<8x8x8xf32>
    %64 = arith.cmpf oge, %60, %63 : vector<8x8x8xf32>
    %cst_25 = arith.constant -1.000000e+30 : f32
    %65 = vector.broadcast %cst_25 : f32 to vector<8x8x8xf32>
    %66 = arith.select %64, %65, %60 : vector<8x8x8xi1>, vector<8x8x8xf32>
    %cst_26 = arith.constant dense<0xFF800000> : vector<8x8xf32>
    %67 = vector.multi_reduction <maximumf>, %66, %cst_26 [2] : vector<8x8x8xf32> to vector<8x8xf32>
    %68 = vector.shape_cast %67 : vector<8x8xf32> to vector<8x8x1xf32>
    %69 = vector.broadcast %68 : vector<8x8x1xf32> to vector<8x8x8xf32>
    %70 = arith.cmpf oge, %66, %69 : vector<8x8x8xf32>
    %cst_27 = arith.constant -1.000000e+30 : f32
    %71 = vector.broadcast %cst_27 : f32 to vector<8x8x8xf32>
    %72 = arith.select %70, %71, %66 : vector<8x8x8xi1>, vector<8x8x8xf32>
    %cst_28 = arith.constant dense<0xFF800000> : vector<8x8xf32>
    %73 = vector.multi_reduction <maximumf>, %72, %cst_28 [2] : vector<8x8x8xf32> to vector<8x8xf32>
    %74 = vector.shape_cast %73 : vector<8x8xf32> to vector<8x8x1xf32>
    %75 = vector.broadcast %74 : vector<8x8x1xf32> to vector<8x8x8xf32>
    %76 = arith.cmpf oge, %72, %75 : vector<8x8x8xf32>
    %cst_29 = arith.constant -1.000000e+30 : f32
    %77 = vector.broadcast %cst_29 : f32 to vector<8x8x8xf32>
    %78 = arith.select %76, %77, %72 : vector<8x8x8xi1>, vector<8x8x8xf32>
    %cst_30 = arith.constant dense<0xFF800000> : vector<8x8xf32>
    %79 = vector.multi_reduction <maximumf>, %78, %cst_30 [2] : vector<8x8x8xf32> to vector<8x8xf32>
    %80 = vector.shape_cast %79 : vector<8x8xf32> to vector<8x8x1xf32>
    %81 = vector.broadcast %80 : vector<8x8x1xf32> to vector<8x8x8xf32>
    %82 = arith.cmpf oge, %60, %81 : vector<8x8x8xf32>
    %83 = vector.broadcast %62 : vector<8x8x1xf32> to vector<8x8x8xf32>
    %84 = arith.subf %60, %83 : vector<8x8x8xf32>
    %85 = math.exp %84 : vector<8x8x8xf32>
    %cst_31 = arith.constant 0.000000e+00 : f32
    %86 = vector.broadcast %cst_31 : f32 to vector<8x8x8xf32>
    %87 = arith.select %82, %85, %86 : vector<8x8x8xi1>, vector<8x8x8xf32>
    %cst_32 = arith.constant dense<0.000000e+00> : vector<8x8xf32>
    %88 = vector.multi_reduction <add>, %87, %cst_32 [2] : vector<8x8x8xf32> to vector<8x8xf32>
    %89 = vector.shape_cast %88 : vector<8x8xf32> to vector<8x8x1xf32>
    %90 = vector.broadcast %89 : vector<8x8x1xf32> to vector<8x8x8xf32>
    %91 = arith.divf %87, %90 : vector<8x8x8xf32>
    %92 = arith.truncf %91 : vector<8x8x8xf32> to vector<8x8x8xbf16>
    "tpu.trace_start"() <{level = 10 : i32, message = "bqk,bkd->bqd"}> : () -> ()
    %cst_33 = arith.constant dense<0.000000e+00> : vector<8x8x8xf32>
    %93 = tpu.matmul %92, %57, %cst_33 {dimension_numbers = #tpu.dot_dimension_numbers<[2], [1], [1], [2], [0, 0, 0, 1, 1, 2], [0], [0]>} : vector<8x8x8xbf16>, vector<8x8x8xbf16>, vector<8x8x8xf32> -> vector<8x8x8xf32>
    "tpu.trace_stop"() : () -> ()
    %94 = vector.extract_strided_slice %93 {offsets = [0, 0, 0], sizes = [2, 8, 8], strides = [1, 1, 1]} : vector<8x8x8xf32> to vector<2x8x8xf32>
    %95 = vector.shape_cast %94 : vector<2x8x8xf32> to vector<16x8xf32>
    %96 = arith.truncf %95 : vector<16x8xf32> to vector<16x8xbf16>
    %c0_34 = arith.constant 0 : index
    %c0_35 = arith.constant 0 : index
    %c0_36 = arith.constant 0 : index
    %c0_37 = arith.constant 0 : index
    %97 = vector.load %arg7[%c0_34, %c0_35, %c0_36, %c0_37] : memref<2x4x8x32xbf16, #tpu.memory_space<vmem>>, vector<1x1x8x32xbf16>
    %98 = vector.shape_cast %97 : vector<1x1x8x32xbf16> to vector<8x32xbf16>
    %cst_38 = arith.constant dense<0.000000e+00> : vector<16x32xf32>
    %99 = tpu.matmul %96, %98, %cst_38 {dimension_numbers = #tpu.dot_dimension_numbers<[1], [0], [0], [1], [0, 0, 1, 1], [], []>} : vector<16x8xbf16>, vector<8x32xbf16>, vector<16x32xf32> -> vector<16x32xf32>
    %100 = vector.extract_strided_slice %93 {offsets = [2, 0, 0], sizes = [2, 8, 8], strides = [1, 1, 1]} : vector<8x8x8xf32> to vector<2x8x8xf32>
    %101 = vector.shape_cast %100 : vector<2x8x8xf32> to vector<16x8xf32>
    %102 = arith.truncf %101 : vector<16x8xf32> to vector<16x8xbf16>
    %c0_39 = arith.constant 0 : index
    %c1 = arith.constant 1 : index
    %c0_40 = arith.constant 0 : index
    %c0_41 = arith.constant 0 : index
    %103 = vector.load %arg7[%c0_39, %c1, %c0_40, %c0_41] : memref<2x4x8x32xbf16, #tpu.memory_space<vmem>>, vector<1x1x8x32xbf16>
    %104 = vector.shape_cast %103 : vector<1x1x8x32xbf16> to vector<8x32xbf16>
    %cst_42 = arith.constant dense<0.000000e+00> : vector<16x32xf32>
    %105 = tpu.matmul %102, %104, %cst_42 {dimension_numbers = #tpu.dot_dimension_numbers<[1], [0], [0], [1], [0, 0, 1, 1], [], []>} : vector<16x8xbf16>, vector<8x32xbf16>, vector<16x32xf32> -> vector<16x32xf32>
    %106 = arith.addf %99, %105 : vector<16x32xf32>
    %107 = vector.extract_strided_slice %93 {offsets = [4, 0, 0], sizes = [2, 8, 8], strides = [1, 1, 1]} : vector<8x8x8xf32> to vector<2x8x8xf32>
    %108 = vector.shape_cast %107 : vector<2x8x8xf32> to vector<16x8xf32>
    %109 = arith.truncf %108 : vector<16x8xf32> to vector<16x8xbf16>
    %c0_43 = arith.constant 0 : index
    %c2 = arith.constant 2 : index
    %c0_44 = arith.constant 0 : index
    %c0_45 = arith.constant 0 : index
    %110 = vector.load %arg7[%c0_43, %c2, %c0_44, %c0_45] : memref<2x4x8x32xbf16, #tpu.memory_space<vmem>>, vector<1x1x8x32xbf16>
    %111 = vector.shape_cast %110 : vector<1x1x8x32xbf16> to vector<8x32xbf16>
    %cst_46 = arith.constant dense<0.000000e+00> : vector<16x32xf32>
    %112 = tpu.matmul %109, %111, %cst_46 {dimension_numbers = #tpu.dot_dimension_numbers<[1], [0], [0], [1], [0, 0, 1, 1], [], []>} : vector<16x8xbf16>, vector<8x32xbf16>, vector<16x32xf32> -> vector<16x32xf32>
    %113 = arith.addf %106, %112 : vector<16x32xf32>
    %114 = vector.extract_strided_slice %93 {offsets = [6, 0, 0], sizes = [2, 8, 8], strides = [1, 1, 1]} : vector<8x8x8xf32> to vector<2x8x8xf32>
    %115 = vector.shape_cast %114 : vector<2x8x8xf32> to vector<16x8xf32>
    %116 = arith.truncf %115 : vector<16x8xf32> to vector<16x8xbf16>
    %c0_47 = arith.constant 0 : index
    %c3 = arith.constant 3 : index
    %c0_48 = arith.constant 0 : index
    %c0_49 = arith.constant 0 : index
    %117 = vector.load %arg7[%c0_47, %c3, %c0_48, %c0_49] : memref<2x4x8x32xbf16, #tpu.memory_space<vmem>>, vector<1x1x8x32xbf16>
    %118 = vector.shape_cast %117 : vector<1x1x8x32xbf16> to vector<8x32xbf16>
    %cst_50 = arith.constant dense<0.000000e+00> : vector<16x32xf32>
    %119 = tpu.matmul %116, %118, %cst_50 {dimension_numbers = #tpu.dot_dimension_numbers<[1], [0], [0], [1], [0, 0, 1, 1], [], []>} : vector<16x8xbf16>, vector<8x32xbf16>, vector<16x32xf32> -> vector<16x32xf32>
    %120 = arith.addf %113, %119 : vector<16x32xf32>
    %121 = arith.addf %4, %120 : vector<16x32xf32>
    %c0_51 = arith.constant 0 : index
    %c0_52 = arith.constant 0 : index
    %c0_53 = arith.constant 0 : index
    %122 = vector.load %arg8[%c0_51, %c0_52, %c0_53] : memref<2x1x32xf32, #tpu.memory_space<vmem>>, vector<1x1x32xf32>
    %123 = vector.shape_cast %122 : vector<1x1x32xf32> to vector<1x32xf32>
    %124 = vector.broadcast %123 : vector<1x32xf32> to vector<16x32xf32>
    %125 = arith.addf %121, %124 : vector<16x32xf32>
    %c0_54 = arith.constant 0 : index
    %c0_55 = arith.constant 0 : index
    %c0_56 = arith.constant 0 : index
    %126 = vector.load %arg9[%c0_54, %c0_55, %c0_56] : memref<2x1x32xf32, #tpu.memory_space<vmem>>, vector<1x1x32xf32>
    %127 = vector.shape_cast %126 : vector<1x1x32xf32> to vector<1x32xf32>
    %c0_57 = arith.constant 0 : index
    %c0_58 = arith.constant 0 : index
    %c0_59 = arith.constant 0 : index
    %128 = vector.load %arg10[%c0_57, %c0_58, %c0_59] : memref<2x1x32xf32, #tpu.memory_space<vmem>>, vector<1x1x32xf32>
    %129 = vector.shape_cast %128 : vector<1x1x32xf32> to vector<1x32xf32>
    %cst_60 = arith.constant dense<0.000000e+00> : vector<16xf32>
    %130 = vector.multi_reduction <add>, %125, %cst_60 [1] : vector<16x32xf32> to vector<16xf32>
    %131 = vector.shape_cast %130 : vector<16xf32> to vector<16x1xf32>
    %cst_61 = arith.constant 3.200000e+01 : f32
    %132 = vector.broadcast %cst_61 : f32 to vector<16x1xf32>
    %133 = arith.divf %131, %132 : vector<16x1xf32>
    %134 = vector.broadcast %133 : vector<16x1xf32> to vector<16x32xf32>
    %135 = arith.subf %125, %134 : vector<16x32xf32>
    %136 = arith.mulf %135, %135 : vector<16x32xf32>
    %cst_62 = arith.constant dense<0.000000e+00> : vector<16xf32>
    %137 = vector.multi_reduction <add>, %136, %cst_62 [1] : vector<16x32xf32> to vector<16xf32>
    %138 = vector.shape_cast %137 : vector<16xf32> to vector<16x1xf32>
    %cst_63 = arith.constant 3.200000e+01 : f32
    %139 = vector.broadcast %cst_63 : f32 to vector<16x1xf32>
    %140 = arith.divf %138, %139 : vector<16x1xf32>
    %cst_64 = arith.constant 9.99999974E-6 : f32
    %141 = vector.broadcast %cst_64 : f32 to vector<16x1xf32>
    %142 = arith.addf %140, %141 : vector<16x1xf32>
    %143 = math.rsqrt %142 : vector<16x1xf32>
    %144 = vector.broadcast %143 : vector<16x1xf32> to vector<16x32xf32>
    %145 = arith.mulf %135, %144 : vector<16x32xf32>
    %146 = vector.broadcast %127 : vector<1x32xf32> to vector<16x32xf32>
    %147 = arith.mulf %145, %146 : vector<16x32xf32>
    %148 = vector.broadcast %129 : vector<1x32xf32> to vector<16x32xf32>
    %149 = arith.addf %147, %148 : vector<16x32xf32>
    %150 = arith.truncf %149 : vector<16x32xf32> to vector<16x32xbf16>
    %c0_65 = arith.constant 0 : index
    %c0_66 = arith.constant 0 : index
    %c0_67 = arith.constant 0 : index
    %151 = vector.load %arg11[%c0_65, %c0_66, %c0_67] : memref<2x32x64xbf16, #tpu.memory_space<vmem>>, vector<1x32x64xbf16>
    %152 = vector.shape_cast %151 : vector<1x32x64xbf16> to vector<32x64xbf16>
    %cst_68 = arith.constant dense<0.000000e+00> : vector<16x64xf32>
    %153 = tpu.matmul %150, %152, %cst_68 {dimension_numbers = #tpu.dot_dimension_numbers<[1], [0], [0], [1], [0, 0, 1, 1], [], []>} : vector<16x32xbf16>, vector<32x64xbf16>, vector<16x64xf32> -> vector<16x64xf32>
    %c0_69 = arith.constant 0 : index
    %c0_70 = arith.constant 0 : index
    %c0_71 = arith.constant 0 : index
    %154 = vector.load %arg12[%c0_69, %c0_70, %c0_71] : memref<2x1x64xf32, #tpu.memory_space<vmem>>, vector<1x1x64xf32>
    %155 = vector.shape_cast %154 : vector<1x1x64xf32> to vector<1x64xf32>
    %156 = vector.broadcast %155 : vector<1x64xf32> to vector<16x64xf32>
    %157 = arith.addf %153, %156 : vector<16x64xf32>
    %cst_72 = arith.constant 5.000000e-01 : f32
    %158 = vector.broadcast %cst_72 : f32 to vector<16x64xf32>
    %159 = arith.mulf %158, %157 : vector<16x64xf32>
    %cst_73 = arith.constant 4.471500e-02 : f32
    %160 = vector.broadcast %cst_73 : f32 to vector<16x64xf32>
    %161 = arith.mulf %160, %157 : vector<16x64xf32>
    %162 = arith.mulf %161, %157 : vector<16x64xf32>
    %163 = arith.mulf %162, %157 : vector<16x64xf32>
    %164 = arith.addf %157, %163 : vector<16x64xf32>
    %cst_74 = arith.constant 0.797884583 : f32
    %165 = vector.broadcast %cst_74 : f32 to vector<16x64xf32>
    %166 = arith.mulf %165, %164 : vector<16x64xf32>
    %167 = math.tanh %166 : vector<16x64xf32>
    %cst_75 = arith.constant 1.000000e+00 : f32
    %168 = vector.broadcast %cst_75 : f32 to vector<16x64xf32>
    %169 = arith.addf %168, %167 : vector<16x64xf32>
    %170 = arith.mulf %159, %169 : vector<16x64xf32>
    %171 = arith.truncf %170 : vector<16x64xf32> to vector<16x64xbf16>
    %c0_76 = arith.constant 0 : index
    %c0_77 = arith.constant 0 : index
    %c0_78 = arith.constant 0 : index
    %172 = vector.load %arg13[%c0_76, %c0_77, %c0_78] : memref<2x64x32xbf16, #tpu.memory_space<vmem>>, vector<1x64x32xbf16>
    %173 = vector.shape_cast %172 : vector<1x64x32xbf16> to vector<64x32xbf16>
    %cst_79 = arith.constant dense<0.000000e+00> : vector<16x32xf32>
    %174 = tpu.matmul %171, %173, %cst_79 {dimension_numbers = #tpu.dot_dimension_numbers<[1], [0], [0], [1], [0, 0, 1, 1], [], []>} : vector<16x64xbf16>, vector<64x32xbf16>, vector<16x32xf32> -> vector<16x32xf32>
    %175 = arith.addf %125, %174 : vector<16x32xf32>
    %c0_80 = arith.constant 0 : index
    %c0_81 = arith.constant 0 : index
    %c0_82 = arith.constant 0 : index
    %176 = vector.load %arg14[%c0_80, %c0_81, %c0_82] : memref<2x1x32xf32, #tpu.memory_space<vmem>>, vector<1x1x32xf32>
    %177 = vector.shape_cast %176 : vector<1x1x32xf32> to vector<1x32xf32>
    %178 = vector.broadcast %177 : vector<1x32xf32> to vector<16x32xf32>
    %179 = arith.addf %175, %178 : vector<16x32xf32>
    %c1_83 = arith.constant 1 : index
    %c0_84 = arith.constant 0 : index
    %c0_85 = arith.constant 0 : index
    %180 = vector.load %arg3[%c1_83, %c0_84, %c0_85] : memref<2x1x32xf32, #tpu.memory_space<vmem>>, vector<1x1x32xf32>
    %181 = vector.shape_cast %180 : vector<1x1x32xf32> to vector<1x32xf32>
    %c1_86 = arith.constant 1 : index
    %c0_87 = arith.constant 0 : index
    %c0_88 = arith.constant 0 : index
    %182 = vector.load %arg4[%c1_86, %c0_87, %c0_88] : memref<2x1x32xf32, #tpu.memory_space<vmem>>, vector<1x1x32xf32>
    %183 = vector.shape_cast %182 : vector<1x1x32xf32> to vector<1x32xf32>
    %cst_89 = arith.constant dense<0.000000e+00> : vector<16xf32>
    %184 = vector.multi_reduction <add>, %179, %cst_89 [1] : vector<16x32xf32> to vector<16xf32>
    %185 = vector.shape_cast %184 : vector<16xf32> to vector<16x1xf32>
    %cst_90 = arith.constant 3.200000e+01 : f32
    %186 = vector.broadcast %cst_90 : f32 to vector<16x1xf32>
    %187 = arith.divf %185, %186 : vector<16x1xf32>
    %188 = vector.broadcast %187 : vector<16x1xf32> to vector<16x32xf32>
    %189 = arith.subf %179, %188 : vector<16x32xf32>
    %190 = arith.mulf %189, %189 : vector<16x32xf32>
    %cst_91 = arith.constant dense<0.000000e+00> : vector<16xf32>
    %191 = vector.multi_reduction <add>, %190, %cst_91 [1] : vector<16x32xf32> to vector<16xf32>
    %192 = vector.shape_cast %191 : vector<16xf32> to vector<16x1xf32>
    %cst_92 = arith.constant 3.200000e+01 : f32
    %193 = vector.broadcast %cst_92 : f32 to vector<16x1xf32>
    %194 = arith.divf %192, %193 : vector<16x1xf32>
    %cst_93 = arith.constant 9.99999974E-6 : f32
    %195 = vector.broadcast %cst_93 : f32 to vector<16x1xf32>
    %196 = arith.addf %194, %195 : vector<16x1xf32>
    %197 = math.rsqrt %196 : vector<16x1xf32>
    %198 = vector.broadcast %197 : vector<16x1xf32> to vector<16x32xf32>
    %199 = arith.mulf %189, %198 : vector<16x32xf32>
    %200 = vector.broadcast %181 : vector<1x32xf32> to vector<16x32xf32>
    %201 = arith.mulf %199, %200 : vector<16x32xf32>
    %202 = vector.broadcast %183 : vector<1x32xf32> to vector<16x32xf32>
    %203 = arith.addf %201, %202 : vector<16x32xf32>
    %204 = arith.truncf %203 : vector<16x32xf32> to vector<16x32xbf16>
    %c1_94 = arith.constant 1 : index
    %c0_95 = arith.constant 0 : index
    %c0_96 = arith.constant 0 : index
    %205 = vector.load %arg5[%c1_94, %c0_95, %c0_96] : memref<2x32x96xbf16, #tpu.memory_space<vmem>>, vector<1x32x96xbf16>
    %206 = vector.shape_cast %205 : vector<1x32x96xbf16> to vector<32x96xbf16>
    %cst_97 = arith.constant dense<0.000000e+00> : vector<16x96xf32>
    %207 = tpu.matmul %204, %206, %cst_97 {dimension_numbers = #tpu.dot_dimension_numbers<[1], [0], [0], [1], [0, 0, 1, 1], [], []>} : vector<16x32xbf16>, vector<32x96xbf16>, vector<16x96xf32> -> vector<16x96xf32>
    %c1_98 = arith.constant 1 : index
    %c0_99 = arith.constant 0 : index
    %c0_100 = arith.constant 0 : index
    %208 = vector.load %arg6[%c1_98, %c0_99, %c0_100] : memref<2x1x96xf32, #tpu.memory_space<vmem>>, vector<1x1x96xf32>
    %209 = vector.shape_cast %208 : vector<1x1x96xf32> to vector<1x96xf32>
    %210 = vector.broadcast %209 : vector<1x96xf32> to vector<16x96xf32>
    %211 = arith.addf %207, %210 : vector<16x96xf32>
    %212 = vector.extract_strided_slice %211 {offsets = [0, 0], sizes = [16, 8], strides = [1, 1]} : vector<16x96xf32> to vector<16x8xf32>
    %213 = vector.extract_strided_slice %211 {offsets = [0, 8], sizes = [16, 8], strides = [1, 1]} : vector<16x96xf32> to vector<16x8xf32>
    %214 = vector.extract_strided_slice %211 {offsets = [0, 16], sizes = [16, 8], strides = [1, 1]} : vector<16x96xf32> to vector<16x8xf32>
    %215 = vector.extract_strided_slice %211 {offsets = [0, 24], sizes = [16, 8], strides = [1, 1]} : vector<16x96xf32> to vector<16x8xf32>
    %216 = tpu.concatenate %212, %213, %214, %215 in 0 : vector<16x8xf32>, vector<16x8xf32>, vector<16x8xf32>, vector<16x8xf32> -> vector<64x8xf32>
    %217 = vector.shape_cast %216 : vector<64x8xf32> to vector<8x8x8xf32>
    %218 = arith.truncf %217 : vector<8x8x8xf32> to vector<8x8x8xbf16>
    %219 = vector.extract_strided_slice %211 {offsets = [0, 32], sizes = [16, 8], strides = [1, 1]} : vector<16x96xf32> to vector<16x8xf32>
    %220 = vector.extract_strided_slice %211 {offsets = [0, 40], sizes = [16, 8], strides = [1, 1]} : vector<16x96xf32> to vector<16x8xf32>
    %221 = vector.extract_strided_slice %211 {offsets = [0, 48], sizes = [16, 8], strides = [1, 1]} : vector<16x96xf32> to vector<16x8xf32>
    %222 = vector.extract_strided_slice %211 {offsets = [0, 56], sizes = [16, 8], strides = [1, 1]} : vector<16x96xf32> to vector<16x8xf32>
    %223 = tpu.concatenate %219, %220, %221, %222 in 0 : vector<16x8xf32>, vector<16x8xf32>, vector<16x8xf32>, vector<16x8xf32> -> vector<64x8xf32>
    %224 = vector.shape_cast %223 : vector<64x8xf32> to vector<8x8x8xf32>
    %225 = arith.truncf %224 : vector<8x8x8xf32> to vector<8x8x8xbf16>
    %226 = vector.extract_strided_slice %211 {offsets = [0, 64], sizes = [16, 8], strides = [1, 1]} : vector<16x96xf32> to vector<16x8xf32>
    %227 = vector.extract_strided_slice %211 {offsets = [0, 72], sizes = [16, 8], strides = [1, 1]} : vector<16x96xf32> to vector<16x8xf32>
    %228 = vector.extract_strided_slice %211 {offsets = [0, 80], sizes = [16, 8], strides = [1, 1]} : vector<16x96xf32> to vector<16x8xf32>
    %229 = vector.extract_strided_slice %211 {offsets = [0, 88], sizes = [16, 8], strides = [1, 1]} : vector<16x96xf32> to vector<16x8xf32>
    %230 = tpu.concatenate %226, %227, %228, %229 in 0 : vector<16x8xf32>, vector<16x8xf32>, vector<16x8xf32>, vector<16x8xf32> -> vector<64x8xf32>
    %231 = vector.shape_cast %230 : vector<64x8xf32> to vector<8x8x8xf32>
    %232 = arith.truncf %231 : vector<8x8x8xf32> to vector<8x8x8xbf16>
    "tpu.trace_start"() <{level = 10 : i32, message = "bqd,bkd->bqk"}> : () -> ()
    %cst_101 = arith.constant dense<0.000000e+00> : vector<8x8x8xf32>
    %233 = tpu.matmul %218, %225, %cst_101 {dimension_numbers = #tpu.dot_dimension_numbers<[2], [2], [1], [1], [0, 0, 0, 1, 1, 1], [0], [0]>} : vector<8x8x8xbf16>, vector<8x8x8xbf16>, vector<8x8x8xf32> -> vector<8x8x8xf32>
    "tpu.trace_stop"() : () -> ()
    %cst_102 = arith.constant 0.353553385 : f32
    %234 = vector.broadcast %cst_102 : f32 to vector<8x8x8xf32>
    %235 = arith.mulf %233, %234 : vector<8x8x8xf32>
    %cst_103 = arith.constant dense<0xFF800000> : vector<8x8xf32>
    %236 = vector.multi_reduction <maximumf>, %235, %cst_103 [2] : vector<8x8x8xf32> to vector<8x8xf32>
    %237 = vector.shape_cast %236 : vector<8x8xf32> to vector<8x8x1xf32>
    %238 = vector.broadcast %237 : vector<8x8x1xf32> to vector<8x8x8xf32>
    %239 = arith.cmpf oge, %235, %238 : vector<8x8x8xf32>
    %cst_104 = arith.constant -1.000000e+30 : f32
    %240 = vector.broadcast %cst_104 : f32 to vector<8x8x8xf32>
    %241 = arith.select %239, %240, %235 : vector<8x8x8xi1>, vector<8x8x8xf32>
    %cst_105 = arith.constant dense<0xFF800000> : vector<8x8xf32>
    %242 = vector.multi_reduction <maximumf>, %241, %cst_105 [2] : vector<8x8x8xf32> to vector<8x8xf32>
    %243 = vector.shape_cast %242 : vector<8x8xf32> to vector<8x8x1xf32>
    %244 = vector.broadcast %243 : vector<8x8x1xf32> to vector<8x8x8xf32>
    %245 = arith.cmpf oge, %241, %244 : vector<8x8x8xf32>
    %cst_106 = arith.constant -1.000000e+30 : f32
    %246 = vector.broadcast %cst_106 : f32 to vector<8x8x8xf32>
    %247 = arith.select %245, %246, %241 : vector<8x8x8xi1>, vector<8x8x8xf32>
    %cst_107 = arith.constant dense<0xFF800000> : vector<8x8xf32>
    %248 = vector.multi_reduction <maximumf>, %247, %cst_107 [2] : vector<8x8x8xf32> to vector<8x8xf32>
    %249 = vector.shape_cast %248 : vector<8x8xf32> to vector<8x8x1xf32>
    %250 = vector.broadcast %249 : vector<8x8x1xf32> to vector<8x8x8xf32>
    %251 = arith.cmpf oge, %247, %250 : vector<8x8x8xf32>
    %cst_108 = arith.constant -1.000000e+30 : f32
    %252 = vector.broadcast %cst_108 : f32 to vector<8x8x8xf32>
    %253 = arith.select %251, %252, %247 : vector<8x8x8xi1>, vector<8x8x8xf32>
    %cst_109 = arith.constant dense<0xFF800000> : vector<8x8xf32>
    %254 = vector.multi_reduction <maximumf>, %253, %cst_109 [2] : vector<8x8x8xf32> to vector<8x8xf32>
    %255 = vector.shape_cast %254 : vector<8x8xf32> to vector<8x8x1xf32>
    %256 = vector.broadcast %255 : vector<8x8x1xf32> to vector<8x8x8xf32>
    %257 = arith.cmpf oge, %235, %256 : vector<8x8x8xf32>
    %258 = vector.broadcast %237 : vector<8x8x1xf32> to vector<8x8x8xf32>
    %259 = arith.subf %235, %258 : vector<8x8x8xf32>
    %260 = math.exp %259 : vector<8x8x8xf32>
    %cst_110 = arith.constant 0.000000e+00 : f32
    %261 = vector.broadcast %cst_110 : f32 to vector<8x8x8xf32>
    %262 = arith.select %257, %260, %261 : vector<8x8x8xi1>, vector<8x8x8xf32>
    %cst_111 = arith.constant dense<0.000000e+00> : vector<8x8xf32>
    %263 = vector.multi_reduction <add>, %262, %cst_111 [2] : vector<8x8x8xf32> to vector<8x8xf32>
    %264 = vector.shape_cast %263 : vector<8x8xf32> to vector<8x8x1xf32>
    %265 = vector.broadcast %264 : vector<8x8x1xf32> to vector<8x8x8xf32>
    %266 = arith.divf %262, %265 : vector<8x8x8xf32>
    %267 = arith.truncf %266 : vector<8x8x8xf32> to vector<8x8x8xbf16>
    "tpu.trace_start"() <{level = 10 : i32, message = "bqk,bkd->bqd"}> : () -> ()
    %cst_112 = arith.constant dense<0.000000e+00> : vector<8x8x8xf32>
    %268 = tpu.matmul %267, %232, %cst_112 {dimension_numbers = #tpu.dot_dimension_numbers<[2], [1], [1], [2], [0, 0, 0, 1, 1, 2], [0], [0]>} : vector<8x8x8xbf16>, vector<8x8x8xbf16>, vector<8x8x8xf32> -> vector<8x8x8xf32>
    "tpu.trace_stop"() : () -> ()
    %269 = vector.extract_strided_slice %268 {offsets = [0, 0, 0], sizes = [2, 8, 8], strides = [1, 1, 1]} : vector<8x8x8xf32> to vector<2x8x8xf32>
    %270 = vector.shape_cast %269 : vector<2x8x8xf32> to vector<16x8xf32>
    %271 = arith.truncf %270 : vector<16x8xf32> to vector<16x8xbf16>
    %c1_113 = arith.constant 1 : index
    %c0_114 = arith.constant 0 : index
    %c0_115 = arith.constant 0 : index
    %c0_116 = arith.constant 0 : index
    %272 = vector.load %arg7[%c1_113, %c0_114, %c0_115, %c0_116] : memref<2x4x8x32xbf16, #tpu.memory_space<vmem>>, vector<1x1x8x32xbf16>
    %273 = vector.shape_cast %272 : vector<1x1x8x32xbf16> to vector<8x32xbf16>
    %cst_117 = arith.constant dense<0.000000e+00> : vector<16x32xf32>
    %274 = tpu.matmul %271, %273, %cst_117 {dimension_numbers = #tpu.dot_dimension_numbers<[1], [0], [0], [1], [0, 0, 1, 1], [], []>} : vector<16x8xbf16>, vector<8x32xbf16>, vector<16x32xf32> -> vector<16x32xf32>
    %275 = vector.extract_strided_slice %268 {offsets = [2, 0, 0], sizes = [2, 8, 8], strides = [1, 1, 1]} : vector<8x8x8xf32> to vector<2x8x8xf32>
    %276 = vector.shape_cast %275 : vector<2x8x8xf32> to vector<16x8xf32>
    %277 = arith.truncf %276 : vector<16x8xf32> to vector<16x8xbf16>
    %c1_118 = arith.constant 1 : index
    %c1_119 = arith.constant 1 : index
    %c0_120 = arith.constant 0 : index
    %c0_121 = arith.constant 0 : index
    %278 = vector.load %arg7[%c1_118, %c1_119, %c0_120, %c0_121] : memref<2x4x8x32xbf16, #tpu.memory_space<vmem>>, vector<1x1x8x32xbf16>
    %279 = vector.shape_cast %278 : vector<1x1x8x32xbf16> to vector<8x32xbf16>
    %cst_122 = arith.constant dense<0.000000e+00> : vector<16x32xf32>
    %280 = tpu.matmul %277, %279, %cst_122 {dimension_numbers = #tpu.dot_dimension_numbers<[1], [0], [0], [1], [0, 0, 1, 1], [], []>} : vector<16x8xbf16>, vector<8x32xbf16>, vector<16x32xf32> -> vector<16x32xf32>
    %281 = arith.addf %274, %280 : vector<16x32xf32>
    %282 = vector.extract_strided_slice %268 {offsets = [4, 0, 0], sizes = [2, 8, 8], strides = [1, 1, 1]} : vector<8x8x8xf32> to vector<2x8x8xf32>
    %283 = vector.shape_cast %282 : vector<2x8x8xf32> to vector<16x8xf32>
    %284 = arith.truncf %283 : vector<16x8xf32> to vector<16x8xbf16>
    %c1_123 = arith.constant 1 : index
    %c2_124 = arith.constant 2 : index
    %c0_125 = arith.constant 0 : index
    %c0_126 = arith.constant 0 : index
    %285 = vector.load %arg7[%c1_123, %c2_124, %c0_125, %c0_126] : memref<2x4x8x32xbf16, #tpu.memory_space<vmem>>, vector<1x1x8x32xbf16>
    %286 = vector.shape_cast %285 : vector<1x1x8x32xbf16> to vector<8x32xbf16>
    %cst_127 = arith.constant dense<0.000000e+00> : vector<16x32xf32>
    %287 = tpu.matmul %284, %286, %cst_127 {dimension_numbers = #tpu.dot_dimension_numbers<[1], [0], [0], [1], [0, 0, 1, 1], [], []>} : vector<16x8xbf16>, vector<8x32xbf16>, vector<16x32xf32> -> vector<16x32xf32>
    %288 = arith.addf %281, %287 : vector<16x32xf32>
    %289 = vector.extract_strided_slice %268 {offsets = [6, 0, 0], sizes = [2, 8, 8], strides = [1, 1, 1]} : vector<8x8x8xf32> to vector<2x8x8xf32>
    %290 = vector.shape_cast %289 : vector<2x8x8xf32> to vector<16x8xf32>
    %291 = arith.truncf %290 : vector<16x8xf32> to vector<16x8xbf16>
    %c1_128 = arith.constant 1 : index
    %c3_129 = arith.constant 3 : index
    %c0_130 = arith.constant 0 : index
    %c0_131 = arith.constant 0 : index
    %292 = vector.load %arg7[%c1_128, %c3_129, %c0_130, %c0_131] : memref<2x4x8x32xbf16, #tpu.memory_space<vmem>>, vector<1x1x8x32xbf16>
    %293 = vector.shape_cast %292 : vector<1x1x8x32xbf16> to vector<8x32xbf16>
    %cst_132 = arith.constant dense<0.000000e+00> : vector<16x32xf32>
    %294 = tpu.matmul %291, %293, %cst_132 {dimension_numbers = #tpu.dot_dimension_numbers<[1], [0], [0], [1], [0, 0, 1, 1], [], []>} : vector<16x8xbf16>, vector<8x32xbf16>, vector<16x32xf32> -> vector<16x32xf32>
    %295 = arith.addf %288, %294 : vector<16x32xf32>
    %296 = arith.addf %179, %295 : vector<16x32xf32>
    %c1_133 = arith.constant 1 : index
    %c0_134 = arith.constant 0 : index
    %c0_135 = arith.constant 0 : index
    %297 = vector.load %arg8[%c1_133, %c0_134, %c0_135] : memref<2x1x32xf32, #tpu.memory_space<vmem>>, vector<1x1x32xf32>
    %298 = vector.shape_cast %297 : vector<1x1x32xf32> to vector<1x32xf32>
    %299 = vector.broadcast %298 : vector<1x32xf32> to vector<16x32xf32>
    %300 = arith.addf %296, %299 : vector<16x32xf32>
    %c1_136 = arith.constant 1 : index
    %c0_137 = arith.constant 0 : index
    %c0_138 = arith.constant 0 : index
    %301 = vector.load %arg9[%c1_136, %c0_137, %c0_138] : memref<2x1x32xf32, #tpu.memory_space<vmem>>, vector<1x1x32xf32>
    %302 = vector.shape_cast %301 : vector<1x1x32xf32> to vector<1x32xf32>
    %c1_139 = arith.constant 1 : index
    %c0_140 = arith.constant 0 : index
    %c0_141 = arith.constant 0 : index
    %303 = vector.load %arg10[%c1_139, %c0_140, %c0_141] : memref<2x1x32xf32, #tpu.memory_space<vmem>>, vector<1x1x32xf32>
    %304 = vector.shape_cast %303 : vector<1x1x32xf32> to vector<1x32xf32>
    %cst_142 = arith.constant dense<0.000000e+00> : vector<16xf32>
    %305 = vector.multi_reduction <add>, %300, %cst_142 [1] : vector<16x32xf32> to vector<16xf32>
    %306 = vector.shape_cast %305 : vector<16xf32> to vector<16x1xf32>
    %cst_143 = arith.constant 3.200000e+01 : f32
    %307 = vector.broadcast %cst_143 : f32 to vector<16x1xf32>
    %308 = arith.divf %306, %307 : vector<16x1xf32>
    %309 = vector.broadcast %308 : vector<16x1xf32> to vector<16x32xf32>
    %310 = arith.subf %300, %309 : vector<16x32xf32>
    %311 = arith.mulf %310, %310 : vector<16x32xf32>
    %cst_144 = arith.constant dense<0.000000e+00> : vector<16xf32>
    %312 = vector.multi_reduction <add>, %311, %cst_144 [1] : vector<16x32xf32> to vector<16xf32>
    %313 = vector.shape_cast %312 : vector<16xf32> to vector<16x1xf32>
    %cst_145 = arith.constant 3.200000e+01 : f32
    %314 = vector.broadcast %cst_145 : f32 to vector<16x1xf32>
    %315 = arith.divf %313, %314 : vector<16x1xf32>
    %cst_146 = arith.constant 9.99999974E-6 : f32
    %316 = vector.broadcast %cst_146 : f32 to vector<16x1xf32>
    %317 = arith.addf %315, %316 : vector<16x1xf32>
    %318 = math.rsqrt %317 : vector<16x1xf32>
    %319 = vector.broadcast %318 : vector<16x1xf32> to vector<16x32xf32>
    %320 = arith.mulf %310, %319 : vector<16x32xf32>
    %321 = vector.broadcast %302 : vector<1x32xf32> to vector<16x32xf32>
    %322 = arith.mulf %320, %321 : vector<16x32xf32>
    %323 = vector.broadcast %304 : vector<1x32xf32> to vector<16x32xf32>
    %324 = arith.addf %322, %323 : vector<16x32xf32>
    %325 = arith.truncf %324 : vector<16x32xf32> to vector<16x32xbf16>
    %c1_147 = arith.constant 1 : index
    %c0_148 = arith.constant 0 : index
    %c0_149 = arith.constant 0 : index
    %326 = vector.load %arg11[%c1_147, %c0_148, %c0_149] : memref<2x32x64xbf16, #tpu.memory_space<vmem>>, vector<1x32x64xbf16>
    %327 = vector.shape_cast %326 : vector<1x32x64xbf16> to vector<32x64xbf16>
    %cst_150 = arith.constant dense<0.000000e+00> : vector<16x64xf32>
    %328 = tpu.matmul %325, %327, %cst_150 {dimension_numbers = #tpu.dot_dimension_numbers<[1], [0], [0], [1], [0, 0, 1, 1], [], []>} : vector<16x32xbf16>, vector<32x64xbf16>, vector<16x64xf32> -> vector<16x64xf32>
    %c1_151 = arith.constant 1 : index
    %c0_152 = arith.constant 0 : index
    %c0_153 = arith.constant 0 : index
    %329 = vector.load %arg12[%c1_151, %c0_152, %c0_153] : memref<2x1x64xf32, #tpu.memory_space<vmem>>, vector<1x1x64xf32>
    %330 = vector.shape_cast %329 : vector<1x1x64xf32> to vector<1x64xf32>
    %331 = vector.broadcast %330 : vector<1x64xf32> to vector<16x64xf32>
    %332 = arith.addf %328, %331 : vector<16x64xf32>
    %cst_154 = arith.constant 5.000000e-01 : f32
    %333 = vector.broadcast %cst_154 : f32 to vector<16x64xf32>
    %334 = arith.mulf %333, %332 : vector<16x64xf32>
    %cst_155 = arith.constant 4.471500e-02 : f32
    %335 = vector.broadcast %cst_155 : f32 to vector<16x64xf32>
    %336 = arith.mulf %335, %332 : vector<16x64xf32>
    %337 = arith.mulf %336, %332 : vector<16x64xf32>
    %338 = arith.mulf %337, %332 : vector<16x64xf32>
    %339 = arith.addf %332, %338 : vector<16x64xf32>
    %cst_156 = arith.constant 0.797884583 : f32
    %340 = vector.broadcast %cst_156 : f32 to vector<16x64xf32>
    %341 = arith.mulf %340, %339 : vector<16x64xf32>
    %342 = math.tanh %341 : vector<16x64xf32>
    %cst_157 = arith.constant 1.000000e+00 : f32
    %343 = vector.broadcast %cst_157 : f32 to vector<16x64xf32>
    %344 = arith.addf %343, %342 : vector<16x64xf32>
    %345 = arith.mulf %334, %344 : vector<16x64xf32>
    %346 = arith.truncf %345 : vector<16x64xf32> to vector<16x64xbf16>
    %c1_158 = arith.constant 1 : index
    %c0_159 = arith.constant 0 : index
    %c0_160 = arith.constant 0 : index
    %347 = vector.load %arg13[%c1_158, %c0_159, %c0_160] : memref<2x64x32xbf16, #tpu.memory_space<vmem>>, vector<1x64x32xbf16>
    %348 = vector.shape_cast %347 : vector<1x64x32xbf16> to vector<64x32xbf16>
    %cst_161 = arith.constant dense<0.000000e+00> : vector<16x32xf32>
    %349 = tpu.matmul %346, %348, %cst_161 {dimension_numbers = #tpu.dot_dimension_numbers<[1], [0], [0], [1], [0, 0, 1, 1], [], []>} : vector<16x64xbf16>, vector<64x32xbf16>, vector<16x32xf32> -> vector<16x32xf32>
    %350 = arith.addf %300, %349 : vector<16x32xf32>
    %c1_162 = arith.constant 1 : index
    %c0_163 = arith.constant 0 : index
    %c0_164 = arith.constant 0 : index
    %351 = vector.load %arg14[%c1_162, %c0_163, %c0_164] : memref<2x1x32xf32, #tpu.memory_space<vmem>>, vector<1x1x32xf32>
    %352 = vector.shape_cast %351 : vector<1x1x32xf32> to vector<1x32xf32>
    %353 = vector.broadcast %352 : vector<1x32xf32> to vector<16x32xf32>
    %354 = arith.addf %350, %353 : vector<16x32xf32>
    %355 = vector.shape_cast %354 : vector<16x32xf32> to vector<2x8x32xf32>
    %c0_165 = arith.constant 0 : index
    %c0_166 = arith.constant 0 : index
    %c0_167 = arith.constant 0 : index
    %356 = vector.load %arg15[%c0_165, %c0_166, %c0_167] : memref<2x8x32xf32, #tpu.memory_space<vmem>>, vector<2x8x32xf32>
    tpu.vector_store %arg15[%c0_165, %c0_166, %c0_167], %355 {strides = array<i32>} : memref<2x8x32xf32, #tpu.memory_space<vmem>>, vector<2x8x32xf32>,
    return
  }
  func.func @transform_0(%arg0: i32) -> (i32, i32, i32) {
    %c0_i32 = arith.constant 0 : i32
    %c0_i32_0 = arith.constant 0 : i32
    %c0_i32_1 = arith.constant 0 : i32
    return %arg0, %c0_i32, %c0_i32_0 : i32, i32, i32
  }
  func.func @transform_1(%arg0: i32) -> (i32, i32, i32) {
    %c0_i32 = arith.constant 0 : i32
    %c0_i32_0 = arith.constant 0 : i32
    %c0_i32_1 = arith.constant 0 : i32
    %c0_i32_2 = arith.constant 0 : i32
    return %c0_i32, %c0_i32_0, %c0_i32_1 : i32, i32, i32
  }
  func.func @transform_2(%arg0: i32) -> (i32, i32, i32) {
    %c0_i32 = arith.constant 0 : i32
    %c0_i32_0 = arith.constant 0 : i32
    %c0_i32_1 = arith.constant 0 : i32
    %c0_i32_2 = arith.constant 0 : i32
    return %c0_i32, %c0_i32_0, %c0_i32_1 : i32, i32, i32
  }
  func.func @transform_3(%arg0: i32) -> (i32, i32, i32) {
    %c0_i32 = arith.constant 0 : i32
    %c0_i32_0 = arith.constant 0 : i32
    %c0_i32_1 = arith.constant 0 : i32
    %c0_i32_2 = arith.constant 0 : i32
    return %c0_i32, %c0_i32_0, %c0_i32_1 : i32, i32, i32
  }
  func.func @transform_4(%arg0: i32) -> (i32, i32, i32) {
    %c0_i32 = arith.constant 0 : i32
    %c0_i32_0 = arith.constant 0 : i32
    %c0_i32_1 = arith.constant 0 : i32
    %c0_i32_2 = arith.constant 0 : i32
    return %c0_i32, %c0_i32_0, %c0_i32_1 : i32, i32, i32
  }
  func.func @transform_5(%arg0: i32) -> (i32, i32, i32) {
    %c0_i32 = arith.constant 0 : i32
    %c0_i32_0 = arith.constant 0 : i32
    %c0_i32_1 = arith.constant 0 : i32
    %c0_i32_2 = arith.constant 0 : i32
    return %c0_i32, %c0_i32_0, %c0_i32_1 : i32, i32, i32
  }
  func.func @transform_6(%arg0: i32) -> (i32, i32, i32, i32) {
    %c0_i32 = arith.constant 0 : i32
    %c0_i32_0 = arith.constant 0 : i32
    %c0_i32_1 = arith.constant 0 : i32
    %c0_i32_2 = arith.constant 0 : i32
    %c0_i32_3 = arith.constant 0 : i32
    return %c0_i32, %c0_i32_0, %c0_i32_1, %c0_i32_2 : i32, i32, i32, i32
  }
  func.func @transform_7(%arg0: i32) -> (i32, i32, i32) {
    %c0_i32 = arith.constant 0 : i32
    %c0_i32_0 = arith.constant 0 : i32
    %c0_i32_1 = arith.constant 0 : i32
    %c0_i32_2 = arith.constant 0 : i32
    return %c0_i32, %c0_i32_0, %c0_i32_1 : i32, i32, i32
  }
  func.func @transform_8(%arg0: i32) -> (i32, i32, i32) {
    %c0_i32 = arith.constant 0 : i32
    %c0_i32_0 = arith.constant 0 : i32
    %c0_i32_1 = arith.constant 0 : i32
    %c0_i32_2 = arith.constant 0 : i32
    return %c0_i32, %c0_i32_0, %c0_i32_1 : i32, i32, i32
  }
  func.func @transform_9(%arg0: i32) -> (i32, i32, i32) {
    %c0_i32 = arith.constant 0 : i32
    %c0_i32_0 = arith.constant 0 : i32
    %c0_i32_1 = arith.constant 0 : i32
    %c0_i32_2 = arith.constant 0 : i32
    return %c0_i32, %c0_i32_0, %c0_i32_1 : i32, i32, i32
  }
  func.func @transform_10(%arg0: i32) -> (i32, i32, i32) {
    %c0_i32 = arith.constant 0 : i32
    %c0_i32_0 = arith.constant 0 : i32
    %c0_i32_1 = arith.constant 0 : i32
    %c0_i32_2 = arith.constant 0 : i32
    return %c0_i32, %c0_i32_0, %c0_i32_1 : i32, i32, i32
  }
  func.func @transform_11(%arg0: i32) -> (i32, i32, i32) {
    %c0_i32 = arith.constant 0 : i32
    %c0_i32_0 = arith.constant 0 : i32
    %c0_i32_1 = arith.constant 0 : i32
    %c0_i32_2 = arith.constant 0 : i32
    return %c0_i32, %c0_i32_0, %c0_i32_1 : i32, i32, i32
  }
  func.func @transform_12(%arg0: i32) -> (i32, i32, i32) {
    %c0_i32 = arith.constant 0 : i32
    %c0_i32_0 = arith.constant 0 : i32
    %c0_i32_1 = arith.constant 0 : i32
    %c0_i32_2 = arith.constant 0 : i32
    return %c0_i32, %c0_i32_0, %c0_i32_1 : i32, i32, i32
  }
  func.func @transform_13(%arg0: i32) -> (i32, i32, i32) {
    %c0_i32 = arith.constant 0 : i32
    %c0_i32_0 = arith.constant 0 : i32
    %c0_i32_1 = arith.constant 0 : i32
    %c0_i32_2 = arith.constant 0 : i32
    return %c0_i32, %c0_i32_0, %c0_i32_1 : i32, i32, i32
  }
  func.func @transform_14(%arg0: i32) -> (i32, i32, i32) {
    %c0_i32 = arith.constant 0 : i32
    %c0_i32_0 = arith.constant 0 : i32
    %c0_i32_1 = arith.constant 0 : i32
    return %arg0, %c0_i32, %c0_i32_0 : i32, i32, i32
  }
}

</mosaic_0001>

<llo_original>
// kernel: tpu_custom_call.1
$region0: #{tpu_custom_call.1}
  #allocation0 [shape = 'u32[]', space=smem, size = 0x4, offset = 0x4, fixed_abs, tag = 'smem constant byte address 0x4 - core index']
  #allocation1 [shape = 'u32[144,128]{1,0:T(1,128)}', space=vmem, size = 0x12000, scoped, tag = 'internal scratch']
  %s0 = inlined_call_operand.hbm [shape: f32[2,8,32], index: 0, kind: input, shape index: {}]
  %s1 = inlined_call_operand.hbm [shape: f32[1,8,32], index: 1, kind: input, shape index: {}]
  %s2 = inlined_call_operand.vmem [shape: f32[2,1,32], index: 2, kind: input, shape index: {}]
  %s3 = inlined_call_operand.vmem [shape: f32[2,1,32], index: 3, kind: input, shape index: {}]
  %s4 = inlined_call_operand.vmem [shape: bf16[2,32,96], index: 4, kind: input, shape index: {}]
  %s5 = inlined_call_operand.vmem [shape: f32[2,1,96], index: 5, kind: input, shape index: {}]
  %s6 = inlined_call_operand.vmem [shape: bf16[2,4,8,32], index: 6, kind: input, shape index: {}]
  %s7 = inlined_call_operand.vmem [shape: f32[2,1,32], index: 7, kind: input, shape index: {}]
  %s8 = inlined_call_operand.vmem [shape: f32[2,1,32], index: 8, kind: input, shape index: {}]
  %s9 = inlined_call_operand.vmem [shape: f32[2,1,32], index: 9, kind: input, shape index: {}]
  %s10 = inlined_call_operand.vmem [shape: bf16[2,32,64], index: 10, kind: input, shape index: {}]
  %s11 = inlined_call_operand.hbm [shape: f32[2,1,64], index: 11, kind: input, shape index: {}]
  %s12 = inlined_call_operand.vmem [shape: bf16[2,64,32], index: 12, kind: input, shape index: {}]
  %s13 = inlined_call_operand.vmem [shape: f32[2,1,32], index: 13, kind: input, shape index: {}]
  %s14 = inlined_call_operand.hbm [shape: f32[2,8,32], index: 14, kind: output, shape index: {}]
  %s15 = sld [smem:[#allocation0]]
  $region78: #{tpu_custom_call.1} parent=0
    _
  %s17 = ssub.s32 1, %s15
  %s18 = scalar_select 0, %s17, %s15
  $region1: #{tpu_custom_call.1} parent=0
    #allocation2 [shape = 'u8[8192]{0}', space=vmem, size = 0x2000, scoped, tag = 'input window, operand 0, single buffered']
    #allocation3 [shape = 's32[1]{0}', space=sflag, size = 0x4, scoped, tag = 'scoped memory for tpu_custom_call.1']
    #allocation4 [shape = 's32[1]{0}', space=sflag, size = 0x4, scoped, tag = 'scoped memory for tpu_custom_call.1']
    #allocation5 [shape = 'u8[4096]{0}', space=vmem, size = 0x1000, scoped, tag = 'input window, operand 1, single buffered']
    #allocation6 [shape = 's32[1]{0}', space=sflag, size = 0x4, scoped, tag = 'scoped memory for tpu_custom_call.1']
    #allocation7 [shape = 'u8[1024]{0}', space=vmem, size = 0x400, scoped, tag = 'input window, operand 11, single buffered']
    #allocation8 [shape = 'u8[8192]{0}', space=vmem, size = 0x2000, scoped, tag = 'output window, operand 0, single buffered']
    %19 = vsyncpa [#allocation3], 0
    %20 = vsyncpa [#allocation6], 0
    %21 = vsyncpa [#allocation4], 0
    // Predicated region
    $region2: #{tpu_custom_call.1} parent=1 // pred_check
      _
    $region3: #{tpu_custom_call.1} parent=1 // pred_check_branch
      %23 = sbr.rel (0) target = $region5
    $region4: #{tpu_custom_call.1} parent=1 // pred_region
      %s25 = ssub.s32 256, 256
      %26 = vsyncadd [#allocation3], %s25
      %s27 = sshll.u32 [#allocation2], 4
      %s28 = int_to_ptr.vmem [resolvable:$true] %s27
      %33 = dma.hbm_to_vmem [thread:$0]  %s0, 256, %s28, [#allocation3], 128, 128, 8
    $region5: #{tpu_custom_call.1} parent=1 // pred_fallthru
      _
    // Predicated region
    $region6: #{tpu_custom_call.1} parent=1 // pred_check
      _
    $region7: #{tpu_custom_call.1} parent=1 // pred_check_branch
      %35 = sbr.rel (0) target = $region9
    $region8: #{tpu_custom_call.1} parent=1 // pred_region
      %s37 = ssub.s32 128, 128
      %38 = vsyncadd [#allocation6], %s37
      %s40 = sshll.u32 [#allocation5], 4
      %s41 = int_to_ptr.vmem [resolvable:$true] %s40
      %43 = dma.hbm_to_vmem [thread:$0]  %s1, 128, %s41, [#allocation6]
    $region9: #{tpu_custom_call.1} parent=1 // pred_fallthru
      _
    // Predicated region
    $region10: #{tpu_custom_call.1} parent=1 // pred_check
      _
    $region11: #{tpu_custom_call.1} parent=1 // pred_check_branch
      %45 = sbr.rel (0) target = $region13
    $region12: #{tpu_custom_call.1} parent=1 // pred_region
      _
    $region13: #{tpu_custom_call.1} parent=1 // pred_fallthru
      _
    // Predicated region
    $region14: #{tpu_custom_call.1} parent=1 // pred_check
      _
    $region15: #{tpu_custom_call.1} parent=1 // pred_check_branch
      %47 = sbr.rel (0) target = $region17
    $region16: #{tpu_custom_call.1} parent=1 // pred_region
      _
    $region17: #{tpu_custom_call.1} parent=1 // pred_fallthru
      _
    // Predicated region
    $region18: #{tpu_custom_call.1} parent=1 // pred_check
      _
    $region19: #{tpu_custom_call.1} parent=1 // pred_check_branch
      %49 = sbr.rel (0) target = $region21
    $region20: #{tpu_custom_call.1} parent=1 // pred_region
      _
    $region21: #{tpu_custom_call.1} parent=1 // pred_fallthru
      _
    // Predicated region
    $region22: #{tpu_custom_call.1} parent=1 // pred_check
      _
    $region23: #{tpu_custom_call.1} parent=1 // pred_check_branch
      %51 = sbr.rel (0) target = $region25
    $region24: #{tpu_custom_call.1} parent=1 // pred_region
      _
    $region25: #{tpu_custom_call.1} parent=1 // pred_fallthru
      _
    // Predicated region
    $region26: #{tpu_custom_call.1} parent=1 // pred_check
      _
    $region27: #{tpu_custom_call.1} parent=1 // pred_check_branch
      %53 = sbr.rel (0) target = $region29
    $region28: #{tpu_custom_call.1} parent=1 // pred_region
      _
    $region29: #{tpu_custom_call.1} parent=1 // pred_fallthru
      _
    // Predicated region
    $region30: #{tpu_custom_call.1} parent=1 // pred_check
      _
    $region31: #{tpu_custom_call.1} parent=1 // pred_check_branch
      %55 = sbr.rel (0) target = $region33
    $region32: #{tpu_custom_call.1} parent=1 // pred_region
      _
    $region33: #{tpu_custom_call.1} parent=1 // pred_fallthru
      _
    // Predicated region
    $region34: #{tpu_custom_call.1} parent=1 // pred_check
      _
    $region35: #{tpu_custom_call.1} parent=1 // pred_check_branch
      %57 = sbr.rel (0) target = $region37
    $region36: #{tpu_custom_call.1} parent=1 // pred_region
      _
    $region37: #{tpu_custom_call.1} parent=1 // pred_fallthru
      _
    // Predicated region
    $region38: #{tpu_custom_call.1} parent=1 // pred_check
      _
    $region39: #{tpu_custom_call.1} parent=1 // pred_check_branch
      %59 = sbr.rel (0) target = $region41
    $region40: #{tpu_custom_call.1} parent=1 // pred_region
      _
    $region41: #{tpu_custom_call.1} parent=1 // pred_fallthru
      _
    // Predicated region
    $region42: #{tpu_custom_call.1} parent=1 // pred_check
      _
    $region43: #{tpu_custom_call.1} parent=1 // pred_check_branch
      %61 = sbr.rel (0) target = $region45
    $region44: #{tpu_custom_call.1} parent=1 // pred_region
      _
    $region45: #{tpu_custom_call.1} parent=1 // pred_fallthru
      _
    // Predicated region
    $region46: #{tpu_custom_call.1} parent=1 // pred_check
      _
    $region47: #{tpu_custom_call.1} parent=1 // pred_check_branch
      %63 = sbr.rel (0) target = $region49
    $region48: #{tpu_custom_call.1} parent=1 // pred_region
      %s65 = ssub.s32 32, 32
      %66 = vsyncadd [#allocation6], %s65
      %s67 = sshll.u32 [#allocation7], 4
      %s68 = int_to_ptr.vmem [resolvable:$true] %s67
      %73 = dma.hbm_to_vmem [thread:$0]  %s11, 32, %s68, [#allocation6], 16, 16, 1
    $region49: #{tpu_custom_call.1} parent=1 // pred_fallthru
      _
    // Predicated region
    $region50: #{tpu_custom_call.1} parent=1 // pred_check
      _
    $region51: #{tpu_custom_call.1} parent=1 // pred_check_branch
      %75 = sbr.rel (0) target = $region53
    $region52: #{tpu_custom_call.1} parent=1 // pred_region
      _
    $region53: #{tpu_custom_call.1} parent=1 // pred_fallthru
      _
    // Predicated region
    $region54: #{tpu_custom_call.1} parent=1 // pred_check
      _
    $region55: #{tpu_custom_call.1} parent=1 // pred_check_branch
      %77 = sbr.rel (0) target = $region57
    $region56: #{tpu_custom_call.1} parent=1 // pred_region
      _
    $region57: #{tpu_custom_call.1} parent=1 // pred_fallthru
      _
    // Predicated region
    $region58: #{tpu_custom_call.1} parent=1 // pred_check
      _
    $region59: #{tpu_custom_call.1} parent=1 // pred_check_branch
      %79 = sbr.rel (0) target = $region61
    $region60: #{tpu_custom_call.1} parent=1 // pred_region
      %80 = dma.done [#allocation3], 256
    $region61: #{tpu_custom_call.1} parent=1 // pred_fallthru
      _
    // Predicated region
    $region62: #{tpu_custom_call.1} parent=1 // pred_check
      _
    $region63: #{tpu_custom_call.1} parent=1 // pred_check_branch
      %82 = sbr.rel (0) target = $region65
    $region64: #{tpu_custom_call.1} parent=1 // pred_region
      %83 = dma.done [#allocation6], 128
    $region65: #{tpu_custom_call.1} parent=1 // pred_fallthru
      _
    // Predicated region
    $region66: #{tpu_custom_call.1} parent=1 // pred_check
      _
    $region67: #{tpu_custom_call.1} parent=1 // pred_check_branch
      %85 = sbr.rel (0) target = $region69
    $region68: #{tpu_custom_call.1} parent=1 // pred_region
      %86 = dma.done [#allocation6], 32
    $region69: #{tpu_custom_call.1} parent=1 // pred_fallthru
      _
    %v88 = vld [vmem:[#allocation2] sm:$0xff]
    %v89 = vld [vmem:[#allocation2 + $0x8] sm:$0xff]
    %v90 = vld [vmem:[#allocation5] sm:$0xff]
    %v91 = vadd.f32 %v88, %v90
    %v92 = vadd.f32 %v89, %v90
    %v93 = vld [vmem:[%s2] sm:$0x1]
    %v94 = vld [vmem:[%s3] sm:$0x1]
    %vm95 = vcmask 261120
    %v96 = vsel %vm95, %v91, 0.0
    %97 = vadd.xlane.f32.xlu0 %v96
    %v98 = vpop.xlane.xlu0 %97
    %v99 = vsel %vm95, %v92, 0.0
    %100 = vadd.xlane.f32.xlu0 %v99
    %v101 = vpop.xlane.xlu0 %100
    %v102 = vrcp.pop 32.0
    %v103 = vmul.f32 %v98, %v102
    %v104 = vmul.f32 %v101, %v102
    %v105 = vsub.f32 %v91, %v103
    %v106 = vsub.f32 %v92, %v104
    %v107 = vmul.f32 %v105, %v105
    %v108 = vmul.f32 %v106, %v106
    %v109 = vsel %vm95, %v107, 0.0
    %110 = vadd.xlane.f32.xlu0 %v109
    %v111 = vpop.xlane.xlu0 %110
    %v112 = vsel %vm95, %v108, 0.0
    %113 = vadd.xlane.f32.xlu0 %v112
    %v114 = vpop.xlane.xlu0 %113
    %v115 = vmul.f32 %v111, %v102
    %v116 = vmul.f32 %v114, %v102
    %v117 = vadd.f32 %v115, 1e-05
    %v118 = vadd.f32 %v116, 1e-05
    %v119 = vrsqrt.pop %v117
    %v120 = vrsqrt.pop %v118
    %v121 = vmul.f32 %v105, %v119
    %v122 = vmul.f32 %v106, %v120
    %v124 = vlaneseq
    %v125 = vshrl.u32 %v124, 7
    %v126 = vsub.s32 0, %v125
    %v127 = vrot.slane %v93, %v126
    %v129 = vmul.f32 %v121, %v127
    %v130 = vmul.f32 %v122, %v127
    %v132 = vlaneseq
    %v133 = vshrl.u32 %v132, 7
    %v134 = vsub.s32 0, %v133
    %v135 = vrot.slane %v94, %v134
    %v137 = vadd.f32 %v129, %v135
    %v138 = vadd.f32 %v130, %v135
    %v139 = vpack.c.bf16 %v138, %v137
    %v140 = vld [vmem:[%s4] sm:$0xf]
    %v141 = vld [vmem:[%s4 + $0x4] sm:$0xf]
    %v142 = vld [vmem:[%s4 + $0x8] sm:$0xf]
    %v143 = vld [vmem:[%s4 + $0xc] sm:$0xf]
    %v144 = vld [vmem:[%s5] sm:$0x1]
    %v146 = vlaneseq
    %v147 = vshrl.u32 %v146, 7
    %v148 = vsub.s32 0, %v147
    %v149 = vrot.slane %v144, %v148
    %v155 = vunpack.c.l.b16 %v140
    %v156 = vunpack.c.l.b16 %v141
    %v157 = vunpack.c.l.b16 %v142
    %v158 = vunpack.c.l.b16 %v143
    %v159 = vpack.c.b16 %v156, %v155
    %v160 = vpack.c.b16 %v158, %v157
    %v164 = vsel %vm95, %v139, 0
    %166 = vmatprep.subr.bf16.mxu0 0
    %167 = vmatpush1.bf16.msra.mxu0 %v159
    %168 = vmatprep.subr.bf16.mxu0 0
    %169 = vmatpush1.bf16.msra.mxu0 %v160
    %170 = vmatprep.subr.bf16.mxu0 0
    %171 = vmatpush1.bf16.msra.mxu0 0
    %172 = vmatprep.subr.bf16.mxu0 0
    %173 = vmatpush1.bf16.msra.mxu0 0
    %174 = vmatprep.subr.bf16.mxu0 0
    %175 = vmatpush1.bf16.msra.mxu0 0
    %176 = vmatprep.subr.bf16.mxu0 0
    %177 = vmatpush1.bf16.msra.mxu0 0
    %178 = vmatprep.subr.bf16.mxu0 0
    %179 = vmatpush1.bf16.msra.mxu0 0
    %180 = vmatprep.subr.bf16.mxu0 0
    %181 = vmatpush1.bf16.msra.mxu0 0
    %182 = vmatprep.subr.bf16.mxu0 0
    %183 = vmatpush1.bf16.msra.mxu0 0
    %184 = vmatprep.subr.bf16.mxu0 0
    %185 = vmatpush1.bf16.msra.mxu0 0
    %186 = vmatprep.subr.bf16.mxu0 0
    %187 = vmatpush1.bf16.msra.mxu0 0
    %188 = vmatprep.subr.bf16.mxu0 0
    %189 = vmatpush1.bf16.msra.mxu0 0
    %190 = vmatprep.subr.bf16.mxu0 0
    %191 = vmatpush1.bf16.msra.mxu0 0
    %192 = vmatprep.subr.bf16.mxu0 0
    %193 = vmatpush1.bf16.msra.mxu0 0
    %194 = vmatprep.subr.bf16.mxu0 0
    %195 = vmatpush1.bf16.msra.mxu0 0
    %196 = vmatprep.subr.bf16.mxu0 0
    %197 = vmatpush1.bf16.msra.mxu0 0
    %198 = vmatprep.mubr.bf16.mxu0 0
    %199 = vmatmul.mubr.bf16.gmra.mrb[0].mxu0 %v164
    %v200 = vpop.f32.mrb[0].mxu0
    %v201 = vadd.f32 %v149, %v200
    %v202 = vpop.f32.mrb[0].mxu0
    %v203 = vpop.f32.mrb[0].mxu0
    %v204 = vadd.f32 %v149, %v203
    %v205 = vpop.f32.mrb[0].mxu0
    %206 = vdwg.mxu0
    %209 = vrot.lane.b32.xlu0 %v201, 120
    %v210 = vpop.permute.xlu0 %209
    %211 = vrot.lane.b32.xlu0 %v204, 120
    %v212 = vpop.permute.xlu0 %211
    %215 = vrot.lane.b32.xlu0 %v201, 112
    %v216 = vpop.permute.xlu0 %215
    %217 = vrot.lane.b32.xlu0 %v204, 112
    %v218 = vpop.permute.xlu0 %217
    %221 = vrot.lane.b32.xlu0 %v201, 104
    %v222 = vpop.permute.xlu0 %221
    %223 = vrot.lane.b32.xlu0 %v204, 104
    %v224 = vpop.permute.xlu0 %223
    %v227 = vpack.c.bf16 %v201, %v201
    %v228 = vpack.c.bf16 %v204, %v204
    %v229 = vpack.c.bf16 %v210, %v210
    %v230 = vpack.c.bf16 %v212, %v212
    %v231 = vpack.c.bf16 %v216, %v216
    %v232 = vpack.c.bf16 %v218, %v218
    %v233 = vpack.c.bf16 %v222, %v222
    %v234 = vpack.c.bf16 %v224, %v224
    %236 = vrot.lane.b32.xlu0 %v227, 96
    %v237 = vpop.permute.xlu0 %236
    %vm238 = vcmask 64512
    %v240 = vsel %vm238, %v227, 0
    %v243 = vsel %vm238, %v237, 0
    %245 = vmatprep.subr.bf16.mxu0 0
    %246 = vmatpush1.bf16.xpose.msra.mxu0 %v243
    %247 = vmatprep.subr.bf16.mxu0 0
    %248 = vmatpush1.bf16.xpose.msra.mxu0 0
    %249 = vmatprep.subr.bf16.mxu0 0
    %250 = vmatpush1.bf16.xpose.msra.mxu0 0
    %251 = vmatprep.subr.bf16.mxu0 0
    %252 = vmatpush1.bf16.xpose.msra.mxu0 0
    %253 = vmatprep.subr.bf16.mxu0 0
    %254 = vmatpush1.bf16.xpose.msra.mxu0 0
    %255 = vmatprep.subr.bf16.mxu0 0
    %256 = vmatpush1.bf16.xpose.msra.mxu0 0
    %257 = vmatprep.subr.bf16.mxu0 0
    %258 = vmatpush1.bf16.xpose.msra.mxu0 0
    %259 = vmatprep.subr.bf16.mxu0 0
    %260 = vmatpush1.bf16.xpose.msra.mxu0 0
    %261 = vmatprep.subr.bf16.mxu0 0
    %262 = vmatpush1.bf16.xpose.msra.mxu0 0
    %263 = vmatprep.subr.bf16.mxu0 0
    %264 = vmatpush1.bf16.xpose.msra.mxu0 0
    %265 = vmatprep.subr.bf16.mxu0 0
    %266 = vmatpush1.bf16.xpose.msra.mxu0 0
    %267 = vmatprep.subr.bf16.mxu0 0
    %268 = vmatpush1.bf16.xpose.msra.mxu0 0
    %269 = vmatprep.subr.bf16.mxu0 0
    %270 = vmatpush1.bf16.xpose.msra.mxu0 0
    %271 = vmatprep.subr.bf16.mxu0 0
    %272 = vmatpush1.bf16.xpose.msra.mxu0 0
    %273 = vmatprep.subr.bf16.mxu0 0
    %274 = vmatpush1.bf16.xpose.msra.mxu0 0
    %275 = vmatprep.subr.bf16.mxu0 0
    %276 = vmatpush1.bf16.xpose.msra.mxu0 0
    %277 = vmatprep.mubr.bf16.mxu0 0
    %278 = vmatmul.mubr.bf16.gmra.mrb[0].mxu0 %v240
    %v279 = vpop.f32.mrb[0].mxu0
    %v280 = vadd.f32 0.0, %v279
    %v281 = vpop.f32.mrb[0].mxu0
    %v282 = vpop.f32.mrb[0].mxu0
    %v283 = vpop.f32.mrb[0].mxu0
    %284 = vdwg.mxu0
    %286 = vrot.lane.b32.xlu0 %v228, 96
    %v287 = vpop.permute.xlu0 %286
    %v289 = vsel %vm238, %v228, 0
    %v292 = vsel %vm238, %v287, 0
    %294 = vmatprep.subr.bf16.mxu0 0
    %295 = vmatpush1.bf16.xpose.msra.mxu0 %v292
    %296 = vmatprep.subr.bf16.mxu0 0
    %297 = vmatpush1.bf16.xpose.msra.mxu0 0
    %298 = vmatprep.subr.bf16.mxu0 0
    %299 = vmatpush1.bf16.xpose.msra.mxu0 0
    %300 = vmatprep.subr.bf16.mxu0 0
    %301 = vmatpush1.bf16.xpose.msra.mxu0 0
    %302 = vmatprep.subr.bf16.mxu0 0
    %303 = vmatpush1.bf16.xpose.msra.mxu0 0
    %304 = vmatprep.subr.bf16.mxu0 0
    %305 = vmatpush1.bf16.xpose.msra.mxu0 0
    %306 = vmatprep.subr.bf16.mxu0 0
    %307 = vmatpush1.bf16.xpose.msra.mxu0 0
    %308 = vmatprep.subr.bf16.mxu0 0
    %309 = vmatpush1.bf16.xpose.msra.mxu0 0
    %310 = vmatprep.subr.bf16.mxu0 0
    %311 = vmatpush1.bf16.xpose.msra.mxu0 0
    %312 = vmatprep.subr.bf16.mxu0 0
    %313 = vmatpush1.bf16.xpose.msra.mxu0 0
    %314 = vmatprep.subr.bf16.mxu0 0
    %315 = vmatpush1.bf16.xpose.msra.mxu0 0
    %316 = vmatprep.subr.bf16.mxu0 0
    %317 = vmatpush1.bf16.xpose.msra.mxu0 0
    %318 = vmatprep.subr.bf16.mxu0 0
    %319 = vmatpush1.bf16.xpose.msra.mxu0 0
    %320 = vmatprep.subr.bf16.mxu0 0
    %321 = vmatpush1.bf16.xpose.msra.mxu0 0
    %322 = vmatprep.subr.bf16.mxu0 0
    %323 = vmatpush1.bf16.xpose.msra.mxu0 0
    %324 = vmatprep.subr.bf16.mxu0 0
    %325 = vmatpush1.bf16.xpose.msra.mxu0 0
    %326 = vmatprep.mubr.bf16.mxu0 0
    %327 = vmatmul.mubr.bf16.gmra.mrb[0].mxu0 %v289
    %v328 = vpop.f32.mrb[0].mxu0
    %v329 = vadd.f32 0.0, %v328
    %v330 = vpop.f32.mrb[0].mxu0
    %v331 = vpop.f32.mrb[0].mxu0
    %v332 = vpop.f32.mrb[0].mxu0
    %333 = vdwg.mxu0
    %335 = vrot.lane.b32.xlu0 %v229, 96
    %v336 = vpop.permute.xlu0 %335
    %v338 = vsel %vm238, %v229, 0
    %v341 = vsel %vm238, %v336, 0
    %343 = vmatprep.subr.bf16.mxu0 0
    %344 = vmatpush1.bf16.xpose.msra.mxu0 %v341
    %345 = vmatprep.subr.bf16.mxu0 0
    %346 = vmatpush1.bf16.xpose.msra.mxu0 0
    %347 = vmatprep.subr.bf16.mxu0 0
    %348 = vmatpush1.bf16.xpose.msra.mxu0 0
    %349 = vmatprep.subr.bf16.mxu0 0
    %350 = vmatpush1.bf16.xpose.msra.mxu0 0
    %351 = vmatprep.subr.bf16.mxu0 0
    %352 = vmatpush1.bf16.xpose.msra.mxu0 0
    %353 = vmatprep.subr.bf16.mxu0 0
    %354 = vmatpush1.bf16.xpose.msra.mxu0 0
    %355 = vmatprep.subr.bf16.mxu0 0
    %356 = vmatpush1.bf16.xpose.msra.mxu0 0
    %357 = vmatprep.subr.bf16.mxu0 0
    %358 = vmatpush1.bf16.xpose.msra.mxu0 0
    %359 = vmatprep.subr.bf16.mxu0 0
    %360 = vmatpush1.bf16.xpose.msra.mxu0 0
    %361 = vmatprep.subr.bf16.mxu0 0
    %362 = vmatpush1.bf16.xpose.msra.mxu0 0
    %363 = vmatprep.subr.bf16.mxu0 0
    %364 = vmatpush1.bf16.xpose.msra.mxu0 0
    %365 = vmatprep.subr.bf16.mxu0 0
    %366 = vmatpush1.bf16.xpose.msra.mxu0 0
    %367 = vmatprep.subr.bf16.mxu0 0
    %368 = vmatpush1.bf16.xpose.msra.mxu0 0
    %369 = vmatprep.subr.bf16.mxu0 0
    %370 = vmatpush1.bf16.xpose.msra.mxu0 0
    %371 = vmatprep.subr.bf16.mxu0 0
    %372 = vmatpush1.bf16.xpose.msra.mxu0 0
    %373 = vmatprep.subr.bf16.mxu0 0
    %374 = vmatpush1.bf16.xpose.msra.mxu0 0
    %375 = vmatprep.mubr.bf16.mxu0 0
    %376 = vmatmul.mubr.bf16.gmra.mrb[0].mxu0 %v338
    %v377 = vpop.f32.mrb[0].mxu0
    %v378 = vadd.f32 0.0, %v377
    %v379 = vpop.f32.mrb[0].mxu0
    %v380 = vpop.f32.mrb[0].mxu0
    %v381 = vpop.f32.mrb[0].mxu0
    %382 = vdwg.mxu0
    %384 = vrot.lane.b32.xlu0 %v230, 96
    %v385 = vpop.permute.xlu0 %384
    %v387 = vsel %vm238, %v230, 0
    %v390 = vsel %vm238, %v385, 0
    %392 = vmatprep.subr.bf16.mxu0 0
    %393 = vmatpush1.bf16.xpose.msra.mxu0 %v390
    %394 = vmatprep.subr.bf16.mxu0 0
    %395 = vmatpush1.bf16.xpose.msra.mxu0 0
    %396 = vmatprep.subr.bf16.mxu0 0
    %397 = vmatpush1.bf16.xpose.msra.mxu0 0
    %398 = vmatprep.subr.bf16.mxu0 0
    %399 = vmatpush1.bf16.xpose.msra.mxu0 0
    %400 = vmatprep.subr.bf16.mxu0 0
    %401 = vmatpush1.bf16.xpose.msra.mxu0 0
    %402 = vmatprep.subr.bf16.mxu0 0
    %403 = vmatpush1.bf16.xpose.msra.mxu0 0
    %404 = vmatprep.subr.bf16.mxu0 0
    %405 = vmatpush1.bf16.xpose.msra.mxu0 0
    %406 = vmatprep.subr.bf16.mxu0 0
    %407 = vmatpush1.bf16.xpose.msra.mxu0 0
    %408 = vmatprep.subr.bf16.mxu0 0
    %409 = vmatpush1.bf16.xpose.msra.mxu0 0
    %410 = vmatprep.subr.bf16.mxu0 0
    %411 = vmatpush1.bf16.xpose.msra.mxu0 0
    %412 = vmatprep.subr.bf16.mxu0 0
    %413 = vmatpush1.bf16.xpose.msra.mxu0 0
    %414 = vmatprep.subr.bf16.mxu0 0
    %415 = vmatpush1.bf16.xpose.msra.mxu0 0
    %416 = vmatprep.subr.bf16.mxu0 0
    %417 = vmatpush1.bf16.xpose.msra.mxu0 0
    %418 = vmatprep.subr.bf16.mxu0 0
    %419 = vmatpush1.bf16.xpose.msra.mxu0 0
    %420 = vmatprep.subr.bf16.mxu0 0
    %421 = vmatpush1.bf16.xpose.msra.mxu0 0
    %422 = vmatprep.subr.bf16.mxu0 0
    %423 = vmatpush1.bf16.xpose.msra.mxu0 0
    %424 = vmatprep.mubr.bf16.mxu0 0
    %425 = vmatmul.mubr.bf16.gmra.mrb[0].mxu0 %v387
    %v426 = vpop.f32.mrb[0].mxu0
    %v427 = vadd.f32 0.0, %v426
    %v428 = vpop.f32.mrb[0].mxu0
    %v429 = vpop.f32.mrb[0].mxu0
    %v430 = vpop.f32.mrb[0].mxu0
    %431 = vdwg.mxu0
    %433 = vrot.lane.b32.xlu0 %v231, 96
    %v434 = vpop.permute.xlu0 %433
    %v436 = vsel %vm238, %v231, 0
    %v439 = vsel %vm238, %v434, 0
    %441 = vmatprep.subr.bf16.mxu0 0
    %442 = vmatpush1.bf16.xpose.msra.mxu0 %v439
    %443 = vmatprep.subr.bf16.mxu0 0
    %444 = vmatpush1.bf16.xpose.msra.mxu0 0
    %445 = vmatprep.subr.bf16.mxu0 0
    %446 = vmatpush1.bf16.xpose.msra.mxu0 0
    %447 = vmatprep.subr.bf16.mxu0 0
    %448 = vmatpush1.bf16.xpose.msra.mxu0 0
    %449 = vmatprep.subr.bf16.mxu0 0
    %450 = vmatpush1.bf16.xpose.msra.mxu0 0
    %451 = vmatprep.subr.bf16.mxu0 0
    %452 = vmatpush1.bf16.xpose.msra.mxu0 0
    %453 = vmatprep.subr.bf16.mxu0 0
    %454 = vmatpush1.bf16.xpose.msra.mxu0 0
    %455 = vmatprep.subr.bf16.mxu0 0
    %456 = vmatpush1.bf16.xpose.msra.mxu0 0
    %457 = vmatprep.subr.bf16.mxu0 0
    %458 = vmatpush1.bf16.xpose.msra.mxu0 0
    %459 = vmatprep.subr.bf16.mxu0 0
    %460 = vmatpush1.bf16.xpose.msra.mxu0 0
    %461 = vmatprep.subr.bf16.mxu0 0
    %462 = vmatpush1.bf16.xpose.msra.mxu0 0
    %463 = vmatprep.subr.bf16.mxu0 0
    %464 = vmatpush1.bf16.xpose.msra.mxu0 0
    %465 = vmatprep.subr.bf16.mxu0 0
    %466 = vmatpush1.bf16.xpose.msra.mxu0 0
    %467 = vmatprep.subr.bf16.mxu0 0
    %468 = vmatpush1.bf16.xpose.msra.mxu0 0
    %469 = vmatprep.subr.bf16.mxu0 0
    %470 = vmatpush1.bf16.xpose.msra.mxu0 0
    %471 = vmatprep.subr.bf16.mxu0 0
    %472 = vmatpush1.bf16.xpose.msra.mxu0 0
    %473 = vmatprep.mubr.bf16.mxu0 0
    %474 = vmatmul.mubr.bf16.gmra.mrb[0].mxu0 %v436
    %v475 = vpop.f32.mrb[0].mxu0
    %v476 = vadd.f32 0.0, %v475
    %v477 = vpop.f32.mrb[0].mxu0
    %v478 = vpop.f32.mrb[0].mxu0
    %v479 = vpop.f32.mrb[0].mxu0
    %480 = vdwg.mxu0
    %482 = vrot.lane.b32.xlu0 %v232, 96
    %v483 = vpop.permute.xlu0 %482
    %v485 = vsel %vm238, %v232, 0
    %v488 = vsel %vm238, %v483, 0
    %490 = vmatprep.subr.bf16.mxu0 0
    %491 = vmatpush1.bf16.xpose.msra.mxu0 %v488
    %492 = vmatprep.subr.bf16.mxu0 0
    %493 = vmatpush1.bf16.xpose.msra.mxu0 0
    %494 = vmatprep.subr.bf16.mxu0 0
    %495 = vmatpush1.bf16.xpose.msra.mxu0 0
    %496 = vmatprep.subr.bf16.mxu0 0
    %497 = vmatpush1.bf16.xpose.msra.mxu0 0
    %498 = vmatprep.subr.bf16.mxu0 0
    %499 = vmatpush1.bf16.xpose.msra.mxu0 0
    %500 = vmatprep.subr.bf16.mxu0 0
    %501 = vmatpush1.bf16.xpose.msra.mxu0 0
    %502 = vmatprep.subr.bf16.mxu0 0
    %503 = vmatpush1.bf16.xpose.msra.mxu0 0
    %504 = vmatprep.subr.bf16.mxu0 0
    %505 = vmatpush1.bf16.xpose.msra.mxu0 0
    %506 = vmatprep.subr.bf16.mxu0 0
    %507 = vmatpush1.bf16.xpose.msra.mxu0 0
    %508 = vmatprep.subr.bf16.mxu0 0
    %509 = vmatpush1.bf16.xpose.msra.mxu0 0
    %510 = vmatprep.subr.bf16.mxu0 0
    %511 = vmatpush1.bf16.xpose.msra.mxu0 0
    %512 = vmatprep.subr.bf16.mxu0 0
    %513 = vmatpush1.bf16.xpose.msra.mxu0 0
    %514 = vmatprep.subr.bf16.mxu0 0
    %515 = vmatpush1.bf16.xpose.msra.mxu0 0
    %516 = vmatprep.subr.bf16.mxu0 0
    %517 = vmatpush1.bf16.xpose.msra.mxu0 0
    %518 = vmatprep.subr.bf16.mxu0 0
    %519 = vmatpush1.bf16.xpose.msra.mxu0 0
    %520 = vmatprep.subr.bf16.mxu0 0
    %521 = vmatpush1.bf16.xpose.msra.mxu0 0
    %522 = vmatprep.mubr.bf16.mxu0 0
    %523 = vmatmul.mubr.bf16.gmra.mrb[0].mxu0 %v485
    %v524 = vpop.f32.mrb[0].mxu0
    %v525 = vadd.f32 0.0, %v524
    %v526 = vpop.f32.mrb[0].mxu0
    %v527 = vpop.f32.mrb[0].mxu0
    %v528 = vpop.f32.mrb[0].mxu0
    %529 = vdwg.mxu0
    %531 = vrot.lane.b32.xlu0 %v233, 96
    %v532 = vpop.permute.xlu0 %531
    %v534 = vsel %vm238, %v233, 0
    %v537 = vsel %vm238, %v532, 0
    %539 = vmatprep.subr.bf16.mxu0 0
    %540 = vmatpush1.bf16.xpose.msra.mxu0 %v537
    %541 = vmatprep.subr.bf16.mxu0 0
    %542 = vmatpush1.bf16.xpose.msra.mxu0 0
    %543 = vmatprep.subr.bf16.mxu0 0
    %544 = vmatpush1.bf16.xpose.msra.mxu0 0
    %545 = vmatprep.subr.bf16.mxu0 0
    %546 = vmatpush1.bf16.xpose.msra.mxu0 0
    %547 = vmatprep.subr.bf16.mxu0 0
    %548 = vmatpush1.bf16.xpose.msra.mxu0 0
    %549 = vmatprep.subr.bf16.mxu0 0
    %550 = vmatpush1.bf16.xpose.msra.mxu0 0
    %551 = vmatprep.subr.bf16.mxu0 0
    %552 = vmatpush1.bf16.xpose.msra.mxu0 0
    %553 = vmatprep.subr.bf16.mxu0 0
    %554 = vmatpush1.bf16.xpose.msra.mxu0 0
    %555 = vmatprep.subr.bf16.mxu0 0
    %556 = vmatpush1.bf16.xpose.msra.mxu0 0
    %557 = vmatprep.subr.bf16.mxu0 0
    %558 = vmatpush1.bf16.xpose.msra.mxu0 0
    %559 = vmatprep.subr.bf16.mxu0 0
    %560 = vmatpush1.bf16.xpose.msra.mxu0 0
    %561 = vmatprep.subr.bf16.mxu0 0
    %562 = vmatpush1.bf16.xpose.msra.mxu0 0
    %563 = vmatprep.subr.bf16.mxu0 0
    %564 = vmatpush1.bf16.xpose.msra.mxu0 0
    %565 = vmatprep.subr.bf16.mxu0 0
    %566 = vmatpush1.bf16.xpose.msra.mxu0 0
    %567 = vmatprep.subr.bf16.mxu0 0
    %568 = vmatpush1.bf16.xpose.msra.mxu0 0
    %569 = vmatprep.subr.bf16.mxu0 0
    %570 = vmatpush1.bf16.xpose.msra.mxu0 0
    %571 = vmatprep.mubr.bf16.mxu0 0
    %572 = vmatmul.mubr.bf16.gmra.mrb[0].mxu0 %v534
    %v573 = vpop.f32.mrb[0].mxu0
    %v574 = vadd.f32 0.0, %v573
    %v575 = vpop.f32.mrb[0].mxu0
    %v576 = vpop.f32.mrb[0].mxu0
    %v577 = vpop.f32.mrb[0].mxu0
    %578 = vdwg.mxu0
    %580 = vrot.lane.b32.xlu0 %v234, 96
    %v581 = vpop.permute.xlu0 %580
    %v583 = vsel %vm238, %v234, 0
    %v586 = vsel %vm238, %v581, 0
    %588 = vmatprep.subr.bf16.mxu0 0
    %589 = vmatpush1.bf16.xpose.msra.mxu0 %v586
    %590 = vmatprep.subr.bf16.mxu0 0
    %591 = vmatpush1.bf16.xpose.msra.mxu0 0
    %592 = vmatprep.subr.bf16.mxu0 0
    %593 = vmatpush1.bf16.xpose.msra.mxu0 0
    %594 = vmatprep.subr.bf16.mxu0 0
    %595 = vmatpush1.bf16.xpose.msra.mxu0 0
    %596 = vmatprep.subr.bf16.mxu0 0
    %597 = vmatpush1.bf16.xpose.msra.mxu0 0
    %598 = vmatprep.subr.bf16.mxu0 0
    %599 = vmatpush1.bf16.xpose.msra.mxu0 0
    %600 = vmatprep.subr.bf16.mxu0 0
    %601 = vmatpush1.bf16.xpose.msra.mxu0 0
    %602 = vmatprep.subr.bf16.mxu0 0
    %603 = vmatpush1.bf16.xpose.msra.mxu0 0
    %604 = vmatprep.subr.bf16.mxu0 0
    %605 = vmatpush1.bf16.xpose.msra.mxu0 0
    %606 = vmatprep.subr.bf16.mxu0 0
    %607 = vmatpush1.bf16.xpose.msra.mxu0 0
    %608 = vmatprep.subr.bf16.mxu0 0
    %609 = vmatpush1.bf16.xpose.msra.mxu0 0
    %610 = vmatprep.subr.bf16.mxu0 0
    %611 = vmatpush1.bf16.xpose.msra.mxu0 0
    %612 = vmatprep.subr.bf16.mxu0 0
    %613 = vmatpush1.bf16.xpose.msra.mxu0 0
    %614 = vmatprep.subr.bf16.mxu0 0
    %615 = vmatpush1.bf16.xpose.msra.mxu0 0
    %616 = vmatprep.subr.bf16.mxu0 0
    %617 = vmatpush1.bf16.xpose.msra.mxu0 0
    %618 = vmatprep.subr.bf16.mxu0 0
    %619 = vmatpush1.bf16.xpose.msra.mxu0 0
    %620 = vmatprep.mubr.bf16.mxu0 0
    %621 = vmatmul.mubr.bf16.gmra.mrb[0].mxu0 %v583
    %v622 = vpop.f32.mrb[0].mxu0
    %v623 = vadd.f32 0.0, %v622
    %v624 = vpop.f32.mrb[0].mxu0
    %v625 = vpop.f32.mrb[0].mxu0
    %v626 = vpop.f32.mrb[0].mxu0
    %627 = vdwg.mxu0
    %v628 = vmul.f32 %v280, 0.35355338
    %v629 = vmul.f32 %v329, 0.35355338
    %v630 = vmul.f32 %v378, 0.35355338
    %v631 = vmul.f32 %v427, 0.35355338
    %v632 = vmul.f32 %v476, 0.35355338
    %v633 = vmul.f32 %v525, 0.35355338
    %v634 = vmul.f32 %v574, 0.35355338
    %v635 = vmul.f32 %v623, 0.35355338
    %v636 = vsel %vm238, %v628, -inf
    %637 = vmax.xlane.f32.xlu0 %v636
    %v638 = vpop.xlane.xlu0 %637
    %v639 = vsel %vm238, %v629, -inf
    %640 = vmax.xlane.f32.xlu0 %v639
    %v641 = vpop.xlane.xlu0 %640
    %v642 = vsel %vm238, %v630, -inf
    %643 = vmax.xlane.f32.xlu0 %v642
    %v644 = vpop.xlane.xlu0 %643
    %v645 = vsel %vm238, %v631, -inf
    %646 = vmax.xlane.f32.xlu0 %v645
    %v647 = vpop.xlane.xlu0 %646
    %v648 = vsel %vm238, %v632, -inf
    %649 = vmax.xlane.f32.xlu0 %v648
    %v650 = vpop.xlane.xlu0 %649
    %v651 = vsel %vm238, %v633, -inf
    %652 = vmax.xlane.f32.xlu0 %v651
    %v653 = vpop.xlane.xlu0 %652
    %v654 = vsel %vm238, %v634, -inf
    %655 = vmax.xlane.f32.xlu0 %v654
    %v656 = vpop.xlane.xlu0 %655
    %v657 = vsel %vm238, %v635, -inf
    %658 = vmax.xlane.f32.xlu0 %v657
    %v659 = vpop.xlane.xlu0 %658
    %vm660 = vcmp.ge.f32.partialorder %v628, %v638
    %vm661 = vcmp.ge.f32.partialorder %v629, %v641
    %vm662 = vcmp.ge.f32.partialorder %v630, %v644
    %vm663 = vcmp.ge.f32.partialorder %v631, %v647
    %vm664 = vcmp.ge.f32.partialorder %v632, %v650
    %vm665 = vcmp.ge.f32.partialorder %v633, %v653
    %vm666 = vcmp.ge.f32.partialorder %v634, %v656
    %vm667 = vcmp.ge.f32.partialorder %v635, %v659
    %v668 = vsel %vm660, -1e+30, %v628
    %v669 = vsel %vm661, -1e+30, %v629
    %v670 = vsel %vm662, -1e+30, %v630
    %v671 = vsel %vm663, -1e+30, %v631
    %v672 = vsel %vm664, -1e+30, %v632
    %v673 = vsel %vm665, -1e+30, %v633
    %v674 = vsel %vm666, -1e+30, %v634
    %v675 = vsel %vm667, -1e+30, %v635
    %v676 = vsel %vm238, %v668, -inf
    %677 = vmax.xlane.f32.xlu0 %v676
    %v678 = vpop.xlane.xlu0 %677
    %v679 = vsel %vm238, %v669, -inf
    %680 = vmax.xlane.f32.xlu0 %v679
    %v681 = vpop.xlane.xlu0 %680
    %v682 = vsel %vm238, %v670, -inf
    %683 = vmax.xlane.f32.xlu0 %v682
    %v684 = vpop.xlane.xlu0 %683
    %v685 = vsel %vm238, %v671, -inf
    %686 = vmax.xlane.f32.xlu0 %v685
    %v687 = vpop.xlane.xlu0 %686
    %v688 = vsel %vm238, %v672, -inf
    %689 = vmax.xlane.f32.xlu0 %v688
    %v690 = vpop.xlane.xlu0 %689
    %v691 = vsel %vm238, %v673, -inf
    %692 = vmax.xlane.f32.xlu0 %v691
    %v693 = vpop.xlane.xlu0 %692
    %v694 = vsel %vm238, %v674, -inf
    %695 = vmax.xlane.f32.xlu0 %v694
    %v696 = vpop.xlane.xlu0 %695
    %v697 = vsel %vm238, %v675, -inf
    %698 = vmax.xlane.f32.xlu0 %v697
    %v699 = vpop.xlane.xlu0 %698
    %vm700 = vcmp.ge.f32.partialorder %v668, %v678
    %vm701 = vcmp.ge.f32.partialorder %v669, %v681
    %vm702 = vcmp.ge.f32.partialorder %v670, %v684
    %vm703 = vcmp.ge.f32.partialorder %v671, %v687
    %vm704 = vcmp.ge.f32.partialorder %v672, %v690
    %vm705 = vcmp.ge.f32.partialorder %v673, %v693
    %vm706 = vcmp.ge.f32.partialorder %v674, %v696
    %vm707 = vcmp.ge.f32.partialorder %v675, %v699
    %v708 = vsel %vm700, -1e+30, %v668
    %v709 = vsel %vm701, -1e+30, %v669
    %v710 = vsel %vm702, -1e+30, %v670
    %v711 = vsel %vm703, -1e+30, %v671
    %v712 = vsel %vm704, -1e+30, %v672
    %v713 = vsel %vm705, -1e+30, %v673
    %v714 = vsel %vm706, -1e+30, %v674
    %v715 = vsel %vm707, -1e+30, %v675
    %v716 = vsel %vm238, %v708, -inf
    %717 = vmax.xlane.f32.xlu0 %v716
    %v718 = vpop.xlane.xlu0 %717
    %v719 = vsel %vm238, %v709, -inf
    %720 = vmax.xlane.f32.xlu0 %v719
    %v721 = vpop.xlane.xlu0 %720
    %v722 = vsel %vm238, %v710, -inf
    %723 = vmax.xlane.f32.xlu0 %v722
    %v724 = vpop.xlane.xlu0 %723
    %v725 = vsel %vm238, %v711, -inf
    %726 = vmax.xlane.f32.xlu0 %v725
    %v727 = vpop.xlane.xlu0 %726
    %v728 = vsel %vm238, %v712, -inf
    %729 = vmax.xlane.f32.xlu0 %v728
    %v730 = vpop.xlane.xlu0 %729
    %v731 = vsel %vm238, %v713, -inf
    %732 = vmax.xlane.f32.xlu0 %v731
    %v733 = vpop.xlane.xlu0 %732
    %v734 = vsel %vm238, %v714, -inf
    %735 = vmax.xlane.f32.xlu0 %v734
    %v736 = vpop.xlane.xlu0 %735
    %v737 = vsel %vm238, %v715, -inf
    %738 = vmax.xlane.f32.xlu0 %v737
    %v739 = vpop.xlane.xlu0 %738
    %vm740 = vcmp.ge.f32.partialorder %v708, %v718
    %vm741 = vcmp.ge.f32.partialorder %v709, %v721
    %vm742 = vcmp.ge.f32.partialorder %v710, %v724
    %vm743 = vcmp.ge.f32.partialorder %v711, %v727
    %vm744 = vcmp.ge.f32.partialorder %v712, %v730
    %vm745 = vcmp.ge.f32.partialorder %v713, %v733
    %vm746 = vcmp.ge.f32.partialorder %v714, %v736
    %vm747 = vcmp.ge.f32.partialorder %v715, %v739
    %v748 = vsel %vm740, -1e+30, %v708
    %v749 = vsel %vm741, -1e+30, %v709
    %v750 = vsel %vm742, -1e+30, %v710
    %v751 = vsel %vm743, -1e+30, %v711
    %v752 = vsel %vm744, -1e+30, %v712
    %v753 = vsel %vm745, -1e+30, %v713
    %v754 = vsel %vm746, -1e+30, %v714
    %v755 = vsel %vm747, -1e+30, %v715
    %v756 = vsel %vm238, %v748, -inf
    %757 = vmax.xlane.f32.xlu0 %v756
    %v758 = vpop.xlane.xlu0 %757
    %v759 = vsel %vm238, %v749, -inf
    %760 = vmax.xlane.f32.xlu0 %v759
    %v761 = vpop.xlane.xlu0 %760
    %v762 = vsel %vm238, %v750, -inf
    %763 = vmax.xlane.f32.xlu0 %v762
    %v764 = vpop.xlane.xlu0 %763
    %v765 = vsel %vm238, %v751, -inf
    %766 = vmax.xlane.f32.xlu0 %v765
    %v767 = vpop.xlane.xlu0 %766
    %v768 = vsel %vm238, %v752, -inf
    %769 = vmax.xlane.f32.xlu0 %v768
    %v770 = vpop.xlane.xlu0 %769
    %v771 = vsel %vm238, %v753, -inf
    %772 = vmax.xlane.f32.xlu0 %v771
    %v773 = vpop.xlane.xlu0 %772
    %v774 = vsel %vm238, %v754, -inf
    %775 = vmax.xlane.f32.xlu0 %v774
    %v776 = vpop.xlane.xlu0 %775
    %v777 = vsel %vm238, %v755, -inf
    %778 = vmax.xlane.f32.xlu0 %v777
    %v779 = vpop.xlane.xlu0 %778
    %vm780 = vcmp.ge.f32.partialorder %v628, %v758
    %vm781 = vcmp.ge.f32.partialorder %v629, %v761
    %vm782 = vcmp.ge.f32.partialorder %v630, %v764
    %vm783 = vcmp.ge.f32.partialorder %v631, %v767
    %vm784 = vcmp.ge.f32.partialorder %v632, %v770
    %vm785 = vcmp.ge.f32.partialorder %v633, %v773
    %vm786 = vcmp.ge.f32.partialorder %v634, %v776
    %vm787 = vcmp.ge.f32.partialorder %v635, %v779
    %v788 = vsub.f32 %v628, %v638
    %v789 = vsub.f32 %v629, %v641
    %v790 = vsub.f32 %v630, %v644
    %v791 = vsub.f32 %v631, %v647
    %v792 = vsub.f32 %v632, %v650
    %v793 = vsub.f32 %v633, %v653
    %v794 = vsub.f32 %v634, %v656
    %v795 = vsub.f32 %v635, %v659
    %v796 = vmul.f32 %v788, 1.442695
    %v797 = vpow.pop %v796
    %v798 = vmul.f32 %v789, 1.442695
    %v799 = vpow.pop %v798
    %v800 = vmul.f32 %v790, 1.442695
    %v801 = vpow.pop %v800
    %v802 = vmul.f32 %v791, 1.442695
    %v803 = vpow.pop %v802
    %v804 = vmul.f32 %v792, 1.442695
    %v805 = vpow.pop %v804
    %v806 = vmul.f32 %v793, 1.442695
    %v807 = vpow.pop %v806
    %v808 = vmul.f32 %v794, 1.442695
    %v809 = vpow.pop %v808
    %v810 = vmul.f32 %v795, 1.442695
    %v811 = vpow.pop %v810
    %v812 = vsel %vm780, %v797, 0.0
    %v813 = vsel %vm781, %v799, 0.0
    %v814 = vsel %vm782, %v801, 0.0
    %v815 = vsel %vm783, %v803, 0.0
    %v816 = vsel %vm784, %v805, 0.0
    %v817 = vsel %vm785, %v807, 0.0
    %v818 = vsel %vm786, %v809, 0.0
    %v819 = vsel %vm787, %v811, 0.0
    %v820 = vsel %vm238, %v812, 0.0
    %821 = vadd.xlane.f32.xlu0 %v820
    %v822 = vpop.xlane.xlu0 %821
    %v823 = vsel %vm238, %v813, 0.0
    %824 = vadd.xlane.f32.xlu0 %v823
    %v825 = vpop.xlane.xlu0 %824
    %v826 = vsel %vm238, %v814, 0.0
    %827 = vadd.xlane.f32.xlu0 %v826
    %v828 = vpop.xlane.xlu0 %827
    %v829 = vsel %vm238, %v815, 0.0
    %830 = vadd.xlane.f32.xlu0 %v829
    %v831 = vpop.xlane.xlu0 %830
    %v832 = vsel %vm238, %v816, 0.0
    %833 = vadd.xlane.f32.xlu0 %v832
    %v834 = vpop.xlane.xlu0 %833
    %v835 = vsel %vm238, %v817, 0.0
    %836 = vadd.xlane.f32.xlu0 %v835
    %v837 = vpop.xlane.xlu0 %836
    %v838 = vsel %vm238, %v818, 0.0
    %839 = vadd.xlane.f32.xlu0 %v838
    %v840 = vpop.xlane.xlu0 %839
    %v841 = vsel %vm238, %v819, 0.0
    %842 = vadd.xlane.f32.xlu0 %v841
    %v843 = vpop.xlane.xlu0 %842
    %v844 = vrcp.pop %v822
    %v845 = vmul.f32 %v812, %v844
    %v846 = vrcp.pop %v825
    %v847 = vmul.f32 %v813, %v846
    %v848 = vrcp.pop %v828
    %v849 = vmul.f32 %v814, %v848
    %v850 = vrcp.pop %v831
    %v851 = vmul.f32 %v815, %v850
    %v852 = vrcp.pop %v834
    %v853 = vmul.f32 %v816, %v852
    %v854 = vrcp.pop %v837
    %v855 = vmul.f32 %v817, %v854
    %v856 = vrcp.pop %v840
    %v857 = vmul.f32 %v818, %v856
    %v858 = vrcp.pop %v843
    %v859 = vmul.f32 %v819, %v858
    %v860 = vpack.c.bf16 %v845, %v845
    %v861 = vpack.c.bf16 %v847, %v847
    %v862 = vpack.c.bf16 %v849, %v849
    %v863 = vpack.c.bf16 %v851, %v851
    %v864 = vpack.c.bf16 %v853, %v853
    %v865 = vpack.c.bf16 %v855, %v855
    %v866 = vpack.c.bf16 %v857, %v857
    %v867 = vpack.c.bf16 %v859, %v859
    %868 = vrot.lane.b32.xlu0 %v227, 64
    %v869 = vpop.permute.xlu0 %868
    %v871 = vsel %vm238, %v860, 0
    %vm873 = vcmask 1043456
    %v875 = vsel %vm873, %v869, 0
    %877 = vmatprep.subr.bf16.mxu0 0
    %878 = vmatpush1.bf16.msra.mxu0 %v875
    %879 = vmatprep.subr.bf16.mxu0 0
    %880 = vmatpush1.bf16.msra.mxu0 0
    %881 = vmatprep.subr.bf16.mxu0 0
    %882 = vmatpush1.bf16.msra.mxu0 0
    %883 = vmatprep.subr.bf16.mxu0 0
    %884 = vmatpush1.bf16.msra.mxu0 0
    %885 = vmatprep.subr.bf16.mxu0 0
    %886 = vmatpush1.bf16.msra.mxu0 0
    %887 = vmatprep.subr.bf16.mxu0 0
    %888 = vmatpush1.bf16.msra.mxu0 0
    %889 = vmatprep.subr.bf16.mxu0 0
    %890 = vmatpush1.bf16.msra.mxu0 0
    %891 = vmatprep.subr.bf16.mxu0 0
    %892 = vmatpush1.bf16.msra.mxu0 0
    %893 = vmatprep.subr.bf16.mxu0 0
    %894 = vmatpush1.bf16.msra.mxu0 0
    %895 = vmatprep.subr.bf16.mxu0 0
    %896 = vmatpush1.bf16.msra.mxu0 0
    %897 = vmatprep.subr.bf16.mxu0 0
    %898 = vmatpush1.bf16.msra.mxu0 0
    %899 = vmatprep.subr.bf16.mxu0 0
    %900 = vmatpush1.bf16.msra.mxu0 0
    %901 = vmatprep.subr.bf16.mxu0 0
    %902 = vmatpush1.bf16.msra.mxu0 0
    %903 = vmatprep.subr.bf16.mxu0 0
    %904 = vmatpush1.bf16.msra.mxu0 0
    %905 = vmatprep.subr.bf16.mxu0 0
    %906 = vmatpush1.bf16.msra.mxu0 0
    %907 = vmatprep.subr.bf16.mxu0 0
    %908 = vmatpush1.bf16.msra.mxu0 0
    %909 = vmatprep.mubr.bf16.mxu0 0
    %910 = vmatmul.mubr.bf16.gmra.mrb[0].mxu0 %v871
    %v911 = vpop.f32.mrb[0].mxu0
    %v912 = vadd.f32 0.0, %v911
    %v913 = vpop.f32.mrb[0].mxu0
    %v914 = vpop.f32.mrb[0].mxu0
    %v915 = vpop.f32.mrb[0].mxu0
    %916 = vdwg.mxu0
    %917 = vrot.lane.b32.xlu0 %v228, 64
    %v918 = vpop.permute.xlu0 %917
    %v920 = vsel %vm238, %v861, 0
    %v923 = vsel %vm873, %v918, 0
    %925 = vmatprep.subr.bf16.mxu0 0
    %926 = vmatpush1.bf16.msra.mxu0 %v923
    %927 = vmatprep.subr.bf16.mxu0 0
    %928 = vmatpush1.bf16.msra.mxu0 0
    %929 = vmatprep.subr.bf16.mxu0 0
    %930 = vmatpush1.bf16.msra.mxu0 0
    %931 = vmatprep.subr.bf16.mxu0 0
    %932 = vmatpush1.bf16.msra.mxu0 0
    %933 = vmatprep.subr.bf16.mxu0 0
    %934 = vmatpush1.bf16.msra.mxu0 0
    %935 = vmatprep.subr.bf16.mxu0 0
    %936 = vmatpush1.bf16.msra.mxu0 0
    %937 = vmatprep.subr.bf16.mxu0 0
    %938 = vmatpush1.bf16.msra.mxu0 0
    %939 = vmatprep.subr.bf16.mxu0 0
    %940 = vmatpush1.bf16.msra.mxu0 0
    %941 = vmatprep.subr.bf16.mxu0 0
    %942 = vmatpush1.bf16.msra.mxu0 0
    %943 = vmatprep.subr.bf16.mxu0 0
    %944 = vmatpush1.bf16.msra.mxu0 0
    %945 = vmatprep.subr.bf16.mxu0 0
    %946 = vmatpush1.bf16.msra.mxu0 0
    %947 = vmatprep.subr.bf16.mxu0 0
    %948 = vmatpush1.bf16.msra.mxu0 0
    %949 = vmatprep.subr.bf16.mxu0 0
    %950 = vmatpush1.bf16.msra.mxu0 0
    %951 = vmatprep.subr.bf16.mxu0 0
    %952 = vmatpush1.bf16.msra.mxu0 0
    %953 = vmatprep.subr.bf16.mxu0 0
    %954 = vmatpush1.bf16.msra.mxu0 0
    %955 = vmatprep.subr.bf16.mxu0 0
    %956 = vmatpush1.bf16.msra.mxu0 0
    %957 = vmatprep.mubr.bf16.mxu0 0
    %958 = vmatmul.mubr.bf16.gmra.mrb[0].mxu0 %v920
    %v959 = vpop.f32.mrb[0].mxu0
    %v960 = vadd.f32 0.0, %v959
    %v961 = vpop.f32.mrb[0].mxu0
    %v962 = vpop.f32.mrb[0].mxu0
    %v963 = vpop.f32.mrb[0].mxu0
    %964 = vdwg.mxu0
    %965 = vrot.lane.b32.xlu0 %v229, 64
    %v966 = vpop.permute.xlu0 %965
    %v968 = vsel %vm238, %v862, 0
    %v971 = vsel %vm873, %v966, 0
    %973 = vmatprep.subr.bf16.mxu0 0
    %974 = vmatpush1.bf16.msra.mxu0 %v971
    %975 = vmatprep.subr.bf16.mxu0 0
    %976 = vmatpush1.bf16.msra.mxu0 0
    %977 = vmatprep.subr.bf16.mxu0 0
    %978 = vmatpush1.bf16.msra.mxu0 0
    %979 = vmatprep.subr.bf16.mxu0 0
    %980 = vmatpush1.bf16.msra.mxu0 0
    %981 = vmatprep.subr.bf16.mxu0 0
    %982 = vmatpush1.bf16.msra.mxu0 0
    %983 = vmatprep.subr.bf16.mxu0 0
    %984 = vmatpush1.bf16.msra.mxu0 0
    %985 = vmatprep.subr.bf16.mxu0 0
    %986 = vmatpush1.bf16.msra.mxu0 0
    %987 = vmatprep.subr.bf16.mxu0 0
    %988 = vmatpush1.bf16.msra.mxu0 0
    %989 = vmatprep.subr.bf16.mxu0 0
    %990 = vmatpush1.bf16.msra.mxu0 0
    %991 = vmatprep.subr.bf16.mxu0 0
    %992 = vmatpush1.bf16.msra.mxu0 0
    %993 = vmatprep.subr.bf16.mxu0 0
    %994 = vmatpush1.bf16.msra.mxu0 0
    %995 = vmatprep.subr.bf16.mxu0 0
    %996 = vmatpush1.bf16.msra.mxu0 0
    %997 = vmatprep.subr.bf16.mxu0 0
    %998 = vmatpush1.bf16.msra.mxu0 0
    %999 = vmatprep.subr.bf16.mxu0 0
    %1000 = vmatpush1.bf16.msra.mxu0 0
    %1001 = vmatprep.subr.bf16.mxu0 0
    %1002 = vmatpush1.bf16.msra.mxu0 0
    %1003 = vmatprep.subr.bf16.mxu0 0
    %1004 = vmatpush1.bf16.msra.mxu0 0
    %1005 = vmatprep.mubr.bf16.mxu0 0
    %1006 = vmatmul.mubr.bf16.gmra.mrb[0].mxu0 %v968
    %v1007 = vpop.f32.mrb[0].mxu0
    %v1008 = vadd.f32 0.0, %v1007
    %v1009 = vpop.f32.mrb[0].mxu0
    %v1010 = vpop.f32.mrb[0].mxu0
    %v1011 = vpop.f32.mrb[0].mxu0
    %1012 = vdwg.mxu0
    %1013 = vrot.lane.b32.xlu0 %v230, 64
    %v1014 = vpop.permute.xlu0 %1013
    %v1016 = vsel %vm238, %v863, 0
    %v1019 = vsel %vm873, %v1014, 0
    %1021 = vmatprep.subr.bf16.mxu0 0
    %1022 = vmatpush1.bf16.msra.mxu0 %v1019
    %1023 = vmatprep.subr.bf16.mxu0 0
    %1024 = vmatpush1.bf16.msra.mxu0 0
    %1025 = vmatprep.subr.bf16.mxu0 0
    %1026 = vmatpush1.bf16.msra.mxu0 0
    %1027 = vmatprep.subr.bf16.mxu0 0
    %1028 = vmatpush1.bf16.msra.mxu0 0
    %1029 = vmatprep.subr.bf16.mxu0 0
    %1030 = vmatpush1.bf16.msra.mxu0 0
    %1031 = vmatprep.subr.bf16.mxu0 0
    %1032 = vmatpush1.bf16.msra.mxu0 0
    %1033 = vmatprep.subr.bf16.mxu0 0
    %1034 = vmatpush1.bf16.msra.mxu0 0
    %1035 = vmatprep.subr.bf16.mxu0 0
    %1036 = vmatpush1.bf16.msra.mxu0 0
    %1037 = vmatprep.subr.bf16.mxu0 0
    %1038 = vmatpush1.bf16.msra.mxu0 0
    %1039 = vmatprep.subr.bf16.mxu0 0
    %1040 = vmatpush1.bf16.msra.mxu0 0
    %1041 = vmatprep.subr.bf16.mxu0 0
    %1042 = vmatpush1.bf16.msra.mxu0 0
    %1043 = vmatprep.subr.bf16.mxu0 0
    %1044 = vmatpush1.bf16.msra.mxu0 0
    %1045 = vmatprep.subr.bf16.mxu0 0
    %1046 = vmatpush1.bf16.msra.mxu0 0
    %1047 = vmatprep.subr.bf16.mxu0 0
    %1048 = vmatpush1.bf16.msra.mxu0 0
    %1049 = vmatprep.subr.bf16.mxu0 0
    %1050 = vmatpush1.bf16.msra.mxu0 0
    %1051 = vmatprep.subr.bf16.mxu0 0
    %1052 = vmatpush1.bf16.msra.mxu0 0
    %1053 = vmatprep.mubr.bf16.mxu0 0
    %1054 = vmatmul.mubr.bf16.gmra.mrb[0].mxu0 %v1016
    %v1055 = vpop.f32.mrb[0].mxu0
    %v1056 = vadd.f32 0.0, %v1055
    %v1057 = vpop.f32.mrb[0].mxu0
    %v1058 = vpop.f32.mrb[0].mxu0
    %v1059 = vpop.f32.mrb[0].mxu0
    %1060 = vdwg.mxu0
    %1061 = vrot.lane.b32.xlu0 %v231, 64
    %v1062 = vpop.permute.xlu0 %1061
    %v1064 = vsel %vm238, %v864, 0
    %v1067 = vsel %vm873, %v1062, 0
    %1069 = vmatprep.subr.bf16.mxu0 0
    %1070 = vmatpush1.bf16.msra.mxu0 %v1067
    %1071 = vmatprep.subr.bf16.mxu0 0
    %1072 = vmatpush1.bf16.msra.mxu0 0
    %1073 = vmatprep.subr.bf16.mxu0 0
    %1074 = vmatpush1.bf16.msra.mxu0 0
    %1075 = vmatprep.subr.bf16.mxu0 0
    %1076 = vmatpush1.bf16.msra.mxu0 0
    %1077 = vmatprep.subr.bf16.mxu0 0
    %1078 = vmatpush1.bf16.msra.mxu0 0
    %1079 = vmatprep.subr.bf16.mxu0 0
    %1080 = vmatpush1.bf16.msra.mxu0 0
    %1081 = vmatprep.subr.bf16.mxu0 0
    %1082 = vmatpush1.bf16.msra.mxu0 0
    %1083 = vmatprep.subr.bf16.mxu0 0
    %1084 = vmatpush1.bf16.msra.mxu0 0
    %1085 = vmatprep.subr.bf16.mxu0 0
    %1086 = vmatpush1.bf16.msra.mxu0 0
    %1087 = vmatprep.subr.bf16.mxu0 0
    %1088 = vmatpush1.bf16.msra.mxu0 0
    %1089 = vmatprep.subr.bf16.mxu0 0
    %1090 = vmatpush1.bf16.msra.mxu0 0
    %1091 = vmatprep.subr.bf16.mxu0 0
    %1092 = vmatpush1.bf16.msra.mxu0 0
    %1093 = vmatprep.subr.bf16.mxu0 0
    %1094 = vmatpush1.bf16.msra.mxu0 0
    %1095 = vmatprep.subr.bf16.mxu0 0
    %1096 = vmatpush1.bf16.msra.mxu0 0
    %1097 = vmatprep.subr.bf16.mxu0 0
    %1098 = vmatpush1.bf16.msra.mxu0 0
    %1099 = vmatprep.subr.bf16.mxu0 0
    %1100 = vmatpush1.bf16.msra.mxu0 0
    %1101 = vmatprep.mubr.bf16.mxu0 0
    %1102 = vmatmul.mubr.bf16.gmra.mrb[0].mxu0 %v1064
    %v1103 = vpop.f32.mrb[0].mxu0
    %v1104 = vadd.f32 0.0, %v1103
    %v1105 = vpop.f32.mrb[0].mxu0
    %v1106 = vpop.f32.mrb[0].mxu0
    %v1107 = vpop.f32.mrb[0].mxu0
    %1108 = vdwg.mxu0
    %1109 = vrot.lane.b32.xlu0 %v232, 64
    %v1110 = vpop.permute.xlu0 %1109
    %v1112 = vsel %vm238, %v865, 0
    %v1115 = vsel %vm873, %v1110, 0
    %1117 = vmatprep.subr.bf16.mxu0 0
    %1118 = vmatpush1.bf16.msra.mxu0 %v1115
    %1119 = vmatprep.subr.bf16.mxu0 0
    %1120 = vmatpush1.bf16.msra.mxu0 0
    %1121 = vmatprep.subr.bf16.mxu0 0
    %1122 = vmatpush1.bf16.msra.mxu0 0
    %1123 = vmatprep.subr.bf16.mxu0 0
    %1124 = vmatpush1.bf16.msra.mxu0 0
    %1125 = vmatprep.subr.bf16.mxu0 0
    %1126 = vmatpush1.bf16.msra.mxu0 0
    %1127 = vmatprep.subr.bf16.mxu0 0
    %1128 = vmatpush1.bf16.msra.mxu0 0
    %1129 = vmatprep.subr.bf16.mxu0 0
    %1130 = vmatpush1.bf16.msra.mxu0 0
    %1131 = vmatprep.subr.bf16.mxu0 0
    %1132 = vmatpush1.bf16.msra.mxu0 0
    %1133 = vmatprep.subr.bf16.mxu0 0
    %1134 = vmatpush1.bf16.msra.mxu0 0
    %1135 = vmatprep.subr.bf16.mxu0 0
    %1136 = vmatpush1.bf16.msra.mxu0 0
    %1137 = vmatprep.subr.bf16.mxu0 0
    %1138 = vmatpush1.bf16.msra.mxu0 0
    %1139 = vmatprep.subr.bf16.mxu0 0
    %1140 = vmatpush1.bf16.msra.mxu0 0
    %1141 = vmatprep.subr.bf16.mxu0 0
    %1142 = vmatpush1.bf16.msra.mxu0 0
    %1143 = vmatprep.subr.bf16.mxu0 0
    %1144 = vmatpush1.bf16.msra.mxu0 0
    %1145 = vmatprep.subr.bf16.mxu0 0
    %1146 = vmatpush1.bf16.msra.mxu0 0
    %1147 = vmatprep.subr.bf16.mxu0 0
    %1148 = vmatpush1.bf16.msra.mxu0 0
    %1149 = vmatprep.mubr.bf16.mxu0 0
    %1150 = vmatmul.mubr.bf16.gmra.mrb[0].mxu0 %v1112
    %v1151 = vpop.f32.mrb[0].mxu0
    %v1152 = vadd.f32 0.0, %v1151
    %v1153 = vpop.f32.mrb[0].mxu0
    %v1154 = vpop.f32.mrb[0].mxu0
    %v1155 = vpop.f32.mrb[0].mxu0
    %1156 = vdwg.mxu0
    %1157 = vrot.lane.b32.xlu0 %v233, 64
    %v1158 = vpop.permute.xlu0 %1157
    %v1160 = vsel %vm238, %v866, 0
    %v1163 = vsel %vm873, %v1158, 0
    %1165 = vmatprep.subr.bf16.mxu0 0
    %1166 = vmatpush1.bf16.msra.mxu0 %v1163
    %1167 = vmatprep.subr.bf16.mxu0 0
    %1168 = vmatpush1.bf16.msra.mxu0 0
    %1169 = vmatprep.subr.bf16.mxu0 0
    %1170 = vmatpush1.bf16.msra.mxu0 0
    %1171 = vmatprep.subr.bf16.mxu0 0
    %1172 = vmatpush1.bf16.msra.mxu0 0
    %1173 = vmatprep.subr.bf16.mxu0 0
    %1174 = vmatpush1.bf16.msra.mxu0 0
    %1175 = vmatprep.subr.bf16.mxu0 0
    %1176 = vmatpush1.bf16.msra.mxu0 0
    %1177 = vmatprep.subr.bf16.mxu0 0
    %1178 = vmatpush1.bf16.msra.mxu0 0
    %1179 = vmatprep.subr.bf16.mxu0 0
    %1180 = vmatpush1.bf16.msra.mxu0 0
    %1181 = vmatprep.subr.bf16.mxu0 0
    %1182 = vmatpush1.bf16.msra.mxu0 0
    %1183 = vmatprep.subr.bf16.mxu0 0
    %1184 = vmatpush1.bf16.msra.mxu0 0
    %1185 = vmatprep.subr.bf16.mxu0 0
    %1186 = vmatpush1.bf16.msra.mxu0 0
    %1187 = vmatprep.subr.bf16.mxu0 0
    %1188 = vmatpush1.bf16.msra.mxu0 0
    %1189 = vmatprep.subr.bf16.mxu0 0
    %1190 = vmatpush1.bf16.msra.mxu0 0
    %1191 = vmatprep.subr.bf16.mxu0 0
    %1192 = vmatpush1.bf16.msra.mxu0 0
    %1193 = vmatprep.subr.bf16.mxu0 0
    %1194 = vmatpush1.bf16.msra.mxu0 0
    %1195 = vmatprep.subr.bf16.mxu0 0
    %1196 = vmatpush1.bf16.msra.mxu0 0
    %1197 = vmatprep.mubr.bf16.mxu0 0
    %1198 = vmatmul.mubr.bf16.gmra.mrb[0].mxu0 %v1160
    %v1199 = vpop.f32.mrb[0].mxu0
    %v1200 = vadd.f32 0.0, %v1199
    %v1201 = vpop.f32.mrb[0].mxu0
    %v1202 = vpop.f32.mrb[0].mxu0
    %v1203 = vpop.f32.mrb[0].mxu0
    %1204 = vdwg.mxu0
    %1205 = vrot.lane.b32.xlu0 %v234, 64
    %v1206 = vpop.permute.xlu0 %1205
    %v1208 = vsel %vm238, %v867, 0
    %v1211 = vsel %vm873, %v1206, 0
    %1213 = vmatprep.subr.bf16.mxu0 0
    %1214 = vmatpush1.bf16.msra.mxu0 %v1211
    %1215 = vmatprep.subr.bf16.mxu0 0
    %1216 = vmatpush1.bf16.msra.mxu0 0
    %1217 = vmatprep.subr.bf16.mxu0 0
    %1218 = vmatpush1.bf16.msra.mxu0 0
    %1219 = vmatprep.subr.bf16.mxu0 0
    %1220 = vmatpush1.bf16.msra.mxu0 0
    %1221 = vmatprep.subr.bf16.mxu0 0
    %1222 = vmatpush1.bf16.msra.mxu0 0
    %1223 = vmatprep.subr.bf16.mxu0 0
    %1224 = vmatpush1.bf16.msra.mxu0 0
    %1225 = vmatprep.subr.bf16.mxu0 0
    %1226 = vmatpush1.bf16.msra.mxu0 0
    %1227 = vmatprep.subr.bf16.mxu0 0
    %1228 = vmatpush1.bf16.msra.mxu0 0
    %1229 = vmatprep.subr.bf16.mxu0 0
    %1230 = vmatpush1.bf16.msra.mxu0 0
    %1231 = vmatprep.subr.bf16.mxu0 0
    %1232 = vmatpush1.bf16.msra.mxu0 0
    %1233 = vmatprep.subr.bf16.mxu0 0
    %1234 = vmatpush1.bf16.msra.mxu0 0
    %1235 = vmatprep.subr.bf16.mxu0 0
    %1236 = vmatpush1.bf16.msra.mxu0 0
    %1237 = vmatprep.subr.bf16.mxu0 0
    %1238 = vmatpush1.bf16.msra.mxu0 0
    %1239 = vmatprep.subr.bf16.mxu0 0
    %1240 = vmatpush1.bf16.msra.mxu0 0
    %1241 = vmatprep.subr.bf16.mxu0 0
    %1242 = vmatpush1.bf16.msra.mxu0 0
    %1243 = vmatprep.subr.bf16.mxu0 0
    %1244 = vmatpush1.bf16.msra.mxu0 0
    %1245 = vmatprep.mubr.bf16.mxu0 0
    %1246 = vmatmul.mubr.bf16.gmra.mrb[0].mxu0 %v1208
    %v1247 = vpop.f32.mrb[0].mxu0
    %v1248 = vadd.f32 0.0, %v1247
    %v1249 = vpop.f32.mrb[0].mxu0
    %v1250 = vpop.f32.mrb[0].mxu0
    %v1251 = vpop.f32.mrb[0].mxu0
    %1252 = vdwg.mxu0
    %v1253 = vpack.c.bf16 %v960, %v912
    %v1254 = vld [vmem:[%s6] sm:$0xf]
    %v1255 = vpack.c.bf16 %v1056, %v1008
    %s1256 = scalar_lea.vmem %s6, 4
    %v1257 = vld [vmem:[%s1256] sm:$0xf]
    %v1259 = vsel %vm238, %v1255, 0
    %v1262 = vsel %vm873, %v1257, 0
    %1264 = vmatprep.subr.bf16.mxu0 0
    %1265 = vmatpush1.bf16.msra.mxu0 %v1262
    %1266 = vmatprep.subr.bf16.mxu0 0
    %1267 = vmatpush1.bf16.msra.mxu0 0
    %1268 = vmatprep.subr.bf16.mxu0 0
    %1269 = vmatpush1.bf16.msra.mxu0 0
    %1270 = vmatprep.subr.bf16.mxu0 0
    %1271 = vmatpush1.bf16.msra.mxu0 0
    %1272 = vmatprep.subr.bf16.mxu0 0
    %1273 = vmatpush1.bf16.msra.mxu0 0
    %1274 = vmatprep.subr.bf16.mxu0 0
    %1275 = vmatpush1.bf16.msra.mxu0 0
    %1276 = vmatprep.subr.bf16.mxu0 0
    %1277 = vmatpush1.bf16.msra.mxu0 0
    %1278 = vmatprep.subr.bf16.mxu0 0
    %1279 = vmatpush1.bf16.msra.mxu0 0
    %1280 = vmatprep.subr.bf16.mxu0 0
    %1281 = vmatpush1.bf16.msra.mxu0 0
    %1282 = vmatprep.subr.bf16.mxu0 0
    %1283 = vmatpush1.bf16.msra.mxu0 0
    %1284 = vmatprep.subr.bf16.mxu0 0
    %1285 = vmatpush1.bf16.msra.mxu0 0
    %1286 = vmatprep.subr.bf16.mxu0 0
    %1287 = vmatpush1.bf16.msra.mxu0 0
    %1288 = vmatprep.subr.bf16.mxu0 0
    %1289 = vmatpush1.bf16.msra.mxu0 0
    %1290 = vmatprep.subr.bf16.mxu0 0
    %1291 = vmatpush1.bf16.msra.mxu0 0
    %1292 = vmatprep.subr.bf16.mxu0 0
    %1293 = vmatpush1.bf16.msra.mxu0 0
    %1294 = vmatprep.subr.bf16.mxu0 0
    %1295 = vmatpush1.bf16.msra.mxu0 0
    %1296 = vmatprep.mubr.bf16.mxu0 0
    %1297 = vmatmul.mubr.bf16.gmra.mrb[0].mxu0 %v1259
    %v1298 = vpop.f32.mrb[0].mxu0
    %v1299 = vadd.f32 0.0, %v1298
    %v1300 = vpop.f32.mrb[0].mxu0
    %v1301 = vpop.f32.mrb[0].mxu0
    %v1302 = vadd.f32 0.0, %v1301
    %v1303 = vpop.f32.mrb[0].mxu0
    %1304 = vdwg.mxu0
    %v1306 = vsel %vm238, %v1253, 0
    %v1309 = vsel %vm873, %v1254, 0
    %1311 = vmatprep.subr.bf16.mxu0 0
    %1312 = vmatpush1.bf16.msra.mxu0 %v1309
    %1313 = vmatprep.subr.bf16.mxu0 0
    %1314 = vmatpush1.bf16.msra.mxu0 0
    %1315 = vmatprep.subr.bf16.mxu0 0
    %1316 = vmatpush1.bf16.msra.mxu0 0
    %1317 = vmatprep.subr.bf16.mxu0 0
    %1318 = vmatpush1.bf16.msra.mxu0 0
    %1319 = vmatprep.subr.bf16.mxu0 0
    %1320 = vmatpush1.bf16.msra.mxu0 0
    %1321 = vmatprep.subr.bf16.mxu0 0
    %1322 = vmatpush1.bf16.msra.mxu0 0
    %1323 = vmatprep.subr.bf16.mxu0 0
    %1324 = vmatpush1.bf16.msra.mxu0 0
    %1325 = vmatprep.subr.bf16.mxu0 0
    %1326 = vmatpush1.bf16.msra.mxu0 0
    %1327 = vmatprep.subr.bf16.mxu0 0
    %1328 = vmatpush1.bf16.msra.mxu0 0
    %1329 = vmatprep.subr.bf16.mxu0 0
    %1330 = vmatpush1.bf16.msra.mxu0 0
    %1331 = vmatprep.subr.bf16.mxu0 0
    %1332 = vmatpush1.bf16.msra.mxu0 0
    %1333 = vmatprep.subr.bf16.mxu0 0
    %1334 = vmatpush1.bf16.msra.mxu0 0
    %1335 = vmatprep.subr.bf16.mxu0 0
    %1336 = vmatpush1.bf16.msra.mxu0 0
    %1337 = vmatprep.subr.bf16.mxu0 0
    %1338 = vmatpush1.bf16.msra.mxu0 0
    %1339 = vmatprep.subr.bf16.mxu0 0
    %1340 = vmatpush1.bf16.msra.mxu0 0
    %1341 = vmatprep.subr.bf16.mxu0 0
    %1342 = vmatpush1.bf16.msra.mxu0 0
    %1343 = vmatprep.mubr.bf16.mxu0 0
    %1344 = vmatmul.mubr.bf16.gmra.mrb[0].mxu0 %v1306
    %v1345 = vpop.f32.mrb[0].mxu0
    %v1346 = vadd.f32 %v1299, %v1345
    %v1347 = vpop.f32.mrb[0].mxu0
    %v1348 = vpop.f32.mrb[0].mxu0
    %v1349 = vadd.f32 %v1302, %v1348
    %v1350 = vpop.f32.mrb[0].mxu0
    %1351 = vdwg.mxu0
    %v1352 = vpack.c.bf16 %v1152, %v1104
    %s1353 = scalar_lea.vmem %s6, 8
    %v1354 = vld [vmem:[%s1353] sm:$0xf]
    %v1356 = vsel %vm238, %v1352, 0
    %v1359 = vsel %vm873, %v1354, 0
    %1361 = vmatprep.subr.bf16.mxu0 0
    %1362 = vmatpush1.bf16.msra.mxu0 %v1359
    %1363 = vmatprep.subr.bf16.mxu0 0
    %1364 = vmatpush1.bf16.msra.mxu0 0
    %1365 = vmatprep.subr.bf16.mxu0 0
    %1366 = vmatpush1.bf16.msra.mxu0 0
    %1367 = vmatprep.subr.bf16.mxu0 0
    %1368 = vmatpush1.bf16.msra.mxu0 0
    %1369 = vmatprep.subr.bf16.mxu0 0
    %1370 = vmatpush1.bf16.msra.mxu0 0
    %1371 = vmatprep.subr.bf16.mxu0 0
    %1372 = vmatpush1.bf16.msra.mxu0 0
    %1373 = vmatprep.subr.bf16.mxu0 0
    %1374 = vmatpush1.bf16.msra.mxu0 0
    %1375 = vmatprep.subr.bf16.mxu0 0
    %1376 = vmatpush1.bf16.msra.mxu0 0
    %1377 = vmatprep.subr.bf16.mxu0 0
    %1378 = vmatpush1.bf16.msra.mxu0 0
    %1379 = vmatprep.subr.bf16.mxu0 0
    %1380 = vmatpush1.bf16.msra.mxu0 0
    %1381 = vmatprep.subr.bf16.mxu0 0
    %1382 = vmatpush1.bf16.msra.mxu0 0
    %1383 = vmatprep.subr.bf16.mxu0 0
    %1384 = vmatpush1.bf16.msra.mxu0 0
    %1385 = vmatprep.subr.bf16.mxu0 0
    %1386 = vmatpush1.bf16.msra.mxu0 0
    %1387 = vmatprep.subr.bf16.mxu0 0
    %1388 = vmatpush1.bf16.msra.mxu0 0
    %1389 = vmatprep.subr.bf16.mxu0 0
    %1390 = vmatpush1.bf16.msra.mxu0 0
    %1391 = vmatprep.subr.bf16.mxu0 0
    %1392 = vmatpush1.bf16.msra.mxu0 0
    %1393 = vmatprep.mubr.bf16.mxu0 0
    %1394 = vmatmul.mubr.bf16.gmra.mrb[0].mxu0 %v1356
    %v1395 = vpop.f32.mrb[0].mxu0
    %v1396 = vadd.f32 0.0, %v1395
    %v1397 = vpop.f32.mrb[0].mxu0
    %v1398 = vpop.f32.mrb[0].mxu0
    %v1399 = vadd.f32 0.0, %v1398
    %v1400 = vpop.f32.mrb[0].mxu0
    %1401 = vdwg.mxu0
    %v1402 = vadd.f32 %v1346, %v1396
    %v1403 = vadd.f32 %v1349, %v1399
    %v1404 = vpack.c.bf16 %v1248, %v1200
    %s1405 = scalar_lea.vmem %s6, 12
    %v1406 = vld [vmem:[%s1405] sm:$0xf]
    %v1408 = vsel %vm238, %v1404, 0
    %v1411 = vsel %vm873, %v1406, 0
    %1413 = vmatprep.subr.bf16.mxu0 0
    %1414 = vmatpush1.bf16.msra.mxu0 %v1411
    %1415 = vmatprep.subr.bf16.mxu0 0
    %1416 = vmatpush1.bf16.msra.mxu0 0
    %1417 = vmatprep.subr.bf16.mxu0 0
    %1418 = vmatpush1.bf16.msra.mxu0 0
    %1419 = vmatprep.subr.bf16.mxu0 0
    %1420 = vmatpush1.bf16.msra.mxu0 0
    %1421 = vmatprep.subr.bf16.mxu0 0
    %1422 = vmatpush1.bf16.msra.mxu0 0
    %1423 = vmatprep.subr.bf16.mxu0 0
    %1424 = vmatpush1.bf16.msra.mxu0 0
    %1425 = vmatprep.subr.bf16.mxu0 0
    %1426 = vmatpush1.bf16.msra.mxu0 0
    %1427 = vmatprep.subr.bf16.mxu0 0
    %1428 = vmatpush1.bf16.msra.mxu0 0
    %1429 = vmatprep.subr.bf16.mxu0 0
    %1430 = vmatpush1.bf16.msra.mxu0 0
    %1431 = vmatprep.subr.bf16.mxu0 0
    %1432 = vmatpush1.bf16.msra.mxu0 0
    %1433 = vmatprep.subr.bf16.mxu0 0
    %1434 = vmatpush1.bf16.msra.mxu0 0
    %1435 = vmatprep.subr.bf16.mxu0 0
    %1436 = vmatpush1.bf16.msra.mxu0 0
    %1437 = vmatprep.subr.bf16.mxu0 0
    %1438 = vmatpush1.bf16.msra.mxu0 0
    %1439 = vmatprep.subr.bf16.mxu0 0
    %1440 = vmatpush1.bf16.msra.mxu0 0
    %1441 = vmatprep.subr.bf16.mxu0 0
    %1442 = vmatpush1.bf16.msra.mxu0 0
    %1443 = vmatprep.subr.bf16.mxu0 0
    %1444 = vmatpush1.bf16.msra.mxu0 0
    %1445 = vmatprep.mubr.bf16.mxu0 0
    %1446 = vmatmul.mubr.bf16.gmra.mrb[0].mxu0 %v1408
    %v1447 = vpop.f32.mrb[0].mxu0
    %v1448 = vadd.f32 0.0, %v1447
    %v1449 = vpop.f32.mrb[0].mxu0
    %v1450 = vpop.f32.mrb[0].mxu0
    %v1451 = vadd.f32 0.0, %v1450
    %v1452 = vpop.f32.mrb[0].mxu0
    %1453 = vdwg.mxu0
    %v1454 = vadd.f32 %v1402, %v1448
    %v1455 = vadd.f32 %v1403, %v1451
    %v1456 = vadd.f32 %v91, %v1454
    %v1457 = vadd.f32 %v92, %v1455
    %v1458 = vld [vmem:[%s7] sm:$0x1]
    %v1460 = vlaneseq
    %v1461 = vshrl.u32 %v1460, 7
    %v1462 = vsub.s32 0, %v1461
    %v1463 = vrot.slane %v1458, %v1462
    %v1465 = vadd.f32 %v1456, %v1463
    %v1466 = vadd.f32 %v1457, %v1463
    %v1467 = vld [vmem:[%s8] sm:$0x1]
    %v1468 = vld [vmem:[%s9] sm:$0x1]
    %v1469 = vsel %vm95, %v1465, 0.0
    %1470 = vadd.xlane.f32.xlu0 %v1469
    %v1471 = vpop.xlane.xlu0 %1470
    %v1472 = vsel %vm95, %v1466, 0.0
    %1473 = vadd.xlane.f32.xlu0 %v1472
    %v1474 = vpop.xlane.xlu0 %1473
    %v1475 = vmul.f32 %v1471, %v102
    %v1476 = vmul.f32 %v1474, %v102
    %v1477 = vsub.f32 %v1465, %v1475
    %v1478 = vsub.f32 %v1466, %v1476
    %v1479 = vmul.f32 %v1477, %v1477
    %v1480 = vmul.f32 %v1478, %v1478
    %v1481 = vsel %vm95, %v1479, 0.0
    %1482 = vadd.xlane.f32.xlu0 %v1481
    %v1483 = vpop.xlane.xlu0 %1482
    %v1484 = vsel %vm95, %v1480, 0.0
    %1485 = vadd.xlane.f32.xlu0 %v1484
    %v1486 = vpop.xlane.xlu0 %1485
    %v1487 = vmul.f32 %v1483, %v102
    %v1488 = vmul.f32 %v1486, %v102
    %v1489 = vadd.f32 %v1487, 1e-05
    %v1490 = vadd.f32 %v1488, 1e-05
    %v1491 = vrsqrt.pop %v1489
    %v1492 = vrsqrt.pop %v1490
    %v1493 = vmul.f32 %v1477, %v1491
    %v1494 = vmul.f32 %v1478, %v1492
    %v1496 = vlaneseq
    %v1497 = vshrl.u32 %v1496, 7
    %v1498 = vsub.s32 0, %v1497
    %v1499 = vrot.slane %v1467, %v1498
    %v1501 = vmul.f32 %v1493, %v1499
    %v1502 = vmul.f32 %v1494, %v1499
    %v1504 = vlaneseq
    %v1505 = vshrl.u32 %v1504, 7
    %v1506 = vsub.s32 0, %v1505
    %v1507 = vrot.slane %v1468, %v1506
    %v1509 = vadd.f32 %v1501, %v1507
    %v1510 = vadd.f32 %v1502, %v1507
    %v1511 = vpack.c.bf16 %v1510, %v1509
    %v1512 = vld [vmem:[%s10] sm:$0xf]
    %v1513 = vld [vmem:[%s10 + $0x4] sm:$0xf]
    %v1514 = vld [vmem:[%s10 + $0x8] sm:$0xf]
    %v1515 = vld [vmem:[%s10 + $0xc] sm:$0xf]
    %v1516 = vld [vmem:[#allocation7] sm:$0x1]
    %v1518 = vlaneseq
    %v1519 = vshrl.u32 %v1518, 7
    %v1520 = vsub.s32 0, %v1519
    %v1521 = vrot.slane %v1516, %v1520
    %v1527 = vunpack.c.l.b16 %v1512
    %v1528 = vunpack.c.l.b16 %v1513
    %v1529 = vunpack.c.l.b16 %v1514
    %v1530 = vunpack.c.l.b16 %v1515
    %v1531 = vpack.c.b16 %v1528, %v1527
    %v1532 = vpack.c.b16 %v1530, %v1529
    %v1536 = vsel %vm95, %v1511, 0
    %1538 = vmatprep.subr.bf16.mxu0 0
    %1539 = vmatpush1.bf16.msra.mxu0 %v1531
    %1540 = vmatprep.subr.bf16.mxu0 0
    %1541 = vmatpush1.bf16.msra.mxu0 %v1532
    %1542 = vmatprep.subr.bf16.mxu0 0
    %1543 = vmatpush1.bf16.msra.mxu0 0
    %1544 = vmatprep.subr.bf16.mxu0 0
    %1545 = vmatpush1.bf16.msra.mxu0 0
    %1546 = vmatprep.subr.bf16.mxu0 0
    %1547 = vmatpush1.bf16.msra.mxu0 0
    %1548 = vmatprep.subr.bf16.mxu0 0
    %1549 = vmatpush1.bf16.msra.mxu0 0
    %1550 = vmatprep.subr.bf16.mxu0 0
    %1551 = vmatpush1.bf16.msra.mxu0 0
    %1552 = vmatprep.subr.bf16.mxu0 0
    %1553 = vmatpush1.bf16.msra.mxu0 0
    %1554 = vmatprep.subr.bf16.mxu0 0
    %1555 = vmatpush1.bf16.msra.mxu0 0
    %1556 = vmatprep.subr.bf16.mxu0 0
    %1557 = vmatpush1.bf16.msra.mxu0 0
    %1558 = vmatprep.subr.bf16.mxu0 0
    %1559 = vmatpush1.bf16.msra.mxu0 0
    %1560 = vmatprep.subr.bf16.mxu0 0
    %1561 = vmatpush1.bf16.msra.mxu0 0
    %1562 = vmatprep.subr.bf16.mxu0 0
    %1563 = vmatpush1.bf16.msra.mxu0 0
    %1564 = vmatprep.subr.bf16.mxu0 0
    %1565 = vmatpush1.bf16.msra.mxu0 0
    %1566 = vmatprep.subr.bf16.mxu0 0
    %1567 = vmatpush1.bf16.msra.mxu0 0
    %1568 = vmatprep.subr.bf16.mxu0 0
    %1569 = vmatpush1.bf16.msra.mxu0 0
    %1570 = vmatprep.mubr.bf16.mxu0 0
    %1571 = vmatmul.mubr.bf16.gmra.mrb[0].mxu0 %v1536
    %v1572 = vpop.f32.mrb[0].mxu0
    %v1573 = vadd.f32 %v1521, %v1572
    %v1574 = vpop.f32.mrb[0].mxu0
    %v1575 = vpop.f32.mrb[0].mxu0
    %v1576 = vadd.f32 %v1521, %v1575
    %v1577 = vpop.f32.mrb[0].mxu0
    %1578 = vdwg.mxu0
    %v1579 = vmul.f32 %v1573, 0.5
    %v1580 = vmul.f32 %v1576, 0.5
    %v1581 = vmul.f32 %v1573, 0.044715
    %v1582 = vmul.f32 %v1576, 0.044715
    %v1583 = vmul.f32 %v1581, %v1573
    %v1584 = vmul.f32 %v1582, %v1576
    %v1585 = vmul.f32 %v1583, %v1573
    %v1586 = vmul.f32 %v1584, %v1576
    %v1587 = vadd.f32 %v1573, %v1585
    %v1588 = vadd.f32 %v1576, %v1586
    %v1589 = vmul.f32 %v1587, 0.7978846
    %v1590 = vmul.f32 %v1588, 0.7978846
    %v1591 = vtanh.pop %v1589
    %v1592 = vtanh.pop %v1590
    %v1593 = vadd.f32 %v1591, 1.0
    %v1594 = vadd.f32 %v1592, 1.0
    %v1595 = vmul.f32 %v1579, %v1593
    %v1596 = vmul.f32 %v1580, %v1594
    %v1597 = vpack.c.bf16 %v1596, %v1595
    %v1598 = vld [vmem:[%s12] sm:$0xf]
    %v1599 = vld [vmem:[%s12 + $0x4] sm:$0xf]
    %v1600 = vld [vmem:[%s12 + $0x8] sm:$0xf]
    %v1601 = vld [vmem:[%s12 + $0xc] sm:$0xf]
    %v1602 = vld [vmem:[%s12 + $0x10] sm:$0xf]
    %v1603 = vld [vmem:[%s12 + $0x14] sm:$0xf]
    %v1604 = vld [vmem:[%s12 + $0x18] sm:$0xf]
    %v1605 = vld [vmem:[%s12 + $0x1c] sm:$0xf]
    %v1614 = vunpack.c.l.b16 %v1598
    %v1615 = vunpack.c.l.b16 %v1599
    %v1616 = vunpack.c.l.b16 %v1600
    %v1617 = vunpack.c.l.b16 %v1601
    %v1618 = vunpack.c.l.b16 %v1602
    %v1619 = vunpack.c.l.b16 %v1603
    %v1620 = vunpack.c.l.b16 %v1604
    %v1621 = vunpack.c.l.b16 %v1605
    %v1622 = vpack.c.b16 %v1615, %v1614
    %v1623 = vpack.c.b16 %v1617, %v1616
    %v1624 = vpack.c.b16 %v1619, %v1618
    %v1625 = vpack.c.b16 %v1621, %v1620
    %vm1630 = vcmask 523264
    %v1632 = vsel %vm1630, %v1597, 0
    %1634 = vmatprep.subr.bf16.mxu0 0
    %1635 = vmatpush1.bf16.msra.mxu0 %v1622
    %1636 = vmatprep.subr.bf16.mxu0 0
    %1637 = vmatpush1.bf16.msra.mxu0 %v1623
    %1638 = vmatprep.subr.bf16.mxu0 0
    %1639 = vmatpush1.bf16.msra.mxu0 %v1624
    %1640 = vmatprep.subr.bf16.mxu0 0
    %1641 = vmatpush1.bf16.msra.mxu0 %v1625
    %1642 = vmatprep.subr.bf16.mxu0 0
    %1643 = vmatpush1.bf16.msra.mxu0 0
    %1644 = vmatprep.subr.bf16.mxu0 0
    %1645 = vmatpush1.bf16.msra.mxu0 0
    %1646 = vmatprep.subr.bf16.mxu0 0
    %1647 = vmatpush1.bf16.msra.mxu0 0
    %1648 = vmatprep.subr.bf16.mxu0 0
    %1649 = vmatpush1.bf16.msra.mxu0 0
    %1650 = vmatprep.subr.bf16.mxu0 0
    %1651 = vmatpush1.bf16.msra.mxu0 0
    %1652 = vmatprep.subr.bf16.mxu0 0
    %1653 = vmatpush1.bf16.msra.mxu0 0
    %1654 = vmatprep.subr.bf16.mxu0 0
    %1655 = vmatpush1.bf16.msra.mxu0 0
    %1656 = vmatprep.subr.bf16.mxu0 0
    %1657 = vmatpush1.bf16.msra.mxu0 0
    %1658 = vmatprep.subr.bf16.mxu0 0
    %1659 = vmatpush1.bf16.msra.mxu0 0
    %1660 = vmatprep.subr.bf16.mxu0 0
    %1661 = vmatpush1.bf16.msra.mxu0 0
    %1662 = vmatprep.subr.bf16.mxu0 0
    %1663 = vmatpush1.bf16.msra.mxu0 0
    %1664 = vmatprep.subr.bf16.mxu0 0
    %1665 = vmatpush1.bf16.msra.mxu0 0
    %1666 = vmatprep.mubr.bf16.mxu0 0
    %1667 = vmatmul.mubr.bf16.gmra.mrb[0].mxu0 %v1632
    %v1668 = vpop.f32.mrb[0].mxu0
    %v1669 = vadd.f32 0.0, %v1668
    %v1670 = vpop.f32.mrb[0].mxu0
    %v1671 = vpop.f32.mrb[0].mxu0
    %v1672 = vadd.f32 0.0, %v1671
    %v1673 = vpop.f32.mrb[0].mxu0
    %1674 = vdwg.mxu0
    %v1675 = vadd.f32 %v1465, %v1669
    %v1676 = vadd.f32 %v1466, %v1672
    %v1677 = vld [vmem:[%s13] sm:$0x1]
    %v1679 = vlaneseq
    %v1680 = vshrl.u32 %v1679, 7
    %v1681 = vsub.s32 0, %v1680
    %v1682 = vrot.slane %v1677, %v1681
    %v1684 = vadd.f32 %v1675, %v1682
    %v1685 = vadd.f32 %v1676, %v1682
    %s1686 = scalar_lea.vmem %s2, 1
    %v1687 = vld [vmem:[%s1686] sm:$0x1]
    %s1688 = scalar_lea.vmem %s3, 1
    %v1689 = vld [vmem:[%s1688] sm:$0x1]
    %v1690 = vsel %vm95, %v1684, 0.0
    %1691 = vadd.xlane.f32.xlu0 %v1690
    %v1692 = vpop.xlane.xlu0 %1691
    %v1693 = vsel %vm95, %v1685, 0.0
    %1694 = vadd.xlane.f32.xlu0 %v1693
    %v1695 = vpop.xlane.xlu0 %1694
    %v1696 = vmul.f32 %v1692, %v102
    %v1697 = vmul.f32 %v1695, %v102
    %v1698 = vsub.f32 %v1684, %v1696
    %v1699 = vsub.f32 %v1685, %v1697
    %v1700 = vmul.f32 %v1698, %v1698
    %v1701 = vmul.f32 %v1699, %v1699
    %v1702 = vsel %vm95, %v1700, 0.0
    %1703 = vadd.xlane.f32.xlu0 %v1702
    %v1704 = vpop.xlane.xlu0 %1703
    %v1705 = vsel %vm95, %v1701, 0.0
    %1706 = vadd.xlane.f32.xlu0 %v1705
    %v1707 = vpop.xlane.xlu0 %1706
    %v1708 = vmul.f32 %v1704, %v102
    %v1709 = vmul.f32 %v1707, %v102
    %v1710 = vadd.f32 %v1708, 1e-05
    %v1711 = vadd.f32 %v1709, 1e-05
    %v1712 = vrsqrt.pop %v1710
    %v1713 = vrsqrt.pop %v1711
    %v1714 = vmul.f32 %v1698, %v1712
    %v1715 = vmul.f32 %v1699, %v1713
    %v1717 = vlaneseq
    %v1718 = vshrl.u32 %v1717, 7
    %v1719 = vsub.s32 0, %v1718
    %v1720 = vrot.slane %v1687, %v1719
    %v1722 = vmul.f32 %v1714, %v1720
    %v1723 = vmul.f32 %v1715, %v1720
    %v1725 = vlaneseq
    %v1726 = vshrl.u32 %v1725, 7
    %v1727 = vsub.s32 0, %v1726
    %v1728 = vrot.slane %v1689, %v1727
    %v1730 = vadd.f32 %v1722, %v1728
    %v1731 = vadd.f32 %v1723, %v1728
    %v1732 = vpack.c.bf16 %v1731, %v1730
    %s1733 = scalar_lea.vmem %s4, 16
    %v1734 = vld [vmem:[%s1733] sm:$0xf]
    %v1735 = vld [vmem:[%s1733 + $0x4] sm:$0xf]
    %v1736 = vld [vmem:[%s1733 + $0x8] sm:$0xf]
    %v1737 = vld [vmem:[%s1733 + $0xc] sm:$0xf]
    %s1738 = scalar_lea.vmem %s5, 1
    %v1739 = vld [vmem:[%s1738] sm:$0x1]
    %v1741 = vlaneseq
    %v1742 = vshrl.u32 %v1741, 7
    %v1743 = vsub.s32 0, %v1742
    %v1744 = vrot.slane %v1739, %v1743
    %v1750 = vunpack.c.l.b16 %v1734
    %v1751 = vunpack.c.l.b16 %v1735
    %v1752 = vunpack.c.l.b16 %v1736
    %v1753 = vunpack.c.l.b16 %v1737
    %v1754 = vpack.c.b16 %v1751, %v1750
    %v1755 = vpack.c.b16 %v1753, %v1752
    %v1759 = vsel %vm95, %v1732, 0
    %1761 = vmatprep.subr.bf16.mxu0 0
    %1762 = vmatpush1.bf16.msra.mxu0 %v1754
    %1763 = vmatprep.subr.bf16.mxu0 0
    %1764 = vmatpush1.bf16.msra.mxu0 %v1755
    %1765 = vmatprep.subr.bf16.mxu0 0
    %1766 = vmatpush1.bf16.msra.mxu0 0
    %1767 = vmatprep.subr.bf16.mxu0 0
    %1768 = vmatpush1.bf16.msra.mxu0 0
    %1769 = vmatprep.subr.bf16.mxu0 0
    %1770 = vmatpush1.bf16.msra.mxu0 0
    %1771 = vmatprep.subr.bf16.mxu0 0
    %1772 = vmatpush1.bf16.msra.mxu0 0
    %1773 = vmatprep.subr.bf16.mxu0 0
    %1774 = vmatpush1.bf16.msra.mxu0 0
    %1775 = vmatprep.subr.bf16.mxu0 0
    %1776 = vmatpush1.bf16.msra.mxu0 0
    %1777 = vmatprep.subr.bf16.mxu0 0
    %1778 = vmatpush1.bf16.msra.mxu0 0
    %1779 = vmatprep.subr.bf16.mxu0 0
    %1780 = vmatpush1.bf16.msra.mxu0 0
    %1781 = vmatprep.subr.bf16.mxu0 0
    %1782 = vmatpush1.bf16.msra.mxu0 0
    %1783 = vmatprep.subr.bf16.mxu0 0
    %1784 = vmatpush1.bf16.msra.mxu0 0
    %1785 = vmatprep.subr.bf16.mxu0 0
    %1786 = vmatpush1.bf16.msra.mxu0 0
    %1787 = vmatprep.subr.bf16.mxu0 0
    %1788 = vmatpush1.bf16.msra.mxu0 0
    %1789 = vmatprep.subr.bf16.mxu0 0
    %1790 = vmatpush1.bf16.msra.mxu0 0
    %1791 = vmatprep.subr.bf16.mxu0 0
    %1792 = vmatpush1.bf16.msra.mxu0 0
    %1793 = vmatprep.mubr.bf16.mxu0 0
    %1794 = vmatmul.mubr.bf16.gmra.mrb[0].mxu0 %v1759
    %v1795 = vpop.f32.mrb[0].mxu0
    %v1796 = vadd.f32 %v1744, %v1795
    %v1797 = vpop.f32.mrb[0].mxu0
    %v1798 = vpop.f32.mrb[0].mxu0
    %v1799 = vadd.f32 %v1744, %v1798
    %v1800 = vpop.f32.mrb[0].mxu0
    %1801 = vdwg.mxu0
    %1804 = vrot.lane.b32.xlu0 %v1796, 120
    %v1805 = vpop.permute.xlu0 %1804
    %1806 = vrot.lane.b32.xlu0 %v1799, 120
    %v1807 = vpop.permute.xlu0 %1806
    %1810 = vrot.lane.b32.xlu0 %v1796, 112
    %v1811 = vpop.permute.xlu0 %1810
    %1812 = vrot.lane.b32.xlu0 %v1799, 112
    %v1813 = vpop.permute.xlu0 %1812
    %1816 = vrot.lane.b32.xlu0 %v1796, 104
    %v1817 = vpop.permute.xlu0 %1816
    %1818 = vrot.lane.b32.xlu0 %v1799, 104
    %v1819 = vpop.permute.xlu0 %1818
    %v1822 = vpack.c.bf16 %v1796, %v1796
    %v1823 = vpack.c.bf16 %v1799, %v1799
    %v1824 = vpack.c.bf16 %v1805, %v1805
    %v1825 = vpack.c.bf16 %v1807, %v1807
    %v1826 = vpack.c.bf16 %v1811, %v1811
    %v1827 = vpack.c.bf16 %v1813, %v1813
    %v1828 = vpack.c.bf16 %v1817, %v1817
    %v1829 = vpack.c.bf16 %v1819, %v1819
    %1831 = vrot.lane.b32.xlu0 %v1822, 96
    %v1832 = vpop.permute.xlu0 %1831
    %v1834 = vsel %vm238, %v1822, 0
    %v1837 = vsel %vm238, %v1832, 0
    %1839 = vmatprep.subr.bf16.mxu0 0
    %1840 = vmatpush1.bf16.xpose.msra.mxu0 %v1837
    %1841 = vmatprep.subr.bf16.mxu0 0
    %1842 = vmatpush1.bf16.xpose.msra.mxu0 0
    %1843 = vmatprep.subr.bf16.mxu0 0
    %1844 = vmatpush1.bf16.xpose.msra.mxu0 0
    %1845 = vmatprep.subr.bf16.mxu0 0
    %1846 = vmatpush1.bf16.xpose.msra.mxu0 0
    %1847 = vmatprep.subr.bf16.mxu0 0
    %1848 = vmatpush1.bf16.xpose.msra.mxu0 0
    %1849 = vmatprep.subr.bf16.mxu0 0
    %1850 = vmatpush1.bf16.xpose.msra.mxu0 0
    %1851 = vmatprep.subr.bf16.mxu0 0
    %1852 = vmatpush1.bf16.xpose.msra.mxu0 0
    %1853 = vmatprep.subr.bf16.mxu0 0
    %1854 = vmatpush1.bf16.xpose.msra.mxu0 0
    %1855 = vmatprep.subr.bf16.mxu0 0
    %1856 = vmatpush1.bf16.xpose.msra.mxu0 0
    %1857 = vmatprep.subr.bf16.mxu0 0
    %1858 = vmatpush1.bf16.xpose.msra.mxu0 0
    %1859 = vmatprep.subr.bf16.mxu0 0
    %1860 = vmatpush1.bf16.xpose.msra.mxu0 0
    %1861 = vmatprep.subr.bf16.mxu0 0
    %1862 = vmatpush1.bf16.xpose.msra.mxu0 0
    %1863 = vmatprep.subr.bf16.mxu0 0
    %1864 = vmatpush1.bf16.xpose.msra.mxu0 0
    %1865 = vmatprep.subr.bf16.mxu0 0
    %1866 = vmatpush1.bf16.xpose.msra.mxu0 0
    %1867 = vmatprep.subr.bf16.mxu0 0
    %1868 = vmatpush1.bf16.xpose.msra.mxu0 0
    %1869 = vmatprep.subr.bf16.mxu0 0
    %1870 = vmatpush1.bf16.xpose.msra.mxu0 0
    %1871 = vmatprep.mubr.bf16.mxu0 0
    %1872 = vmatmul.mubr.bf16.gmra.mrb[0].mxu0 %v1834
    %v1873 = vpop.f32.mrb[0].mxu0
    %v1874 = vadd.f32 0.0, %v1873
    %v1875 = vpop.f32.mrb[0].mxu0
    %v1876 = vpop.f32.mrb[0].mxu0
    %v1877 = vpop.f32.mrb[0].mxu0
    %1878 = vdwg.mxu0
    %1880 = vrot.lane.b32.xlu0 %v1823, 96
    %v1881 = vpop.permute.xlu0 %1880
    %v1883 = vsel %vm238, %v1823, 0
    %v1886 = vsel %vm238, %v1881, 0
    %1888 = vmatprep.subr.bf16.mxu0 0
    %1889 = vmatpush1.bf16.xpose.msra.mxu0 %v1886
    %1890 = vmatprep.subr.bf16.mxu0 0
    %1891 = vmatpush1.bf16.xpose.msra.mxu0 0
    %1892 = vmatprep.subr.bf16.mxu0 0
    %1893 = vmatpush1.bf16.xpose.msra.mxu0 0
    %1894 = vmatprep.subr.bf16.mxu0 0
    %1895 = vmatpush1.bf16.xpose.msra.mxu0 0
    %1896 = vmatprep.subr.bf16.mxu0 0
    %1897 = vmatpush1.bf16.xpose.msra.mxu0 0
    %1898 = vmatprep.subr.bf16.mxu0 0
    %1899 = vmatpush1.bf16.xpose.msra.mxu0 0
    %1900 = vmatprep.subr.bf16.mxu0 0
    %1901 = vmatpush1.bf16.xpose.msra.mxu0 0
    %1902 = vmatprep.subr.bf16.mxu0 0
    %1903 = vmatpush1.bf16.xpose.msra.mxu0 0
    %1904 = vmatprep.subr.bf16.mxu0 0
    %1905 = vmatpush1.bf16.xpose.msra.mxu0 0
    %1906 = vmatprep.subr.bf16.mxu0 0
    %1907 = vmatpush1.bf16.xpose.msra.mxu0 0
    %1908 = vmatprep.subr.bf16.mxu0 0
    %1909 = vmatpush1.bf16.xpose.msra.mxu0 0
    %1910 = vmatprep.subr.bf16.mxu0 0
    %1911 = vmatpush1.bf16.xpose.msra.mxu0 0
    %1912 = vmatprep.subr.bf16.mxu0 0
    %1913 = vmatpush1.bf16.xpose.msra.mxu0 0
    %1914 = vmatprep.subr.bf16.mxu0 0
    %1915 = vmatpush1.bf16.xpose.msra.mxu0 0
    %1916 = vmatprep.subr.bf16.mxu0 0
    %1917 = vmatpush1.bf16.xpose.msra.mxu0 0
    %1918 = vmatprep.subr.bf16.mxu0 0
    %1919 = vmatpush1.bf16.xpose.msra.mxu0 0
    %1920 = vmatprep.mubr.bf16.mxu0 0
    %1921 = vmatmul.mubr.bf16.gmra.mrb[0].mxu0 %v1883
    %v1922 = vpop.f32.mrb[0].mxu0
    %v1923 = vadd.f32 0.0, %v1922
    %v1924 = vpop.f32.mrb[0].mxu0
    %v1925 = vpop.f32.mrb[0].mxu0
    %v1926 = vpop.f32.mrb[0].mxu0
    %1927 = vdwg.mxu0
    %1929 = vrot.lane.b32.xlu0 %v1824, 96
    %v1930 = vpop.permute.xlu0 %1929
    %v1932 = vsel %vm238, %v1824, 0
    %v1935 = vsel %vm238, %v1930, 0
    %1937 = vmatprep.subr.bf16.mxu0 0
    %1938 = vmatpush1.bf16.xpose.msra.mxu0 %v1935
    %1939 = vmatprep.subr.bf16.mxu0 0
    %1940 = vmatpush1.bf16.xpose.msra.mxu0 0
    %1941 = vmatprep.subr.bf16.mxu0 0
    %1942 = vmatpush1.bf16.xpose.msra.mxu0 0
    %1943 = vmatprep.subr.bf16.mxu0 0
    %1944 = vmatpush1.bf16.xpose.msra.mxu0 0
    %1945 = vmatprep.subr.bf16.mxu0 0
    %1946 = vmatpush1.bf16.xpose.msra.mxu0 0
    %1947 = vmatprep.subr.bf16.mxu0 0
    %1948 = vmatpush1.bf16.xpose.msra.mxu0 0
    %1949 = vmatprep.subr.bf16.mxu0 0
    %1950 = vmatpush1.bf16.xpose.msra.mxu0 0
    %1951 = vmatprep.subr.bf16.mxu0 0
    %1952 = vmatpush1.bf16.xpose.msra.mxu0 0
    %1953 = vmatprep.subr.bf16.mxu0 0
    %1954 = vmatpush1.bf16.xpose.msra.mxu0 0
    %1955 = vmatprep.subr.bf16.mxu0 0
    %1956 = vmatpush1.bf16.xpose.msra.mxu0 0
    %1957 = vmatprep.subr.bf16.mxu0 0
    %1958 = vmatpush1.bf16.xpose.msra.mxu0 0
    %1959 = vmatprep.subr.bf16.mxu0 0
    %1960 = vmatpush1.bf16.xpose.msra.mxu0 0
    %1961 = vmatprep.subr.bf16.mxu0 0
    %1962 = vmatpush1.bf16.xpose.msra.mxu0 0
    %1963 = vmatprep.subr.bf16.mxu0 0
    %1964 = vmatpush1.bf16.xpose.msra.mxu0 0
    %1965 = vmatprep.subr.bf16.mxu0 0
    %1966 = vmatpush1.bf16.xpose.msra.mxu0 0
    %1967 = vmatprep.subr.bf16.mxu0 0
    %1968 = vmatpush1.bf16.xpose.msra.mxu0 0
    %1969 = vmatprep.mubr.bf16.mxu0 0
    %1970 = vmatmul.mubr.bf16.gmra.mrb[0].mxu0 %v1932
    %v1971 = vpop.f32.mrb[0].mxu0
    %v1972 = vadd.f32 0.0, %v1971
    %v1973 = vpop.f32.mrb[0].mxu0
    %v1974 = vpop.f32.mrb[0].mxu0
    %v1975 = vpop.f32.mrb[0].mxu0
    %1976 = vdwg.mxu0
    %1978 = vrot.lane.b32.xlu0 %v1825, 96
    %v1979 = vpop.permute.xlu0 %1978
    %v1981 = vsel %vm238, %v1825, 0
    %v1984 = vsel %vm238, %v1979, 0
    %1986 = vmatprep.subr.bf16.mxu0 0
    %1987 = vmatpush1.bf16.xpose.msra.mxu0 %v1984
    %1988 = vmatprep.subr.bf16.mxu0 0
    %1989 = vmatpush1.bf16.xpose.msra.mxu0 0
    %1990 = vmatprep.subr.bf16.mxu0 0
    %1991 = vmatpush1.bf16.xpose.msra.mxu0 0
    %1992 = vmatprep.subr.bf16.mxu0 0
    %1993 = vmatpush1.bf16.xpose.msra.mxu0 0
    %1994 = vmatprep.subr.bf16.mxu0 0
    %1995 = vmatpush1.bf16.xpose.msra.mxu0 0
    %1996 = vmatprep.subr.bf16.mxu0 0
    %1997 = vmatpush1.bf16.xpose.msra.mxu0 0
    %1998 = vmatprep.subr.bf16.mxu0 0
    %1999 = vmatpush1.bf16.xpose.msra.mxu0 0
    %2000 = vmatprep.subr.bf16.mxu0 0
    %2001 = vmatpush1.bf16.xpose.msra.mxu0 0
    %2002 = vmatprep.subr.bf16.mxu0 0
    %2003 = vmatpush1.bf16.xpose.msra.mxu0 0
    %2004 = vmatprep.subr.bf16.mxu0 0
    %2005 = vmatpush1.bf16.xpose.msra.mxu0 0
    %2006 = vmatprep.subr.bf16.mxu0 0
    %2007 = vmatpush1.bf16.xpose.msra.mxu0 0
    %2008 = vmatprep.subr.bf16.mxu0 0
    %2009 = vmatpush1.bf16.xpose.msra.mxu0 0
    %2010 = vmatprep.subr.bf16.mxu0 0
    %2011 = vmatpush1.bf16.xpose.msra.mxu0 0
    %2012 = vmatprep.subr.bf16.mxu0 0
    %2013 = vmatpush1.bf16.xpose.msra.mxu0 0
    %2014 = vmatprep.subr.bf16.mxu0 0
    %2015 = vmatpush1.bf16.xpose.msra.mxu0 0
    %2016 = vmatprep.subr.bf16.mxu0 0
    %2017 = vmatpush1.bf16.xpose.msra.mxu0 0
    %2018 = vmatprep.mubr.bf16.mxu0 0
    %2019 = vmatmul.mubr.bf16.gmra.mrb[0].mxu0 %v1981
    %v2020 = vpop.f32.mrb[0].mxu0
    %v2021 = vadd.f32 0.0, %v2020
    %v2022 = vpop.f32.mrb[0].mxu0
    %v2023 = vpop.f32.mrb[0].mxu0
    %v2024 = vpop.f32.mrb[0].mxu0
    %2025 = vdwg.mxu0
    %2027 = vrot.lane.b32.xlu0 %v1826, 96
    %v2028 = vpop.permute.xlu0 %2027
    %v2030 = vsel %vm238, %v1826, 0
    %v2033 = vsel %vm238, %v2028, 0
    %2035 = vmatprep.subr.bf16.mxu0 0
    %2036 = vmatpush1.bf16.xpose.msra.mxu0 %v2033
    %2037 = vmatprep.subr.bf16.mxu0 0
    %2038 = vmatpush1.bf16.xpose.msra.mxu0 0
    %2039 = vmatprep.subr.bf16.mxu0 0
    %2040 = vmatpush1.bf16.xpose.msra.mxu0 0
    %2041 = vmatprep.subr.bf16.mxu0 0
    %2042 = vmatpush1.bf16.xpose.msra.mxu0 0
    %2043 = vmatprep.subr.bf16.mxu0 0
    %2044 = vmatpush1.bf16.xpose.msra.mxu0 0
    %2045 = vmatprep.subr.bf16.mxu0 0
    %2046 = vmatpush1.bf16.xpose.msra.mxu0 0
    %2047 = vmatprep.subr.bf16.mxu0 0
    %2048 = vmatpush1.bf16.xpose.msra.mxu0 0
    %2049 = vmatprep.subr.bf16.mxu0 0
    %2050 = vmatpush1.bf16.xpose.msra.mxu0 0
    %2051 = vmatprep.subr.bf16.mxu0 0
    %2052 = vmatpush1.bf16.xpose.msra.mxu0 0
    %2053 = vmatprep.subr.bf16.mxu0 0
    %2054 = vmatpush1.bf16.xpose.msra.mxu0 0
    %2055 = vmatprep.subr.bf16.mxu0 0
    %2056 = vmatpush1.bf16.xpose.msra.mxu0 0
    %2057 = vmatprep.subr.bf16.mxu0 0
    %2058 = vmatpush1.bf16.xpose.msra.mxu0 0
    %2059 = vmatprep.subr.bf16.mxu0 0
    %2060 = vmatpush1.bf16.xpose.msra.mxu0 0
    %2061 = vmatprep.subr.bf16.mxu0 0
    %2062 = vmatpush1.bf16.xpose.msra.mxu0 0
    %2063 = vmatprep.subr.bf16.mxu0 0
    %2064 = vmatpush1.bf16.xpose.msra.mxu0 0
    %2065 = vmatprep.subr.bf16.mxu0 0
    %2066 = vmatpush1.bf16.xpose.msra.mxu0 0
    %2067 = vmatprep.mubr.bf16.mxu0 0
    %2068 = vmatmul.mubr.bf16.gmra.mrb[0].mxu0 %v2030
    %v2069 = vpop.f32.mrb[0].mxu0
    %v2070 = vadd.f32 0.0, %v2069
    %v2071 = vpop.f32.mrb[0].mxu0
    %v2072 = vpop.f32.mrb[0].mxu0
    %v2073 = vpop.f32.mrb[0].mxu0
    %2074 = vdwg.mxu0
    %2076 = vrot.lane.b32.xlu0 %v1827, 96
    %v2077 = vpop.permute.xlu0 %2076
    %v2079 = vsel %vm238, %v1827, 0
    %v2082 = vsel %vm238, %v2077, 0
    %2084 = vmatprep.subr.bf16.mxu0 0
    %2085 = vmatpush1.bf16.xpose.msra.mxu0 %v2082
    %2086 = vmatprep.subr.bf16.mxu0 0
    %2087 = vmatpush1.bf16.xpose.msra.mxu0 0
    %2088 = vmatprep.subr.bf16.mxu0 0
    %2089 = vmatpush1.bf16.xpose.msra.mxu0 0
    %2090 = vmatprep.subr.bf16.mxu0 0
    %2091 = vmatpush1.bf16.xpose.msra.mxu0 0
    %2092 = vmatprep.subr.bf16.mxu0 0
    %2093 = vmatpush1.bf16.xpose.msra.mxu0 0
    %2094 = vmatprep.subr.bf16.mxu0 0
    %2095 = vmatpush1.bf16.xpose.msra.mxu0 0
    %2096 = vmatprep.subr.bf16.mxu0 0
    %2097 = vmatpush1.bf16.xpose.msra.mxu0 0
    %2098 = vmatprep.subr.bf16.mxu0 0
    %2099 = vmatpush1.bf16.xpose.msra.mxu0 0
    %2100 = vmatprep.subr.bf16.mxu0 0
    %2101 = vmatpush1.bf16.xpose.msra.mxu0 0
    %2102 = vmatprep.subr.bf16.mxu0 0
    %2103 = vmatpush1.bf16.xpose.msra.mxu0 0
    %2104 = vmatprep.subr.bf16.mxu0 0
    %2105 = vmatpush1.bf16.xpose.msra.mxu0 0
    %2106 = vmatprep.subr.bf16.mxu0 0
    %2107 = vmatpush1.bf16.xpose.msra.mxu0 0
    %2108 = vmatprep.subr.bf16.mxu0 0
    %2109 = vmatpush1.bf16.xpose.msra.mxu0 0
    %2110 = vmatprep.subr.bf16.mxu0 0
    %2111 = vmatpush1.bf16.xpose.msra.mxu0 0
    %2112 = vmatprep.subr.bf16.mxu0 0
    %2113 = vmatpush1.bf16.xpose.msra.mxu0 0
    %2114 = vmatprep.subr.bf16.mxu0 0
    %2115 = vmatpush1.bf16.xpose.msra.mxu0 0
    %2116 = vmatprep.mubr.bf16.mxu0 0
    %2117 = vmatmul.mubr.bf16.gmra.mrb[0].mxu0 %v2079
    %v2118 = vpop.f32.mrb[0].mxu0
    %v2119 = vadd.f32 0.0, %v2118
    %v2120 = vpop.f32.mrb[0].mxu0
    %v2121 = vpop.f32.mrb[0].mxu0
    %v2122 = vpop.f32.mrb[0].mxu0
    %2123 = vdwg.mxu0
    %2125 = vrot.lane.b32.xlu0 %v1828, 96
    %v2126 = vpop.permute.xlu0 %2125
    %v2128 = vsel %vm238, %v1828, 0
    %v2131 = vsel %vm238, %v2126, 0
    %2133 = vmatprep.subr.bf16.mxu0 0
    %2134 = vmatpush1.bf16.xpose.msra.mxu0 %v2131
    %2135 = vmatprep.subr.bf16.mxu0 0
    %2136 = vmatpush1.bf16.xpose.msra.mxu0 0
    %2137 = vmatprep.subr.bf16.mxu0 0
    %2138 = vmatpush1.bf16.xpose.msra.mxu0 0
    %2139 = vmatprep.subr.bf16.mxu0 0
    %2140 = vmatpush1.bf16.xpose.msra.mxu0 0
    %2141 = vmatprep.subr.bf16.mxu0 0
    %2142 = vmatpush1.bf16.xpose.msra.mxu0 0
    %2143 = vmatprep.subr.bf16.mxu0 0
    %2144 = vmatpush1.bf16.xpose.msra.mxu0 0
    %2145 = vmatprep.subr.bf16.mxu0 0
    %2146 = vmatpush1.bf16.xpose.msra.mxu0 0
    %2147 = vmatprep.subr.bf16.mxu0 0
    %2148 = vmatpush1.bf16.xpose.msra.mxu0 0
    %2149 = vmatprep.subr.bf16.mxu0 0
    %2150 = vmatpush1.bf16.xpose.msra.mxu0 0
    %2151 = vmatprep.subr.bf16.mxu0 0
    %2152 = vmatpush1.bf16.xpose.msra.mxu0 0
    %2153 = vmatprep.subr.bf16.mxu0 0
    %2154 = vmatpush1.bf16.xpose.msra.mxu0 0
    %2155 = vmatprep.subr.bf16.mxu0 0
    %2156 = vmatpush1.bf16.xpose.msra.mxu0 0
    %2157 = vmatprep.subr.bf16.mxu0 0
    %2158 = vmatpush1.bf16.xpose.msra.mxu0 0
    %2159 = vmatprep.subr.bf16.mxu0 0
    %2160 = vmatpush1.bf16.xpose.msra.mxu0 0
    %2161 = vmatprep.subr.bf16.mxu0 0
    %2162 = vmatpush1.bf16.xpose.msra.mxu0 0
    %2163 = vmatprep.subr.bf16.mxu0 0
    %2164 = vmatpush1.bf16.xpose.msra.mxu0 0
    %2165 = vmatprep.mubr.bf16.mxu0 0
    %2166 = vmatmul.mubr.bf16.gmra.mrb[0].mxu0 %v2128
    %v2167 = vpop.f32.mrb[0].mxu0
    %v2168 = vadd.f32 0.0, %v2167
    %v2169 = vpop.f32.mrb[0].mxu0
    %v2170 = vpop.f32.mrb[0].mxu0
    %v2171 = vpop.f32.mrb[0].mxu0
    %2172 = vdwg.mxu0
    %2174 = vrot.lane.b32.xlu0 %v1829, 96
    %v2175 = vpop.permute.xlu0 %2174
    %v2177 = vsel %vm238, %v1829, 0
    %v2180 = vsel %vm238, %v2175, 0
    %2182 = vmatprep.subr.bf16.mxu0 0
    %2183 = vmatpush1.bf16.xpose.msra.mxu0 %v2180
    %2184 = vmatprep.subr.bf16.mxu0 0
    %2185 = vmatpush1.bf16.xpose.msra.mxu0 0
    %2186 = vmatprep.subr.bf16.mxu0 0
    %2187 = vmatpush1.bf16.xpose.msra.mxu0 0
    %2188 = vmatprep.subr.bf16.mxu0 0
    %2189 = vmatpush1.bf16.xpose.msra.mxu0 0
    %2190 = vmatprep.subr.bf16.mxu0 0
    %2191 = vmatpush1.bf16.xpose.msra.mxu0 0
    %2192 = vmatprep.subr.bf16.mxu0 0
    %2193 = vmatpush1.bf16.xpose.msra.mxu0 0
    %2194 = vmatprep.subr.bf16.mxu0 0
    %2195 = vmatpush1.bf16.xpose.msra.mxu0 0
    %2196 = vmatprep.subr.bf16.mxu0 0
    %2197 = vmatpush1.bf16.xpose.msra.mxu0 0
    %2198 = vmatprep.subr.bf16.mxu0 0
    %2199 = vmatpush1.bf16.xpose.msra.mxu0 0
    %2200 = vmatprep.subr.bf16.mxu0 0
    %2201 = vmatpush1.bf16.xpose.msra.mxu0 0
    %2202 = vmatprep.subr.bf16.mxu0 0
    %2203 = vmatpush1.bf16.xpose.msra.mxu0 0
    %2204 = vmatprep.subr.bf16.mxu0 0
    %2205 = vmatpush1.bf16.xpose.msra.mxu0 0
    %2206 = vmatprep.subr.bf16.mxu0 0
    %2207 = vmatpush1.bf16.xpose.msra.mxu0 0
    %2208 = vmatprep.subr.bf16.mxu0 0
    %2209 = vmatpush1.bf16.xpose.msra.mxu0 0
    %2210 = vmatprep.subr.bf16.mxu0 0
    %2211 = vmatpush1.bf16.xpose.msra.mxu0 0
    %2212 = vmatprep.subr.bf16.mxu0 0
    %2213 = vmatpush1.bf16.xpose.msra.mxu0 0
    %2214 = vmatprep.mubr.bf16.mxu0 0
    %2215 = vmatmul.mubr.bf16.gmra.mrb[0].mxu0 %v2177
    %v2216 = vpop.f32.mrb[0].mxu0
    %v2217 = vadd.f32 0.0, %v2216
    %v2218 = vpop.f32.mrb[0].mxu0
    %v2219 = vpop.f32.mrb[0].mxu0
    %v2220 = vpop.f32.mrb[0].mxu0
    %2221 = vdwg.mxu0
    %v2222 = vmul.f32 %v1874, 0.35355338
    %v2223 = vmul.f32 %v1923, 0.35355338
    %v2224 = vmul.f32 %v1972, 0.35355338
    %v2225 = vmul.f32 %v2021, 0.35355338
    %v2226 = vmul.f32 %v2070, 0.35355338
    %v2227 = vmul.f32 %v2119, 0.35355338
    %v2228 = vmul.f32 %v2168, 0.35355338
    %v2229 = vmul.f32 %v2217, 0.35355338
    %v2230 = vsel %vm238, %v2222, -inf
    %2231 = vmax.xlane.f32.xlu0 %v2230
    %v2232 = vpop.xlane.xlu0 %2231
    %v2233 = vsel %vm238, %v2223, -inf
    %2234 = vmax.xlane.f32.xlu0 %v2233
    %v2235 = vpop.xlane.xlu0 %2234
    %v2236 = vsel %vm238, %v2224, -inf
    %2237 = vmax.xlane.f32.xlu0 %v2236
    %v2238 = vpop.xlane.xlu0 %2237
    %v2239 = vsel %vm238, %v2225, -inf
    %2240 = vmax.xlane.f32.xlu0 %v2239
    %v2241 = vpop.xlane.xlu0 %2240
    %v2242 = vsel %vm238, %v2226, -inf
    %2243 = vmax.xlane.f32.xlu0 %v2242
    %v2244 = vpop.xlane.xlu0 %2243
    %v2245 = vsel %vm238, %v2227, -inf
    %2246 = vmax.xlane.f32.xlu0 %v2245
    %v2247 = vpop.xlane.xlu0 %2246
    %v2248 = vsel %vm238, %v2228, -inf
    %2249 = vmax.xlane.f32.xlu0 %v2248
    %v2250 = vpop.xlane.xlu0 %2249
    %v2251 = vsel %vm238, %v2229, -inf
    %2252 = vmax.xlane.f32.xlu0 %v2251
    %v2253 = vpop.xlane.xlu0 %2252
    %vm2254 = vcmp.ge.f32.partialorder %v2222, %v2232
    %vm2255 = vcmp.ge.f32.partialorder %v2223, %v2235
    %vm2256 = vcmp.ge.f32.partialorder %v2224, %v2238
    %vm2257 = vcmp.ge.f32.partialorder %v2225, %v2241
    %vm2258 = vcmp.ge.f32.partialorder %v2226, %v2244
    %vm2259 = vcmp.ge.f32.partialorder %v2227, %v2247
    %vm2260 = vcmp.ge.f32.partialorder %v2228, %v2250
    %vm2261 = vcmp.ge.f32.partialorder %v2229, %v2253
    %v2262 = vsel %vm2254, -1e+30, %v2222
    %v2263 = vsel %vm2255, -1e+30, %v2223
    %v2264 = vsel %vm2256, -1e+30, %v2224
    %v2265 = vsel %vm2257, -1e+30, %v2225
    %v2266 = vsel %vm2258, -1e+30, %v2226
    %v2267 = vsel %vm2259, -1e+30, %v2227
    %v2268 = vsel %vm2260, -1e+30, %v2228
    %v2269 = vsel %vm2261, -1e+30, %v2229
    %v2270 = vsel %vm238, %v2262, -inf
    %2271 = vmax.xlane.f32.xlu0 %v2270
    %v2272 = vpop.xlane.xlu0 %2271
    %v2273 = vsel %vm238, %v2263, -inf
    %2274 = vmax.xlane.f32.xlu0 %v2273
    %v2275 = vpop.xlane.xlu0 %2274
    %v2276 = vsel %vm238, %v2264, -inf
    %2277 = vmax.xlane.f32.xlu0 %v2276
    %v2278 = vpop.xlane.xlu0 %2277
    %v2279 = vsel %vm238, %v2265, -inf
    %2280 = vmax.xlane.f32.xlu0 %v2279
    %v2281 = vpop.xlane.xlu0 %2280
    %v2282 = vsel %vm238, %v2266, -inf
    %2283 = vmax.xlane.f32.xlu0 %v2282
    %v2284 = vpop.xlane.xlu0 %2283
    %v2285 = vsel %vm238, %v2267, -inf
    %2286 = vmax.xlane.f32.xlu0 %v2285
    %v2287 = vpop.xlane.xlu0 %2286
    %v2288 = vsel %vm238, %v2268, -inf
    %2289 = vmax.xlane.f32.xlu0 %v2288
    %v2290 = vpop.xlane.xlu0 %2289
    %v2291 = vsel %vm238, %v2269, -inf
    %2292 = vmax.xlane.f32.xlu0 %v2291
    %v2293 = vpop.xlane.xlu0 %2292
    %vm2294 = vcmp.ge.f32.partialorder %v2262, %v2272
    %vm2295 = vcmp.ge.f32.partialorder %v2263, %v2275
    %vm2296 = vcmp.ge.f32.partialorder %v2264, %v2278
    %vm2297 = vcmp.ge.f32.partialorder %v2265, %v2281
    %vm2298 = vcmp.ge.f32.partialorder %v2266, %v2284
    %vm2299 = vcmp.ge.f32.partialorder %v2267, %v2287
    %vm2300 = vcmp.ge.f32.partialorder %v2268, %v2290
    %vm2301 = vcmp.ge.f32.partialorder %v2269, %v2293
    %v2302 = vsel %vm2294, -1e+30, %v2262
    %v2303 = vsel %vm2295, -1e+30, %v2263
    %v2304 = vsel %vm2296, -1e+30, %v2264
    %v2305 = vsel %vm2297, -1e+30, %v2265
    %v2306 = vsel %vm2298, -1e+30, %v2266
    %v2307 = vsel %vm2299, -1e+30, %v2267
    %v2308 = vsel %vm2300, -1e+30, %v2268
    %v2309 = vsel %vm2301, -1e+30, %v2269
    %v2310 = vsel %vm238, %v2302, -inf
    %2311 = vmax.xlane.f32.xlu0 %v2310
    %v2312 = vpop.xlane.xlu0 %2311
    %v2313 = vsel %vm238, %v2303, -inf
    %2314 = vmax.xlane.f32.xlu0 %v2313
    %v2315 = vpop.xlane.xlu0 %2314
    %v2316 = vsel %vm238, %v2304, -inf
    %2317 = vmax.xlane.f32.xlu0 %v2316
    %v2318 = vpop.xlane.xlu0 %2317
    %v2319 = vsel %vm238, %v2305, -inf
    %2320 = vmax.xlane.f32.xlu0 %v2319
    %v2321 = vpop.xlane.xlu0 %2320
    %v2322 = vsel %vm238, %v2306, -inf
    %2323 = vmax.xlane.f32.xlu0 %v2322
    %v2324 = vpop.xlane.xlu0 %2323
    %v2325 = vsel %vm238, %v2307, -inf
    %2326 = vmax.xlane.f32.xlu0 %v2325
    %v2327 = vpop.xlane.xlu0 %2326
    %v2328 = vsel %vm238, %v2308, -inf
    %2329 = vmax.xlane.f32.xlu0 %v2328
    %v2330 = vpop.xlane.xlu0 %2329
    %v2331 = vsel %vm238, %v2309, -inf
    %2332 = vmax.xlane.f32.xlu0 %v2331
    %v2333 = vpop.xlane.xlu0 %2332
    %vm2334 = vcmp.ge.f32.partialorder %v2302, %v2312
    %vm2335 = vcmp.ge.f32.partialorder %v2303, %v2315
    %vm2336 = vcmp.ge.f32.partialorder %v2304, %v2318
    %vm2337 = vcmp.ge.f32.partialorder %v2305, %v2321
    %vm2338 = vcmp.ge.f32.partialorder %v2306, %v2324
    %vm2339 = vcmp.ge.f32.partialorder %v2307, %v2327
    %vm2340 = vcmp.ge.f32.partialorder %v2308, %v2330
    %vm2341 = vcmp.ge.f32.partialorder %v2309, %v2333
    %v2342 = vsel %vm2334, -1e+30, %v2302
    %v2343 = vsel %vm2335, -1e+30, %v2303
    %v2344 = vsel %vm2336, -1e+30, %v2304
    %v2345 = vsel %vm2337, -1e+30, %v2305
    %v2346 = vsel %vm2338, -1e+30, %v2306
    %v2347 = vsel %vm2339, -1e+30, %v2307
    %v2348 = vsel %vm2340, -1e+30, %v2308
    %v2349 = vsel %vm2341, -1e+30, %v2309
    %v2350 = vsel %vm238, %v2342, -inf
    %2351 = vmax.xlane.f32.xlu0 %v2350
    %v2352 = vpop.xlane.xlu0 %2351
    %v2353 = vsel %vm238, %v2343, -inf
    %2354 = vmax.xlane.f32.xlu0 %v2353
    %v2355 = vpop.xlane.xlu0 %2354
    %v2356 = vsel %vm238, %v2344, -inf
    %2357 = vmax.xlane.f32.xlu0 %v2356
    %v2358 = vpop.xlane.xlu0 %2357
    %v2359 = vsel %vm238, %v2345, -inf
    %2360 = vmax.xlane.f32.xlu0 %v2359
    %v2361 = vpop.xlane.xlu0 %2360
    %v2362 = vsel %vm238, %v2346, -inf
    %2363 = vmax.xlane.f32.xlu0 %v2362
    %v2364 = vpop.xlane.xlu0 %2363
    %v2365 = vsel %vm238, %v2347, -inf
    %2366 = vmax.xlane.f32.xlu0 %v2365
    %v2367 = vpop.xlane.xlu0 %2366
    %v2368 = vsel %vm238, %v2348, -inf
    %2369 = vmax.xlane.f32.xlu0 %v2368
    %v2370 = vpop.xlane.xlu0 %2369
    %v2371 = vsel %vm238, %v2349, -inf
    %2372 = vmax.xlane.f32.xlu0 %v2371
    %v2373 = vpop.xlane.xlu0 %2372
    %vm2374 = vcmp.ge.f32.partialorder %v2222, %v2352
    %vm2375 = vcmp.ge.f32.partialorder %v2223, %v2355
    %vm2376 = vcmp.ge.f32.partialorder %v2224, %v2358
    %vm2377 = vcmp.ge.f32.partialorder %v2225, %v2361
    %vm2378 = vcmp.ge.f32.partialorder %v2226, %v2364
    %vm2379 = vcmp.ge.f32.partialorder %v2227, %v2367
    %vm2380 = vcmp.ge.f32.partialorder %v2228, %v2370
    %vm2381 = vcmp.ge.f32.partialorder %v2229, %v2373
    %v2382 = vsub.f32 %v2222, %v2232
    %v2383 = vsub.f32 %v2223, %v2235
    %v2384 = vsub.f32 %v2224, %v2238
    %v2385 = vsub.f32 %v2225, %v2241
    %v2386 = vsub.f32 %v2226, %v2244
    %v2387 = vsub.f32 %v2227, %v2247
    %v2388 = vsub.f32 %v2228, %v2250
    %v2389 = vsub.f32 %v2229, %v2253
    %v2390 = vmul.f32 %v2382, 1.442695
    %v2391 = vpow.pop %v2390
    %v2392 = vmul.f32 %v2383, 1.442695
    %v2393 = vpow.pop %v2392
    %v2394 = vmul.f32 %v2384, 1.442695
    %v2395 = vpow.pop %v2394
    %v2396 = vmul.f32 %v2385, 1.442695
    %v2397 = vpow.pop %v2396
    %v2398 = vmul.f32 %v2386, 1.442695
    %v2399 = vpow.pop %v2398
    %v2400 = vmul.f32 %v2387, 1.442695
    %v2401 = vpow.pop %v2400
    %v2402 = vmul.f32 %v2388, 1.442695
    %v2403 = vpow.pop %v2402
    %v2404 = vmul.f32 %v2389, 1.442695
    %v2405 = vpow.pop %v2404
    %v2406 = vsel %vm2374, %v2391, 0.0
    %v2407 = vsel %vm2375, %v2393, 0.0
    %v2408 = vsel %vm2376, %v2395, 0.0
    %v2409 = vsel %vm2377, %v2397, 0.0
    %v2410 = vsel %vm2378, %v2399, 0.0
    %v2411 = vsel %vm2379, %v2401, 0.0
    %v2412 = vsel %vm2380, %v2403, 0.0
    %v2413 = vsel %vm2381, %v2405, 0.0
    %v2414 = vsel %vm238, %v2406, 0.0
    %2415 = vadd.xlane.f32.xlu0 %v2414
    %v2416 = vpop.xlane.xlu0 %2415
    %v2417 = vsel %vm238, %v2407, 0.0
    %2418 = vadd.xlane.f32.xlu0 %v2417
    %v2419 = vpop.xlane.xlu0 %2418
    %v2420 = vsel %vm238, %v2408, 0.0
    %2421 = vadd.xlane.f32.xlu0 %v2420
    %v2422 = vpop.xlane.xlu0 %2421
    %v2423 = vsel %vm238, %v2409, 0.0
    %2424 = vadd.xlane.f32.xlu0 %v2423
    %v2425 = vpop.xlane.xlu0 %2424
    %v2426 = vsel %vm238, %v2410, 0.0
    %2427 = vadd.xlane.f32.xlu0 %v2426
    %v2428 = vpop.xlane.xlu0 %2427
    %v2429 = vsel %vm238, %v2411, 0.0
    %2430 = vadd.xlane.f32.xlu0 %v2429
    %v2431 = vpop.xlane.xlu0 %2430
    %v2432 = vsel %vm238, %v2412, 0.0
    %2433 = vadd.xlane.f32.xlu0 %v2432
    %v2434 = vpop.xlane.xlu0 %2433
    %v2435 = vsel %vm238, %v2413, 0.0
    %2436 = vadd.xlane.f32.xlu0 %v2435
    %v2437 = vpop.xlane.xlu0 %2436
    %v2438 = vrcp.pop %v2416
    %v2439 = vmul.f32 %v2406, %v2438
    %v2440 = vrcp.pop %v2419
    %v2441 = vmul.f32 %v2407, %v2440
    %v2442 = vrcp.pop %v2422
    %v2443 = vmul.f32 %v2408, %v2442
    %v2444 = vrcp.pop %v2425
    %v2445 = vmul.f32 %v2409, %v2444
    %v2446 = vrcp.pop %v2428
    %v2447 = vmul.f32 %v2410, %v2446
    %v2448 = vrcp.pop %v2431
    %v2449 = vmul.f32 %v2411, %v2448
    %v2450 = vrcp.pop %v2434
    %v2451 = vmul.f32 %v2412, %v2450
    %v2452 = vrcp.pop %v2437
    %v2453 = vmul.f32 %v2413, %v2452
    %v2454 = vpack.c.bf16 %v2439, %v2439
    %v2455 = vpack.c.bf16 %v2441, %v2441
    %v2456 = vpack.c.bf16 %v2443, %v2443
    %v2457 = vpack.c.bf16 %v2445, %v2445
    %v2458 = vpack.c.bf16 %v2447, %v2447
    %v2459 = vpack.c.bf16 %v2449, %v2449
    %v2460 = vpack.c.bf16 %v2451, %v2451
    %v2461 = vpack.c.bf16 %v2453, %v2453
    %2462 = vrot.lane.b32.xlu0 %v1822, 64
    %v2463 = vpop.permute.xlu0 %2462
    %v2465 = vsel %vm238, %v2454, 0
    %v2468 = vsel %vm873, %v2463, 0
    %2470 = vmatprep.subr.bf16.mxu0 0
    %2471 = vmatpush1.bf16.msra.mxu0 %v2468
    %2472 = vmatprep.subr.bf16.mxu0 0
    %2473 = vmatpush1.bf16.msra.mxu0 0
    %2474 = vmatprep.subr.bf16.mxu0 0
    %2475 = vmatpush1.bf16.msra.mxu0 0
    %2476 = vmatprep.subr.bf16.mxu0 0
    %2477 = vmatpush1.bf16.msra.mxu0 0
    %2478 = vmatprep.subr.bf16.mxu0 0
    %2479 = vmatpush1.bf16.msra.mxu0 0
    %2480 = vmatprep.subr.bf16.mxu0 0
    %2481 = vmatpush1.bf16.msra.mxu0 0
    %2482 = vmatprep.subr.bf16.mxu0 0
    %2483 = vmatpush1.bf16.msra.mxu0 0
    %2484 = vmatprep.subr.bf16.mxu0 0
    %2485 = vmatpush1.bf16.msra.mxu0 0
    %2486 = vmatprep.subr.bf16.mxu0 0
    %2487 = vmatpush1.bf16.msra.mxu0 0
    %2488 = vmatprep.subr.bf16.mxu0 0
    %2489 = vmatpush1.bf16.msra.mxu0 0
    %2490 = vmatprep.subr.bf16.mxu0 0
    %2491 = vmatpush1.bf16.msra.mxu0 0
    %2492 = vmatprep.subr.bf16.mxu0 0
    %2493 = vmatpush1.bf16.msra.mxu0 0
    %2494 = vmatprep.subr.bf16.mxu0 0
    %2495 = vmatpush1.bf16.msra.mxu0 0
    %2496 = vmatprep.subr.bf16.mxu0 0
    %2497 = vmatpush1.bf16.msra.mxu0 0
    %2498 = vmatprep.subr.bf16.mxu0 0
    %2499 = vmatpush1.bf16.msra.mxu0 0
    %2500 = vmatprep.subr.bf16.mxu0 0
    %2501 = vmatpush1.bf16.msra.mxu0 0
    %2502 = vmatprep.mubr.bf16.mxu0 0
    %2503 = vmatmul.mubr.bf16.gmra.mrb[0].mxu0 %v2465
    %v2504 = vpop.f32.mrb[0].mxu0
    %v2505 = vadd.f32 0.0, %v2504
    %v2506 = vpop.f32.mrb[0].mxu0
    %v2507 = vpop.f32.mrb[0].mxu0
    %v2508 = vpop.f32.mrb[0].mxu0
    %2509 = vdwg.mxu0
    %2510 = vrot.lane.b32.xlu0 %v1823, 64
    %v2511 = vpop.permute.xlu0 %2510
    %v2513 = vsel %vm238, %v2455, 0
    %v2516 = vsel %vm873, %v2511, 0
    %2518 = vmatprep.subr.bf16.mxu0 0
    %2519 = vmatpush1.bf16.msra.mxu0 %v2516
    %2520 = vmatprep.subr.bf16.mxu0 0
    %2521 = vmatpush1.bf16.msra.mxu0 0
    %2522 = vmatprep.subr.bf16.mxu0 0
    %2523 = vmatpush1.bf16.msra.mxu0 0
    %2524 = vmatprep.subr.bf16.mxu0 0
    %2525 = vmatpush1.bf16.msra.mxu0 0
    %2526 = vmatprep.subr.bf16.mxu0 0
    %2527 = vmatpush1.bf16.msra.mxu0 0
    %2528 = vmatprep.subr.bf16.mxu0 0
    %2529 = vmatpush1.bf16.msra.mxu0 0
    %2530 = vmatprep.subr.bf16.mxu0 0
    %2531 = vmatpush1.bf16.msra.mxu0 0
    %2532 = vmatprep.subr.bf16.mxu0 0
    %2533 = vmatpush1.bf16.msra.mxu0 0
    %2534 = vmatprep.subr.bf16.mxu0 0
    %2535 = vmatpush1.bf16.msra.mxu0 0
    %2536 = vmatprep.subr.bf16.mxu0 0
    %2537 = vmatpush1.bf16.msra.mxu0 0
    %2538 = vmatprep.subr.bf16.mxu0 0
    %2539 = vmatpush1.bf16.msra.mxu0 0
    %2540 = vmatprep.subr.bf16.mxu0 0
    %2541 = vmatpush1.bf16.msra.mxu0 0
    %2542 = vmatprep.subr.bf16.mxu0 0
    %2543 = vmatpush1.bf16.msra.mxu0 0
    %2544 = vmatprep.subr.bf16.mxu0 0
    %2545 = vmatpush1.bf16.msra.mxu0 0
    %2546 = vmatprep.subr.bf16.mxu0 0
    %2547 = vmatpush1.bf16.msra.mxu0 0
    %2548 = vmatprep.subr.bf16.mxu0 0
    %2549 = vmatpush1.bf16.msra.mxu0 0
    %2550 = vmatprep.mubr.bf16.mxu0 0
    %2551 = vmatmul.mubr.bf16.gmra.mrb[0].mxu0 %v2513
    %v2552 = vpop.f32.mrb[0].mxu0
    %v2553 = vadd.f32 0.0, %v2552
    %v2554 = vpop.f32.mrb[0].mxu0
    %v2555 = vpop.f32.mrb[0].mxu0
    %v2556 = vpop.f32.mrb[0].mxu0
    %2557 = vdwg.mxu0
    %2558 = vrot.lane.b32.xlu0 %v1824, 64
    %v2559 = vpop.permute.xlu0 %2558
    %v2561 = vsel %vm238, %v2456, 0
    %v2564 = vsel %vm873, %v2559, 0
    %2566 = vmatprep.subr.bf16.mxu0 0
    %2567 = vmatpush1.bf16.msra.mxu0 %v2564
    %2568 = vmatprep.subr.bf16.mxu0 0
    %2569 = vmatpush1.bf16.msra.mxu0 0
    %2570 = vmatprep.subr.bf16.mxu0 0
    %2571 = vmatpush1.bf16.msra.mxu0 0
    %2572 = vmatprep.subr.bf16.mxu0 0
    %2573 = vmatpush1.bf16.msra.mxu0 0
    %2574 = vmatprep.subr.bf16.mxu0 0
    %2575 = vmatpush1.bf16.msra.mxu0 0
    %2576 = vmatprep.subr.bf16.mxu0 0
    %2577 = vmatpush1.bf16.msra.mxu0 0
    %2578 = vmatprep.subr.bf16.mxu0 0
    %2579 = vmatpush1.bf16.msra.mxu0 0
    %2580 = vmatprep.subr.bf16.mxu0 0
    %2581 = vmatpush1.bf16.msra.mxu0 0
    %2582 = vmatprep.subr.bf16.mxu0 0
    %2583 = vmatpush1.bf16.msra.mxu0 0
    %2584 = vmatprep.subr.bf16.mxu0 0
    %2585 = vmatpush1.bf16.msra.mxu0 0
    %2586 = vmatprep.subr.bf16.mxu0 0
    %2587 = vmatpush1.bf16.msra.mxu0 0
    %2588 = vmatprep.subr.bf16.mxu0 0
    %2589 = vmatpush1.bf16.msra.mxu0 0
    %2590 = vmatprep.subr.bf16.mxu0 0
    %2591 = vmatpush1.bf16.msra.mxu0 0
    %2592 = vmatprep.subr.bf16.mxu0 0
    %2593 = vmatpush1.bf16.msra.mxu0 0
    %2594 = vmatprep.subr.bf16.mxu0 0
    %2595 = vmatpush1.bf16.msra.mxu0 0
    %2596 = vmatprep.subr.bf16.mxu0 0
    %2597 = vmatpush1.bf16.msra.mxu0 0
    %2598 = vmatprep.mubr.bf16.mxu0 0
    %2599 = vmatmul.mubr.bf16.gmra.mrb[0].mxu0 %v2561
    %v2600 = vpop.f32.mrb[0].mxu0
    %v2601 = vadd.f32 0.0, %v2600
    %v2602 = vpop.f32.mrb[0].mxu0
    %v2603 = vpop.f32.mrb[0].mxu0
    %v2604 = vpop.f32.mrb[0].mxu0
    %2605 = vdwg.mxu0
    %2606 = vrot.lane.b32.xlu0 %v1825, 64
    %v2607 = vpop.permute.xlu0 %2606
    %v2609 = vsel %vm238, %v2457, 0
    %v2612 = vsel %vm873, %v2607, 0
    %2614 = vmatprep.subr.bf16.mxu0 0
    %2615 = vmatpush1.bf16.msra.mxu0 %v2612
    %2616 = vmatprep.subr.bf16.mxu0 0
    %2617 = vmatpush1.bf16.msra.mxu0 0
    %2618 = vmatprep.subr.bf16.mxu0 0
    %2619 = vmatpush1.bf16.msra.mxu0 0
    %2620 = vmatprep.subr.bf16.mxu0 0
    %2621 = vmatpush1.bf16.msra.mxu0 0
    %2622 = vmatprep.subr.bf16.mxu0 0
    %2623 = vmatpush1.bf16.msra.mxu0 0
    %2624 = vmatprep.subr.bf16.mxu0 0
    %2625 = vmatpush1.bf16.msra.mxu0 0
    %2626 = vmatprep.subr.bf16.mxu0 0
    %2627 = vmatpush1.bf16.msra.mxu0 0
    %2628 = vmatprep.subr.bf16.mxu0 0
    %2629 = vmatpush1.bf16.msra.mxu0 0
    %2630 = vmatprep.subr.bf16.mxu0 0
    %2631 = vmatpush1.bf16.msra.mxu0 0
    %2632 = vmatprep.subr.bf16.mxu0 0
    %2633 = vmatpush1.bf16.msra.mxu0 0
    %2634 = vmatprep.subr.bf16.mxu0 0
    %2635 = vmatpush1.bf16.msra.mxu0 0
    %2636 = vmatprep.subr.bf16.mxu0 0
    %2637 = vmatpush1.bf16.msra.mxu0 0
    %2638 = vmatprep.subr.bf16.mxu0 0
    %2639 = vmatpush1.bf16.msra.mxu0 0
    %2640 = vmatprep.subr.bf16.mxu0 0
    %2641 = vmatpush1.bf16.msra.mxu0 0
    %2642 = vmatprep.subr.bf16.mxu0 0
    %2643 = vmatpush1.bf16.msra.mxu0 0
    %2644 = vmatprep.subr.bf16.mxu0 0
    %2645 = vmatpush1.bf16.msra.mxu0 0
    %2646 = vmatprep.mubr.bf16.mxu0 0
    %2647 = vmatmul.mubr.bf16.gmra.mrb[0].mxu0 %v2609
    %v2648 = vpop.f32.mrb[0].mxu0
    %v2649 = vadd.f32 0.0, %v2648
    %v2650 = vpop.f32.mrb[0].mxu0
    %v2651 = vpop.f32.mrb[0].mxu0
    %v2652 = vpop.f32.mrb[0].mxu0
    %2653 = vdwg.mxu0
    %2654 = vrot.lane.b32.xlu0 %v1826, 64
    %v2655 = vpop.permute.xlu0 %2654
    %v2657 = vsel %vm238, %v2458, 0
    %v2660 = vsel %vm873, %v2655, 0
    %2662 = vmatprep.subr.bf16.mxu0 0
    %2663 = vmatpush1.bf16.msra.mxu0 %v2660
    %2664 = vmatprep.subr.bf16.mxu0 0
    %2665 = vmatpush1.bf16.msra.mxu0 0
    %2666 = vmatprep.subr.bf16.mxu0 0
    %2667 = vmatpush1.bf16.msra.mxu0 0
    %2668 = vmatprep.subr.bf16.mxu0 0
    %2669 = vmatpush1.bf16.msra.mxu0 0
    %2670 = vmatprep.subr.bf16.mxu0 0
    %2671 = vmatpush1.bf16.msra.mxu0 0
    %2672 = vmatprep.subr.bf16.mxu0 0
    %2673 = vmatpush1.bf16.msra.mxu0 0
    %2674 = vmatprep.subr.bf16.mxu0 0
    %2675 = vmatpush1.bf16.msra.mxu0 0
    %2676 = vmatprep.subr.bf16.mxu0 0
    %2677 = vmatpush1.bf16.msra.mxu0 0
    %2678 = vmatprep.subr.bf16.mxu0 0
    %2679 = vmatpush1.bf16.msra.mxu0 0
    %2680 = vmatprep.subr.bf16.mxu0 0
    %2681 = vmatpush1.bf16.msra.mxu0 0
    %2682 = vmatprep.subr.bf16.mxu0 0
    %2683 = vmatpush1.bf16.msra.mxu0 0
    %2684 = vmatprep.subr.bf16.mxu0 0
    %2685 = vmatpush1.bf16.msra.mxu0 0
    %2686 = vmatprep.subr.bf16.mxu0 0
    %2687 = vmatpush1.bf16.msra.mxu0 0
    %2688 = vmatprep.subr.bf16.mxu0 0
    %2689 = vmatpush1.bf16.msra.mxu0 0
    %2690 = vmatprep.subr.bf16.mxu0 0
    %2691 = vmatpush1.bf16.msra.mxu0 0
    %2692 = vmatprep.subr.bf16.mxu0 0
    %2693 = vmatpush1.bf16.msra.mxu0 0
    %2694 = vmatprep.mubr.bf16.mxu0 0
    %2695 = vmatmul.mubr.bf16.gmra.mrb[0].mxu0 %v2657
    %v2696 = vpop.f32.mrb[0].mxu0
    %v2697 = vadd.f32 0.0, %v2696
    %v2698 = vpop.f32.mrb[0].mxu0
    %v2699 = vpop.f32.mrb[0].mxu0
    %v2700 = vpop.f32.mrb[0].mxu0
    %2701 = vdwg.mxu0
    %2702 = vrot.lane.b32.xlu0 %v1827, 64
    %v2703 = vpop.permute.xlu0 %2702
    %v2705 = vsel %vm238, %v2459, 0
    %v2708 = vsel %vm873, %v2703, 0
    %2710 = vmatprep.subr.bf16.mxu0 0
    %2711 = vmatpush1.bf16.msra.mxu0 %v2708
    %2712 = vmatprep.subr.bf16.mxu0 0
    %2713 = vmatpush1.bf16.msra.mxu0 0
    %2714 = vmatprep.subr.bf16.mxu0 0
    %2715 = vmatpush1.bf16.msra.mxu0 0
    %2716 = vmatprep.subr.bf16.mxu0 0
    %2717 = vmatpush1.bf16.msra.mxu0 0
    %2718 = vmatprep.subr.bf16.mxu0 0
    %2719 = vmatpush1.bf16.msra.mxu0 0
    %2720 = vmatprep.subr.bf16.mxu0 0
    %2721 = vmatpush1.bf16.msra.mxu0 0
    %2722 = vmatprep.subr.bf16.mxu0 0
    %2723 = vmatpush1.bf16.msra.mxu0 0
    %2724 = vmatprep.subr.bf16.mxu0 0
    %2725 = vmatpush1.bf16.msra.mxu0 0
    %2726 = vmatprep.subr.bf16.mxu0 0
    %2727 = vmatpush1.bf16.msra.mxu0 0
    %2728 = vmatprep.subr.bf16.mxu0 0
    %2729 = vmatpush1.bf16.msra.mxu0 0
    %2730 = vmatprep.subr.bf16.mxu0 0
    %2731 = vmatpush1.bf16.msra.mxu0 0
    %2732 = vmatprep.subr.bf16.mxu0 0
    %2733 = vmatpush1.bf16.msra.mxu0 0
    %2734 = vmatprep.subr.bf16.mxu0 0
    %2735 = vmatpush1.bf16.msra.mxu0 0
    %2736 = vmatprep.subr.bf16.mxu0 0
    %2737 = vmatpush1.bf16.msra.mxu0 0
    %2738 = vmatprep.subr.bf16.mxu0 0
    %2739 = vmatpush1.bf16.msra.mxu0 0
    %2740 = vmatprep.subr.bf16.mxu0 0
    %2741 = vmatpush1.bf16.msra.mxu0 0
    %2742 = vmatprep.mubr.bf16.mxu0 0
    %2743 = vmatmul.mubr.bf16.gmra.mrb[0].mxu0 %v2705
    %v2744 = vpop.f32.mrb[0].mxu0
    %v2745 = vadd.f32 0.0, %v2744
    %v2746 = vpop.f32.mrb[0].mxu0
    %v2747 = vpop.f32.mrb[0].mxu0
    %v2748 = vpop.f32.mrb[0].mxu0
    %2749 = vdwg.mxu0
    %2750 = vrot.lane.b32.xlu0 %v1828, 64
    %v2751 = vpop.permute.xlu0 %2750
    %v2753 = vsel %vm238, %v2460, 0
    %v2756 = vsel %vm873, %v2751, 0
    %2758 = vmatprep.subr.bf16.mxu0 0
    %2759 = vmatpush1.bf16.msra.mxu0 %v2756
    %2760 = vmatprep.subr.bf16.mxu0 0
    %2761 = vmatpush1.bf16.msra.mxu0 0
    %2762 = vmatprep.subr.bf16.mxu0 0
    %2763 = vmatpush1.bf16.msra.mxu0 0
    %2764 = vmatprep.subr.bf16.mxu0 0
    %2765 = vmatpush1.bf16.msra.mxu0 0
    %2766 = vmatprep.subr.bf16.mxu0 0
    %2767 = vmatpush1.bf16.msra.mxu0 0
    %2768 = vmatprep.subr.bf16.mxu0 0
    %2769 = vmatpush1.bf16.msra.mxu0 0
    %2770 = vmatprep.subr.bf16.mxu0 0
    %2771 = vmatpush1.bf16.msra.mxu0 0
    %2772 = vmatprep.subr.bf16.mxu0 0
    %2773 = vmatpush1.bf16.msra.mxu0 0
    %2774 = vmatprep.subr.bf16.mxu0 0
    %2775 = vmatpush1.bf16.msra.mxu0 0
    %2776 = vmatprep.subr.bf16.mxu0 0
    %2777 = vmatpush1.bf16.msra.mxu0 0
    %2778 = vmatprep.subr.bf16.mxu0 0
    %2779 = vmatpush1.bf16.msra.mxu0 0
    %2780 = vmatprep.subr.bf16.mxu0 0
    %2781 = vmatpush1.bf16.msra.mxu0 0
    %2782 = vmatprep.subr.bf16.mxu0 0
    %2783 = vmatpush1.bf16.msra.mxu0 0
    %2784 = vmatprep.subr.bf16.mxu0 0
    %2785 = vmatpush1.bf16.msra.mxu0 0
    %2786 = vmatprep.subr.bf16.mxu0 0
    %2787 = vmatpush1.bf16.msra.mxu0 0
    %2788 = vmatprep.subr.bf16.mxu0 0
    %2789 = vmatpush1.bf16.msra.mxu0 0
    %2790 = vmatprep.mubr.bf16.mxu0 0
    %2791 = vmatmul.mubr.bf16.gmra.mrb[0].mxu0 %v2753
    %v2792 = vpop.f32.mrb[0].mxu0
    %v2793 = vadd.f32 0.0, %v2792
    %v2794 = vpop.f32.mrb[0].mxu0
    %v2795 = vpop.f32.mrb[0].mxu0
    %v2796 = vpop.f32.mrb[0].mxu0
    %2797 = vdwg.mxu0
    %2798 = vrot.lane.b32.xlu0 %v1829, 64
    %v2799 = vpop.permute.xlu0 %2798
    %v2801 = vsel %vm238, %v2461, 0
    %v2804 = vsel %vm873, %v2799, 0
    %2806 = vmatprep.subr.bf16.mxu0 0
    %2807 = vmatpush1.bf16.msra.mxu0 %v2804
    %2808 = vmatprep.subr.bf16.mxu0 0
    %2809 = vmatpush1.bf16.msra.mxu0 0
    %2810 = vmatprep.subr.bf16.mxu0 0
    %2811 = vmatpush1.bf16.msra.mxu0 0
    %2812 = vmatprep.subr.bf16.mxu0 0
    %2813 = vmatpush1.bf16.msra.mxu0 0
    %2814 = vmatprep.subr.bf16.mxu0 0
    %2815 = vmatpush1.bf16.msra.mxu0 0
    %2816 = vmatprep.subr.bf16.mxu0 0
    %2817 = vmatpush1.bf16.msra.mxu0 0
    %2818 = vmatprep.subr.bf16.mxu0 0
    %2819 = vmatpush1.bf16.msra.mxu0 0
    %2820 = vmatprep.subr.bf16.mxu0 0
    %2821 = vmatpush1.bf16.msra.mxu0 0
    %2822 = vmatprep.subr.bf16.mxu0 0
    %2823 = vmatpush1.bf16.msra.mxu0 0
    %2824 = vmatprep.subr.bf16.mxu0 0
    %2825 = vmatpush1.bf16.msra.mxu0 0
    %2826 = vmatprep.subr.bf16.mxu0 0
    %2827 = vmatpush1.bf16.msra.mxu0 0
    %2828 = vmatprep.subr.bf16.mxu0 0
    %2829 = vmatpush1.bf16.msra.mxu0 0
    %2830 = vmatprep.subr.bf16.mxu0 0
    %2831 = vmatpush1.bf16.msra.mxu0 0
    %2832 = vmatprep.subr.bf16.mxu0 0
    %2833 = vmatpush1.bf16.msra.mxu0 0
    %2834 = vmatprep.subr.bf16.mxu0 0
    %2835 = vmatpush1.bf16.msra.mxu0 0
    %2836 = vmatprep.subr.bf16.mxu0 0
    %2837 = vmatpush1.bf16.msra.mxu0 0
    %2838 = vmatprep.mubr.bf16.mxu0 0
    %2839 = vmatmul.mubr.bf16.gmra.mrb[0].mxu0 %v2801
    %v2840 = vpop.f32.mrb[0].mxu0
    %v2841 = vadd.f32 0.0, %v2840
    %v2842 = vpop.f32.mrb[0].mxu0
    %v2843 = vpop.f32.mrb[0].mxu0
    %v2844 = vpop.f32.mrb[0].mxu0
    %2845 = vdwg.mxu0
    %v2846 = vpack.c.bf16 %v2553, %v2505
    %s2847 = scalar_lea.vmem %s6, 16
    %v2848 = vld [vmem:[%s2847] sm:$0xf]
    %v2849 = vpack.c.bf16 %v2649, %v2601
    %s2850 = scalar_lea.vmem %s6, 20
    %v2851 = vld [vmem:[%s2850] sm:$0xf]
    %v2853 = vsel %vm238, %v2849, 0
    %v2856 = vsel %vm873, %v2851, 0
    %2858 = vmatprep.subr.bf16.mxu0 0
    %2859 = vmatpush1.bf16.msra.mxu0 %v2856
    %2860 = vmatprep.subr.bf16.mxu0 0
    %2861 = vmatpush1.bf16.msra.mxu0 0
    %2862 = vmatprep.subr.bf16.mxu0 0
    %2863 = vmatpush1.bf16.msra.mxu0 0
    %2864 = vmatprep.subr.bf16.mxu0 0
    %2865 = vmatpush1.bf16.msra.mxu0 0
    %2866 = vmatprep.subr.bf16.mxu0 0
    %2867 = vmatpush1.bf16.msra.mxu0 0
    %2868 = vmatprep.subr.bf16.mxu0 0
    %2869 = vmatpush1.bf16.msra.mxu0 0
    %2870 = vmatprep.subr.bf16.mxu0 0
    %2871 = vmatpush1.bf16.msra.mxu0 0
    %2872 = vmatprep.subr.bf16.mxu0 0
    %2873 = vmatpush1.bf16.msra.mxu0 0
    %2874 = vmatprep.subr.bf16.mxu0 0
    %2875 = vmatpush1.bf16.msra.mxu0 0
    %2876 = vmatprep.subr.bf16.mxu0 0
    %2877 = vmatpush1.bf16.msra.mxu0 0
    %2878 = vmatprep.subr.bf16.mxu0 0
    %2879 = vmatpush1.bf16.msra.mxu0 0
    %2880 = vmatprep.subr.bf16.mxu0 0
    %2881 = vmatpush1.bf16.msra.mxu0 0
    %2882 = vmatprep.subr.bf16.mxu0 0
    %2883 = vmatpush1.bf16.msra.mxu0 0
    %2884 = vmatprep.subr.bf16.mxu0 0
    %2885 = vmatpush1.bf16.msra.mxu0 0
    %2886 = vmatprep.subr.bf16.mxu0 0
    %2887 = vmatpush1.bf16.msra.mxu0 0
    %2888 = vmatprep.subr.bf16.mxu0 0
    %2889 = vmatpush1.bf16.msra.mxu0 0
    %2890 = vmatprep.mubr.bf16.mxu0 0
    %2891 = vmatmul.mubr.bf16.gmra.mrb[0].mxu0 %v2853
    %v2892 = vpop.f32.mrb[0].mxu0
    %v2893 = vadd.f32 0.0, %v2892
    %v2894 = vpop.f32.mrb[0].mxu0
    %v2895 = vpop.f32.mrb[0].mxu0
    %v2896 = vadd.f32 0.0, %v2895
    %v2897 = vpop.f32.mrb[0].mxu0
    %2898 = vdwg.mxu0
    %v2900 = vsel %vm238, %v2846, 0
    %v2903 = vsel %vm873, %v2848, 0
    %2905 = vmatprep.subr.bf16.mxu0 0
    %2906 = vmatpush1.bf16.msra.mxu0 %v2903
    %2907 = vmatprep.subr.bf16.mxu0 0
    %2908 = vmatpush1.bf16.msra.mxu0 0
    %2909 = vmatprep.subr.bf16.mxu0 0
    %2910 = vmatpush1.bf16.msra.mxu0 0
    %2911 = vmatprep.subr.bf16.mxu0 0
    %2912 = vmatpush1.bf16.msra.mxu0 0
    %2913 = vmatprep.subr.bf16.mxu0 0
    %2914 = vmatpush1.bf16.msra.mxu0 0
    %2915 = vmatprep.subr.bf16.mxu0 0
    %2916 = vmatpush1.bf16.msra.mxu0 0
    %2917 = vmatprep.subr.bf16.mxu0 0
    %2918 = vmatpush1.bf16.msra.mxu0 0
    %2919 = vmatprep.subr.bf16.mxu0 0
    %2920 = vmatpush1.bf16.msra.mxu0 0
    %2921 = vmatprep.subr.bf16.mxu0 0
    %2922 = vmatpush1.bf16.msra.mxu0 0
    %2923 = vmatprep.subr.bf16.mxu0 0
    %2924 = vmatpush1.bf16.msra.mxu0 0
    %2925 = vmatprep.subr.bf16.mxu0 0
    %2926 = vmatpush1.bf16.msra.mxu0 0
    %2927 = vmatprep.subr.bf16.mxu0 0
    %2928 = vmatpush1.bf16.msra.mxu0 0
    %2929 = vmatprep.subr.bf16.mxu0 0
    %2930 = vmatpush1.bf16.msra.mxu0 0
    %2931 = vmatprep.subr.bf16.mxu0 0
    %2932 = vmatpush1.bf16.msra.mxu0 0
    %2933 = vmatprep.subr.bf16.mxu0 0
    %2934 = vmatpush1.bf16.msra.mxu0 0
    %2935 = vmatprep.subr.bf16.mxu0 0
    %2936 = vmatpush1.bf16.msra.mxu0 0
    %2937 = vmatprep.mubr.bf16.mxu0 0
    %2938 = vmatmul.mubr.bf16.gmra.mrb[0].mxu0 %v2900
    %v2939 = vpop.f32.mrb[0].mxu0
    %v2940 = vadd.f32 %v2893, %v2939
    %v2941 = vpop.f32.mrb[0].mxu0
    %v2942 = vpop.f32.mrb[0].mxu0
    %v2943 = vadd.f32 %v2896, %v2942
    %v2944 = vpop.f32.mrb[0].mxu0
    %2945 = vdwg.mxu0
    %v2946 = vpack.c.bf16 %v2745, %v2697
    %s2947 = scalar_lea.vmem %s6, 24
    %v2948 = vld [vmem:[%s2947] sm:$0xf]
    %v2950 = vsel %vm238, %v2946, 0
    %v2953 = vsel %vm873, %v2948, 0
    %2955 = vmatprep.subr.bf16.mxu0 0
    %2956 = vmatpush1.bf16.msra.mxu0 %v2953
    %2957 = vmatprep.subr.bf16.mxu0 0
    %2958 = vmatpush1.bf16.msra.mxu0 0
    %2959 = vmatprep.subr.bf16.mxu0 0
    %2960 = vmatpush1.bf16.msra.mxu0 0
    %2961 = vmatprep.subr.bf16.mxu0 0
    %2962 = vmatpush1.bf16.msra.mxu0 0
    %2963 = vmatprep.subr.bf16.mxu0 0
    %2964 = vmatpush1.bf16.msra.mxu0 0
    %2965 = vmatprep.subr.bf16.mxu0 0
    %2966 = vmatpush1.bf16.msra.mxu0 0
    %2967 = vmatprep.subr.bf16.mxu0 0
    %2968 = vmatpush1.bf16.msra.mxu0 0
    %2969 = vmatprep.subr.bf16.mxu0 0
    %2970 = vmatpush1.bf16.msra.mxu0 0
    %2971 = vmatprep.subr.bf16.mxu0 0
    %2972 = vmatpush1.bf16.msra.mxu0 0
    %2973 = vmatprep.subr.bf16.mxu0 0
    %2974 = vmatpush1.bf16.msra.mxu0 0
    %2975 = vmatprep.subr.bf16.mxu0 0
    %2976 = vmatpush1.bf16.msra.mxu0 0
    %2977 = vmatprep.subr.bf16.mxu0 0
    %2978 = vmatpush1.bf16.msra.mxu0 0
    %2979 = vmatprep.subr.bf16.mxu0 0
    %2980 = vmatpush1.bf16.msra.mxu0 0
    %2981 = vmatprep.subr.bf16.mxu0 0
    %2982 = vmatpush1.bf16.msra.mxu0 0
    %2983 = vmatprep.subr.bf16.mxu0 0
    %2984 = vmatpush1.bf16.msra.mxu0 0
    %2985 = vmatprep.subr.bf16.mxu0 0
    %2986 = vmatpush1.bf16.msra.mxu0 0
    %2987 = vmatprep.mubr.bf16.mxu0 0
    %2988 = vmatmul.mubr.bf16.gmra.mrb[0].mxu0 %v2950
    %v2989 = vpop.f32.mrb[0].mxu0
    %v2990 = vadd.f32 0.0, %v2989
    %v2991 = vpop.f32.mrb[0].mxu0
    %v2992 = vpop.f32.mrb[0].mxu0
    %v2993 = vadd.f32 0.0, %v2992
    %v2994 = vpop.f32.mrb[0].mxu0
    %2995 = vdwg.mxu0
    %v2996 = vadd.f32 %v2940, %v2990
    %v2997 = vadd.f32 %v2943, %v2993
    %v2998 = vpack.c.bf16 %v2841, %v2793
    %s2999 = scalar_lea.vmem %s6, 28
    %v3000 = vld [vmem:[%s2999] sm:$0xf]
    %v3002 = vsel %vm238, %v2998, 0
    %v3005 = vsel %vm873, %v3000, 0
    %3007 = vmatprep.subr.bf16.mxu0 0
    %3008 = vmatpush1.bf16.msra.mxu0 %v3005
    %3009 = vmatprep.subr.bf16.mxu0 0
    %3010 = vmatpush1.bf16.msra.mxu0 0
    %3011 = vmatprep.subr.bf16.mxu0 0
    %3012 = vmatpush1.bf16.msra.mxu0 0
    %3013 = vmatprep.subr.bf16.mxu0 0
    %3014 = vmatpush1.bf16.msra.mxu0 0
    %3015 = vmatprep.subr.bf16.mxu0 0
    %3016 = vmatpush1.bf16.msra.mxu0 0
    %3017 = vmatprep.subr.bf16.mxu0 0
    %3018 = vmatpush1.bf16.msra.mxu0 0
    %3019 = vmatprep.subr.bf16.mxu0 0
    %3020 = vmatpush1.bf16.msra.mxu0 0
    %3021 = vmatprep.subr.bf16.mxu0 0
    %3022 = vmatpush1.bf16.msra.mxu0 0
    %3023 = vmatprep.subr.bf16.mxu0 0
    %3024 = vmatpush1.bf16.msra.mxu0 0
    %3025 = vmatprep.subr.bf16.mxu0 0
    %3026 = vmatpush1.bf16.msra.mxu0 0
    %3027 = vmatprep.subr.bf16.mxu0 0
    %3028 = vmatpush1.bf16.msra.mxu0 0
    %3029 = vmatprep.subr.bf16.mxu0 0
    %3030 = vmatpush1.bf16.msra.mxu0 0
    %3031 = vmatprep.subr.bf16.mxu0 0
    %3032 = vmatpush1.bf16.msra.mxu0 0
    %3033 = vmatprep.subr.bf16.mxu0 0
    %3034 = vmatpush1.bf16.msra.mxu0 0
    %3035 = vmatprep.subr.bf16.mxu0 0
    %3036 = vmatpush1.bf16.msra.mxu0 0
    %3037 = vmatprep.subr.bf16.mxu0 0
    %3038 = vmatpush1.bf16.msra.mxu0 0
    %3039 = vmatprep.mubr.bf16.mxu0 0
    %3040 = vmatmul.mubr.bf16.gmra.mrb[0].mxu0 %v3002
    %v3041 = vpop.f32.mrb[0].mxu0
    %v3042 = vadd.f32 0.0, %v3041
    %v3043 = vpop.f32.mrb[0].mxu0
    %v3044 = vpop.f32.mrb[0].mxu0
    %v3045 = vadd.f32 0.0, %v3044
    %v3046 = vpop.f32.mrb[0].mxu0
    %3047 = vdwg.mxu0
    %v3048 = vadd.f32 %v2996, %v3042
    %v3049 = vadd.f32 %v2997, %v3045
    %v3050 = vadd.f32 %v1684, %v3048
    %v3051 = vadd.f32 %v1685, %v3049
    %s3052 = scalar_lea.vmem %s7, 1
    %v3053 = vld [vmem:[%s3052] sm:$0x1]
    %v3055 = vlaneseq
    %v3056 = vshrl.u32 %v3055, 7
    %v3057 = vsub.s32 0, %v3056
    %v3058 = vrot.slane %v3053, %v3057
    %v3060 = vadd.f32 %v3050, %v3058
    %v3061 = vadd.f32 %v3051, %v3058
    %s3062 = scalar_lea.vmem %s8, 1
    %v3063 = vld [vmem:[%s3062] sm:$0x1]
    %s3064 = scalar_lea.vmem %s9, 1
    %v3065 = vld [vmem:[%s3064] sm:$0x1]
    %v3066 = vsel %vm95, %v3060, 0.0
    %3067 = vadd.xlane.f32.xlu0 %v3066
    %v3068 = vpop.xlane.xlu0 %3067
    %v3069 = vsel %vm95, %v3061, 0.0
    %3070 = vadd.xlane.f32.xlu0 %v3069
    %v3071 = vpop.xlane.xlu0 %3070
    %v3072 = vmul.f32 %v3068, %v102
    %v3073 = vmul.f32 %v3071, %v102
    %v3074 = vsub.f32 %v3060, %v3072
    %v3075 = vsub.f32 %v3061, %v3073
    %v3076 = vmul.f32 %v3074, %v3074
    %v3077 = vmul.f32 %v3075, %v3075
    %v3078 = vsel %vm95, %v3076, 0.0
    %3079 = vadd.xlane.f32.xlu0 %v3078
    %v3080 = vpop.xlane.xlu0 %3079
    %v3081 = vsel %vm95, %v3077, 0.0
    %3082 = vadd.xlane.f32.xlu0 %v3081
    %v3083 = vpop.xlane.xlu0 %3082
    %v3084 = vmul.f32 %v3080, %v102
    %v3085 = vmul.f32 %v3083, %v102
    %v3086 = vadd.f32 %v3084, 1e-05
    %v3087 = vadd.f32 %v3085, 1e-05
    %v3088 = vrsqrt.pop %v3086
    %v3089 = vrsqrt.pop %v3087
    %v3090 = vmul.f32 %v3074, %v3088
    %v3091 = vmul.f32 %v3075, %v3089
    %v3093 = vlaneseq
    %v3094 = vshrl.u32 %v3093, 7
    %v3095 = vsub.s32 0, %v3094
    %v3096 = vrot.slane %v3063, %v3095
    %v3098 = vmul.f32 %v3090, %v3096
    %v3099 = vmul.f32 %v3091, %v3096
    %v3101 = vlaneseq
    %v3102 = vshrl.u32 %v3101, 7
    %v3103 = vsub.s32 0, %v3102
    %v3104 = vrot.slane %v3065, %v3103
    %v3106 = vadd.f32 %v3098, %v3104
    %v3107 = vadd.f32 %v3099, %v3104
    %v3108 = vpack.c.bf16 %v3107, %v3106
    %s3109 = scalar_lea.vmem %s10, 16
    %v3110 = vld [vmem:[%s3109] sm:$0xf]
    %v3111 = vld [vmem:[%s3109 + $0x4] sm:$0xf]
    %v3112 = vld [vmem:[%s3109 + $0x8] sm:$0xf]
    %v3113 = vld [vmem:[%s3109 + $0xc] sm:$0xf]
    %s3114 = scalar_lea.vmem [#allocation7], 1
    %v3115 = vld [vmem:[%s3114] sm:$0x1]
    %v3117 = vlaneseq
    %v3118 = vshrl.u32 %v3117, 7
    %v3119 = vsub.s32 0, %v3118
    %v3120 = vrot.slane %v3115, %v3119
    %v3126 = vunpack.c.l.b16 %v3110
    %v3127 = vunpack.c.l.b16 %v3111
    %v3128 = vunpack.c.l.b16 %v3112
    %v3129 = vunpack.c.l.b16 %v3113
    %v3130 = vpack.c.b16 %v3127, %v3126
    %v3131 = vpack.c.b16 %v3129, %v3128
    %v3135 = vsel %vm95, %v3108, 0
    %3137 = vmatprep.subr.bf16.mxu0 0
    %3138 = vmatpush1.bf16.msra.mxu0 %v3130
    %3139 = vmatprep.subr.bf16.mxu0 0
    %3140 = vmatpush1.bf16.msra.mxu0 %v3131
    %3141 = vmatprep.subr.bf16.mxu0 0
    %3142 = vmatpush1.bf16.msra.mxu0 0
    %3143 = vmatprep.subr.bf16.mxu0 0
    %3144 = vmatpush1.bf16.msra.mxu0 0
    %3145 = vmatprep.subr.bf16.mxu0 0
    %3146 = vmatpush1.bf16.msra.mxu0 0
    %3147 = vmatprep.subr.bf16.mxu0 0
    %3148 = vmatpush1.bf16.msra.mxu0 0
    %3149 = vmatprep.subr.bf16.mxu0 0
    %3150 = vmatpush1.bf16.msra.mxu0 0
    %3151 = vmatprep.subr.bf16.mxu0 0
    %3152 = vmatpush1.bf16.msra.mxu0 0
    %3153 = vmatprep.subr.bf16.mxu0 0
    %3154 = vmatpush1.bf16.msra.mxu0 0
    %3155 = vmatprep.subr.bf16.mxu0 0
    %3156 = vmatpush1.bf16.msra.mxu0 0
    %3157 = vmatprep.subr.bf16.mxu0 0
    %3158 = vmatpush1.bf16.msra.mxu0 0
    %3159 = vmatprep.subr.bf16.mxu0 0
    %3160 = vmatpush1.bf16.msra.mxu0 0
    %3161 = vmatprep.subr.bf16.mxu0 0
    %3162 = vmatpush1.bf16.msra.mxu0 0
    %3163 = vmatprep.subr.bf16.mxu0 0
    %3164 = vmatpush1.bf16.msra.mxu0 0
    %3165 = vmatprep.subr.bf16.mxu0 0
    %3166 = vmatpush1.bf16.msra.mxu0 0
    %3167 = vmatprep.subr.bf16.mxu0 0
    %3168 = vmatpush1.bf16.msra.mxu0 0
    %3169 = vmatprep.mubr.bf16.mxu0 0
    %3170 = vmatmul.mubr.bf16.gmra.mrb[0].mxu0 %v3135
    %v3171 = vpop.f32.mrb[0].mxu0
    %v3172 = vadd.f32 %v3120, %v3171
    %v3173 = vpop.f32.mrb[0].mxu0
    %v3174 = vpop.f32.mrb[0].mxu0
    %v3175 = vadd.f32 %v3120, %v3174
    %v3176 = vpop.f32.mrb[0].mxu0
    %3177 = vdwg.mxu0
    %v3178 = vmul.f32 %v3172, 0.5
    %v3179 = vmul.f32 %v3175, 0.5
    %v3180 = vmul.f32 %v3172, 0.044715
    %v3181 = vmul.f32 %v3175, 0.044715
    %v3182 = vmul.f32 %v3180, %v3172
    %v3183 = vmul.f32 %v3181, %v3175
    %v3184 = vmul.f32 %v3182, %v3172
    %v3185 = vmul.f32 %v3183, %v3175
    %v3186 = vadd.f32 %v3172, %v3184
    %v3187 = vadd.f32 %v3175, %v3185
    %v3188 = vmul.f32 %v3186, 0.7978846
    %v3189 = vmul.f32 %v3187, 0.7978846
    %v3190 = vtanh.pop %v3188
    %v3191 = vtanh.pop %v3189
    %v3192 = vadd.f32 %v3190, 1.0
    %v3193 = vadd.f32 %v3191, 1.0
    %v3194 = vmul.f32 %v3178, %v3192
    %v3195 = vmul.f32 %v3179, %v3193
    %v3196 = vpack.c.bf16 %v3195, %v3194
    %s3197 = scalar_lea.vmem %s12, 32
    %v3198 = vld [vmem:[%s3197] sm:$0xf]
    %v3199 = vld [vmem:[%s3197 + $0x4] sm:$0xf]
    %v3200 = vld [vmem:[%s3197 + $0x8] sm:$0xf]
    %v3201 = vld [vmem:[%s3197 + $0xc] sm:$0xf]
    %v3202 = vld [vmem:[%s3197 + $0x10] sm:$0xf]
    %v3203 = vld [vmem:[%s3197 + $0x14] sm:$0xf]
    %v3204 = vld [vmem:[%s3197 + $0x18] sm:$0xf]
    %v3205 = vld [vmem:[%s3197 + $0x1c] sm:$0xf]
    %v3214 = vunpack.c.l.b16 %v3198
    %v3215 = vunpack.c.l.b16 %v3199
    %v3216 = vunpack.c.l.b16 %v3200
    %v3217 = vunpack.c.l.b16 %v3201
    %v3218 = vunpack.c.l.b16 %v3202
    %v3219 = vunpack.c.l.b16 %v3203
    %v3220 = vunpack.c.l.b16 %v3204
    %v3221 = vunpack.c.l.b16 %v3205
    %v3222 = vpack.c.b16 %v3215, %v3214
    %v3223 = vpack.c.b16 %v3217, %v3216
    %v3224 = vpack.c.b16 %v3219, %v3218
    %v3225 = vpack.c.b16 %v3221, %v3220
    %v3231 = vsel %vm1630, %v3196, 0
    %3233 = vmatprep.subr.bf16.mxu0 0
    %3234 = vmatpush1.bf16.msra.mxu0 %v3222
    %3235 = vmatprep.subr.bf16.mxu0 0
    %3236 = vmatpush1.bf16.msra.mxu0 %v3223
    %3237 = vmatprep.subr.bf16.mxu0 0
    %3238 = vmatpush1.bf16.msra.mxu0 %v3224
    %3239 = vmatprep.subr.bf16.mxu0 0
    %3240 = vmatpush1.bf16.msra.mxu0 %v3225
    %3241 = vmatprep.subr.bf16.mxu0 0
    %3242 = vmatpush1.bf16.msra.mxu0 0
    %3243 = vmatprep.subr.bf16.mxu0 0
    %3244 = vmatpush1.bf16.msra.mxu0 0
    %3245 = vmatprep.subr.bf16.mxu0 0
    %3246 = vmatpush1.bf16.msra.mxu0 0
    %3247 = vmatprep.subr.bf16.mxu0 0
    %3248 = vmatpush1.bf16.msra.mxu0 0
    %3249 = vmatprep.subr.bf16.mxu0 0
    %3250 = vmatpush1.bf16.msra.mxu0 0
    %3251 = vmatprep.subr.bf16.mxu0 0
    %3252 = vmatpush1.bf16.msra.mxu0 0
    %3253 = vmatprep.subr.bf16.mxu0 0
    %3254 = vmatpush1.bf16.msra.mxu0 0
    %3255 = vmatprep.subr.bf16.mxu0 0
    %3256 = vmatpush1.bf16.msra.mxu0 0
    %3257 = vmatprep.subr.bf16.mxu0 0
    %3258 = vmatpush1.bf16.msra.mxu0 0
    %3259 = vmatprep.subr.bf16.mxu0 0
    %3260 = vmatpush1.bf16.msra.mxu0 0
    %3261 = vmatprep.subr.bf16.mxu0 0
    %3262 = vmatpush1.bf16.msra.mxu0 0
    %3263 = vmatprep.subr.bf16.mxu0 0
    %3264 = vmatpush1.bf16.msra.mxu0 0
    %3265 = vmatprep.mubr.bf16.mxu0 0
    %3266 = vmatmul.mubr.bf16.gmra.mrb[0].mxu0 %v3231
    %v3267 = vpop.f32.mrb[0].mxu0
    %v3268 = vadd.f32 0.0, %v3267
    %v3269 = vpop.f32.mrb[0].mxu0
    %v3270 = vpop.f32.mrb[0].mxu0
    %v3271 = vadd.f32 0.0, %v3270
    %v3272 = vpop.f32.mrb[0].mxu0
    %3273 = vdwg.mxu0
    %v3274 = vadd.f32 %v3060, %v3268
    %v3275 = vadd.f32 %v3061, %v3271
    %s3276 = scalar_lea.vmem %s13, 1
    %v3277 = vld [vmem:[%s3276] sm:$0x1]
    %v3279 = vlaneseq
    %v3280 = vshrl.u32 %v3279, 7
    %v3281 = vsub.s32 0, %v3280
    %v3282 = vrot.slane %v3277, %v3281
    %v3284 = vadd.f32 %v3274, %v3282
    %v3285 = vadd.f32 %v3275, %v3282
    %3286 = vst.msk [vmem:[#allocation8] sm:$0xff] %vm95, %v3284
    %3287 = vst.msk [vmem:[#allocation8 + $0x8] sm:$0xff] %vm95, %v3285
    // Predicated region
    $region70: #{tpu_custom_call.1} parent=1 // pred_check
      _
    $region71: #{tpu_custom_call.1} parent=1 // pred_check_branch
      %3289 = sbr.rel (0) target = $region73
    $region72: #{tpu_custom_call.1} parent=1 // pred_region
      %s3291 = ssub.s32 256, 256
      %3292 = vsyncadd [#allocation4], %s3291
      %s3293 = sshll.u32 [#allocation8], 4
      %s3294 = int_to_ptr.vmem [resolvable:$true] %s3293
      %3299 = dma.vmem_to_hbm [thread:$0]  %s3294, 256, %s14, [#allocation4], 128, 128, 8
    $region73: #{tpu_custom_call.1} parent=1 // pred_fallthru
      _
    // Predicated region
    $region74: #{tpu_custom_call.1} parent=1 // pred_check
      _
    $region75: #{tpu_custom_call.1} parent=1 // pred_check_branch
      %3301 = sbr.rel (0) target = $region77
    $region76: #{tpu_custom_call.1} parent=1 // pred_region
      %3302 = dma.done [#allocation4], 256
    $region77: #{tpu_custom_call.1} parent=1 // pred_fallthru
      _
    %3303 = vsyncpa [#allocation3], 1
    %3304 = vsyncpa [#allocation6], 1
    %3305 = vsyncpa [#allocation4], 1

</llo_original>
